<compile_context>
chip_gen: v7x
topology: tpu7x:2x2x1
jax: 0.10.0
libtpu: 0.0.40
codegen_flags: <defaults>
</compile_context>

<pallas_src>
import functools

import jax
import jax.numpy as jnp
from jax.experimental import pallas as pl
from jax.experimental.pallas import tpu as pltpu


# ----------------------------------------------------------------------------
# Fused encoder kernel (one batch image per grid step)
#
#   p1_ref : (1, KK, M2, K1)  layer-1 patch rows; slab j holds the K1-wide
#            patches whose layer-1 outputs are offset j of every layer-2 patch.
#   w1_ref : (K1, N1)         layer-1 weight, (ci,kh,kw)-flattened, transposed.
#   b1_ref : (1, N1)
#   w2_ref : (KK, N1, N2p)    layer-2 weight, one (N1, N2p) slab per offset j.
#   b2_ref : (1, N2p)
#   o_ref  : (1, M2, N2p)     channels-last, N2 zero-padded to a multiple of 128.
#
#   out[p, :] = relu( b2 + sum_j relu(p1[j, p, :] @ W1 + b1) @ W2[j] )
# ----------------------------------------------------------------------------
def _fused_encoder_kernel(p1_ref, w1_ref, b1_ref, w2_ref, b2_ref, o_ref):
    kk = p1_ref.shape[1]
    m2 = o_ref.shape[1]
    n2p = o_ref.shape[2]

    # Fold layer-2 bias into the accumulator init (broadcast once, outside loop).
    acc = jnp.broadcast_to(b2_ref[...], (m2, n2p)).astype(jnp.float32)

    # Static unroll over the KK = k*k in-patch offsets: each layer-1 tile is
    # computed, activated, and immediately contracted into the layer-2
    # accumulator — the intermediate never touches HBM.
    for j in range(kk):
        h1 = jnp.dot(p1_ref[0, j], w1_ref[...],
                     preferred_element_type=jnp.float32)          # (M2, N1)
        h1 = jnp.maximum(h1 + b1_ref[...], 0.0)                   # bias + ReLU
        acc = acc + jnp.dot(h1, w2_ref[j],
                            preferred_element_type=jnp.float32)   # (M2, N2p)

    o_ref[0] = jnp.maximum(acc, 0.0).astype(o_ref.dtype)


# ----------------------------------------------------------------------------
# Encoder forward: NCHW in, NCHW out (matches the PyTorch module)
# ----------------------------------------------------------------------------
def encoder_forward(x, params, kernel_size):
    (w1, b1), (w2, b2) = params
    k = kernel_size
    B, Cin, H, W = x.shape
    assert Cin == 1, "Encoder layer 1 expects a single input channel"
    nk = w1.shape[0]
    cout2 = w2.shape[0]
    Ho1, Wo1 = H // k, W // k
    Ho2, Wo2 = Ho1 // k, Wo1 // k
    KK = k * k
    K1 = Cin * k * k
    M2 = Ho2 * Wo2
    N2p = ((cout2 + 127) // 128) * 128        # lane-dense output width

    # ---- patch extraction: ONE host pass over the input -------------------
    # Layer-1 patch rows are pre-ordered (kh, kw, ho2, wo2) so that the
    # layer-1 outputs emerge already grouped by layer-2 in-patch offset
    # j = kh*k + kw; this removes every in-kernel reshape/transpose.
    xr = x.reshape(B, Ho2, k, k, Wo2, k, k)            # (b,ho2,kh,kh1,wo2,kw,kw1)
    xr = jnp.transpose(xr, (0, 2, 5, 1, 4, 3, 6))      # (b,kh,kw,ho2,wo2,kh1,kw1)
    p1 = xr.reshape(B, KK, M2, K1)

    # ---- weight / bias plumbing (trace-time, tiny) -------------------------
    w1_mat = w1.reshape(nk, K1).T                               # (K1, nk)
    b1_row = b1.reshape(1, nk)
    # w2: (Cout2, nk, k, k) -> per-offset slabs W2[j][ci, co] = w2[co, ci, kh, kw]
    w2_stack = jnp.transpose(w2, (2, 3, 1, 0)).reshape(KK, nk, cout2)
    w2_stack = jnp.pad(w2_stack, ((0, 0), (0, 0), (0, N2p - cout2)))
    b2_row = jnp.pad(b2, (0, N2p - cout2)).reshape(1, N2p)

    out = pl.pallas_call(
        _fused_encoder_kernel,
        out_shape=jax.ShapeDtypeStruct((B, M2, N2p), jnp.float32),
        grid=(B,),
        in_specs=[
            pl.BlockSpec((1, KK, M2, K1), lambda b: (b, 0, 0, 0)),   # per-image patches
            pl.BlockSpec((K1, nk), lambda b: (0, 0)),                # W1 (resident)
            pl.BlockSpec((1, nk), lambda b: (0, 0)),                 # b1 (resident)
            pl.BlockSpec((KK, nk, N2p), lambda b: (0, 0, 0)),        # W2 (resident)
            pl.BlockSpec((1, N2p), lambda b: (0, 0)),                # b2 (resident)
        ],
        out_specs=pl.BlockSpec((1, M2, N2p), lambda b: (b, 0, 0)),
        compiler_params=pltpu.CompilerParams(
            # Batch axis is fully independent: pipeline + split across the
            # two TensorCores on v7x (harmless on v5e/v6e).
            dimension_semantics=("parallel",)),
    )(p1, w1_mat, b1_row, w2_stack, b2_row)

    # Drop lane padding, restore NCHW (tiny output-sized ops).
    out = out[:, :, :cout2]
    out = out.reshape(B, Ho2, Wo2, cout2)
    return jnp.transpose(out, (0, 3, 1, 2))


# ----------------------------------------------------------------------------
# Params / reference
# ----------------------------------------------------------------------------
def init_encoder_params(key, kernel_size, num_kernels):
    """Deterministic init matching PyTorch Conv2d shapes (uniform +-1/sqrt(fan_in))."""
    k = kernel_size
    k1, k2, k3, k4 = jax.random.split(key, 4)

    fan1 = 1 * k * k
    w1 = jax.random.uniform(k1, (num_kernels, 1, k, k), jnp.float32,
                            -1.0 / jnp.sqrt(fan1), 1.0 / jnp.sqrt(fan1))
    b1 = jax.random.uniform(k2, (num_kernels,), jnp.float32,
                            -1.0 / jnp.sqrt(fan1), 1.0 / jnp.sqrt(fan1))

    fan2 = num_kernels * k * k
    w2 = jax.random.uniform(k3, (2 * num_kernels, num_kernels, k, k), jnp.float32,
                            -1.0 / jnp.sqrt(fan2), 1.0 / jnp.sqrt(fan2))
    b2 = jax.random.uniform(k4, (2 * num_kernels,), jnp.float32,
                            -1.0 / jnp.sqrt(fan2), 1.0 / jnp.sqrt(fan2))
    return ((w1, b1), (w2, b2))


def encoder_forward_ref(x, params, kernel_size):
    """Pure-JAX reference (lax conv) for correctness checking."""
    (w1, b1), (w2, b2) = params

    def conv(x, w, b, k):
        y = jax.lax.conv_general_dilated(
            x, w, window_strides=(k, k), padding="VALID",
            dimension_numbers=("NCHW", "OIHW", "NCHW"))
        return jnp.maximum(y + b.reshape(1, -1, 1, 1), 0.0)

    x = conv(x, w1, b1, kernel_size)
    x = conv(x, w2, b2, kernel_size)
    return x


if __name__ == "__main__":
    kernel_size = 4
    num_kernels = 8
    B, H, W = 2, 16, 16                      # input (2, 1, 16, 16) NCHW

    key = jax.random.PRNGKey(0)
    kx, kp = jax.random.split(key)
    x = jax.random.normal(kx, (B, 1, H, W), jnp.float32)
    params = init_encoder_params(kp, kernel_size, num_kernels)

    fwd = jax.jit(functools.partial(encoder_forward, kernel_size=kernel_size))
    out = fwd(x, params)
    jax.block_until_ready(out)

    ref = encoder_forward_ref(x, params, kernel_size)
    assert out.shape == (B, 2 * num_kernels, H // kernel_size**2, W // kernel_size**2), out.shape
    assert jnp.allclose(out, ref, atol=1e-5, rtol=1e-5), "mismatch vs reference"

    print("KERNEL_OK")
</pallas_src>

<mosaic_0001>
module attributes {stable_mosaic.version = 11 : i64} {
  func.func @_fused_encoder_kernel(%arg0: i32, %arg1: memref<1x16x1x16xf32, #tpu.memory_space<vmem>>, %arg2: memref<16x8xf32, #tpu.memory_space<vmem>>, %arg3: memref<1x8xf32, #tpu.memory_space<vmem>>, %arg4: memref<16x8x128xf32, #tpu.memory_space<vmem>>, %arg5: memref<1x128xf32, #tpu.memory_space<vmem>>, %arg6: memref<1x1x128xf32, #tpu.memory_space<vmem>>) attributes {dimension_semantics = [#tpu.dimension_semantics<parallel>], iteration_bounds = array<i64: 2>, scalar_prefetch = 0 : i64, scratch_operands = 0 : i64, tpu.core_type = #tpu.core_type<tc>, window_params = [{transform_indices = @transform_0, window_bounds = array<i64: 1, 16, 1, 16>}, {pipeline_mode = #tpu.pipeline_mode<synchronous>, transform_indices = @transform_1, window_bounds = array<i64: 16, 8>}, {pipeline_mode = #tpu.pipeline_mode<synchronous>, transform_indices = @transform_2, window_bounds = array<i64: 1, 8>}, {pipeline_mode = #tpu.pipeline_mode<synchronous>, transform_indices = @transform_3, window_bounds = array<i64: 16, 8, 128>}, {pipeline_mode = #tpu.pipeline_mode<synchronous>, transform_indices = @transform_4, window_bounds = array<i64: 1, 128>}, {transform_indices = @transform_5, window_bounds = array<i64: 1, 1, 128>}]} {
    %c0 = arith.constant 0 : index
    %c0_0 = arith.constant 0 : index
    %0 = vector.load %arg5[%c0, %c0_0] : memref<1x128xf32, #tpu.memory_space<vmem>>, vector<1x128xf32>
    %c0_1 = arith.constant 0 : index
    %c0_2 = arith.constant 0 : index
    %c0_3 = arith.constant 0 : index
    %c0_4 = arith.constant 0 : index
    %1 = vector.load %arg1[%c0_1, %c0_2, %c0_3, %c0_4] : memref<1x16x1x16xf32, #tpu.memory_space<vmem>>, vector<1x1x1x16xf32>
    %2 = vector.shape_cast %1 : vector<1x1x1x16xf32> to vector<1x16xf32>
    %c0_5 = arith.constant 0 : index
    %c0_6 = arith.constant 0 : index
    %3 = vector.load %arg2[%c0_5, %c0_6] : memref<16x8xf32, #tpu.memory_space<vmem>>, vector<16x8xf32>
    %cst = arith.constant dense<0.000000e+00> : vector<1x8xf32>
    %4 = tpu.matmul %2, %3, %cst {dimension_numbers = #tpu.dot_dimension_numbers<[1], [0], [0], [1], [0, 0, 1, 1], [], []>} : vector<1x16xf32>, vector<16x8xf32>, vector<1x8xf32> -> vector<1x8xf32>
    %c0_7 = arith.constant 0 : index
    %c0_8 = arith.constant 0 : index
    %5 = vector.load %arg3[%c0_7, %c0_8] : memref<1x8xf32, #tpu.memory_space<vmem>>, vector<1x8xf32>
    %6 = arith.addf %4, %5 : vector<1x8xf32>
    %cst_9 = arith.constant 0.000000e+00 : f32
    %7 = vector.broadcast %cst_9 : f32 to vector<1x8xf32>
    %8 = arith.maximumf %6, %7 : vector<1x8xf32>
    %c0_10 = arith.constant 0 : index
    %c0_11 = arith.constant 0 : index
    %c0_12 = arith.constant 0 : index
    %9 = vector.load %arg4[%c0_10, %c0_11, %c0_12] : memref<16x8x128xf32, #tpu.memory_space<vmem>>, vector<1x8x128xf32>
    %10 = vector.shape_cast %9 : vector<1x8x128xf32> to vector<8x128xf32>
    %cst_13 = arith.constant dense<0.000000e+00> : vector<1x128xf32>
    %11 = tpu.matmul %8, %10, %cst_13 {dimension_numbers = #tpu.dot_dimension_numbers<[1], [0], [0], [1], [0, 0, 1, 1], [], []>} : vector<1x8xf32>, vector<8x128xf32>, vector<1x128xf32> -> vector<1x128xf32>
    %12 = arith.addf %0, %11 : vector<1x128xf32>
    %c0_14 = arith.constant 0 : index
    %c1 = arith.constant 1 : index
    %c0_15 = arith.constant 0 : index
    %c0_16 = arith.constant 0 : index
    %13 = vector.load %arg1[%c0_14, %c1, %c0_15, %c0_16] : memref<1x16x1x16xf32, #tpu.memory_space<vmem>>, vector<1x1x1x16xf32>
    %14 = vector.shape_cast %13 : vector<1x1x1x16xf32> to vector<1x16xf32>
    %c0_17 = arith.constant 0 : index
    %c0_18 = arith.constant 0 : index
    %15 = vector.load %arg2[%c0_17, %c0_18] : memref<16x8xf32, #tpu.memory_space<vmem>>, vector<16x8xf32>
    %cst_19 = arith.constant dense<0.000000e+00> : vector<1x8xf32>
    %16 = tpu.matmul %14, %15, %cst_19 {dimension_numbers = #tpu.dot_dimension_numbers<[1], [0], [0], [1], [0, 0, 1, 1], [], []>} : vector<1x16xf32>, vector<16x8xf32>, vector<1x8xf32> -> vector<1x8xf32>
    %c0_20 = arith.constant 0 : index
    %c0_21 = arith.constant 0 : index
    %17 = vector.load %arg3[%c0_20, %c0_21] : memref<1x8xf32, #tpu.memory_space<vmem>>, vector<1x8xf32>
    %18 = arith.addf %16, %17 : vector<1x8xf32>
    %cst_22 = arith.constant 0.000000e+00 : f32
    %19 = vector.broadcast %cst_22 : f32 to vector<1x8xf32>
    %20 = arith.maximumf %18, %19 : vector<1x8xf32>
    %c1_23 = arith.constant 1 : index
    %c0_24 = arith.constant 0 : index
    %c0_25 = arith.constant 0 : index
    %21 = vector.load %arg4[%c1_23, %c0_24, %c0_25] : memref<16x8x128xf32, #tpu.memory_space<vmem>>, vector<1x8x128xf32>
    %22 = vector.shape_cast %21 : vector<1x8x128xf32> to vector<8x128xf32>
    %cst_26 = arith.constant dense<0.000000e+00> : vector<1x128xf32>
    %23 = tpu.matmul %20, %22, %cst_26 {dimension_numbers = #tpu.dot_dimension_numbers<[1], [0], [0], [1], [0, 0, 1, 1], [], []>} : vector<1x8xf32>, vector<8x128xf32>, vector<1x128xf32> -> vector<1x128xf32>
    %24 = arith.addf %12, %23 : vector<1x128xf32>
    %c0_27 = arith.constant 0 : index
    %c2 = arith.constant 2 : index
    %c0_28 = arith.constant 0 : index
    %c0_29 = arith.constant 0 : index
    %25 = vector.load %arg1[%c0_27, %c2, %c0_28, %c0_29] : memref<1x16x1x16xf32, #tpu.memory_space<vmem>>, vector<1x1x1x16xf32>
    %26 = vector.shape_cast %25 : vector<1x1x1x16xf32> to vector<1x16xf32>
    %c0_30 = arith.constant 0 : index
    %c0_31 = arith.constant 0 : index
    %27 = vector.load %arg2[%c0_30, %c0_31] : memref<16x8xf32, #tpu.memory_space<vmem>>, vector<16x8xf32>
    %cst_32 = arith.constant dense<0.000000e+00> : vector<1x8xf32>
    %28 = tpu.matmul %26, %27, %cst_32 {dimension_numbers = #tpu.dot_dimension_numbers<[1], [0], [0], [1], [0, 0, 1, 1], [], []>} : vector<1x16xf32>, vector<16x8xf32>, vector<1x8xf32> -> vector<1x8xf32>
    %c0_33 = arith.constant 0 : index
    %c0_34 = arith.constant 0 : index
    %29 = vector.load %arg3[%c0_33, %c0_34] : memref<1x8xf32, #tpu.memory_space<vmem>>, vector<1x8xf32>
    %30 = arith.addf %28, %29 : vector<1x8xf32>
    %cst_35 = arith.constant 0.000000e+00 : f32
    %31 = vector.broadcast %cst_35 : f32 to vector<1x8xf32>
    %32 = arith.maximumf %30, %31 : vector<1x8xf32>
    %c2_36 = arith.constant 2 : index
    %c0_37 = arith.constant 0 : index
    %c0_38 = arith.constant 0 : index
    %33 = vector.load %arg4[%c2_36, %c0_37, %c0_38] : memref<16x8x128xf32, #tpu.memory_space<vmem>>, vector<1x8x128xf32>
    %34 = vector.shape_cast %33 : vector<1x8x128xf32> to vector<8x128xf32>
    %cst_39 = arith.constant dense<0.000000e+00> : vector<1x128xf32>
    %35 = tpu.matmul %32, %34, %cst_39 {dimension_numbers = #tpu.dot_dimension_numbers<[1], [0], [0], [1], [0, 0, 1, 1], [], []>} : vector<1x8xf32>, vector<8x128xf32>, vector<1x128xf32> -> vector<1x128xf32>
    %36 = arith.addf %24, %35 : vector<1x128xf32>
    %c0_40 = arith.constant 0 : index
    %c3 = arith.constant 3 : index
    %c0_41 = arith.constant 0 : index
    %c0_42 = arith.constant 0 : index
    %37 = vector.load %arg1[%c0_40, %c3, %c0_41, %c0_42] : memref<1x16x1x16xf32, #tpu.memory_space<vmem>>, vector<1x1x1x16xf32>
    %38 = vector.shape_cast %37 : vector<1x1x1x16xf32> to vector<1x16xf32>
    %c0_43 = arith.constant 0 : index
    %c0_44 = arith.constant 0 : index
    %39 = vector.load %arg2[%c0_43, %c0_44] : memref<16x8xf32, #tpu.memory_space<vmem>>, vector<16x8xf32>
    %cst_45 = arith.constant dense<0.000000e+00> : vector<1x8xf32>
    %40 = tpu.matmul %38, %39, %cst_45 {dimension_numbers = #tpu.dot_dimension_numbers<[1], [0], [0], [1], [0, 0, 1, 1], [], []>} : vector<1x16xf32>, vector<16x8xf32>, vector<1x8xf32> -> vector<1x8xf32>
    %c0_46 = arith.constant 0 : index
    %c0_47 = arith.constant 0 : index
    %41 = vector.load %arg3[%c0_46, %c0_47] : memref<1x8xf32, #tpu.memory_space<vmem>>, vector<1x8xf32>
    %42 = arith.addf %40, %41 : vector<1x8xf32>
    %cst_48 = arith.constant 0.000000e+00 : f32
    %43 = vector.broadcast %cst_48 : f32 to vector<1x8xf32>
    %44 = arith.maximumf %42, %43 : vector<1x8xf32>
    %c3_49 = arith.constant 3 : index
    %c0_50 = arith.constant 0 : index
    %c0_51 = arith.constant 0 : index
    %45 = vector.load %arg4[%c3_49, %c0_50, %c0_51] : memref<16x8x128xf32, #tpu.memory_space<vmem>>, vector<1x8x128xf32>
    %46 = vector.shape_cast %45 : vector<1x8x128xf32> to vector<8x128xf32>
    %cst_52 = arith.constant dense<0.000000e+00> : vector<1x128xf32>
    %47 = tpu.matmul %44, %46, %cst_52 {dimension_numbers = #tpu.dot_dimension_numbers<[1], [0], [0], [1], [0, 0, 1, 1], [], []>} : vector<1x8xf32>, vector<8x128xf32>, vector<1x128xf32> -> vector<1x128xf32>
    %48 = arith.addf %36, %47 : vector<1x128xf32>
    %c0_53 = arith.constant 0 : index
    %c4 = arith.constant 4 : index
    %c0_54 = arith.constant 0 : index
    %c0_55 = arith.constant 0 : index
    %49 = vector.load %arg1[%c0_53, %c4, %c0_54, %c0_55] : memref<1x16x1x16xf32, #tpu.memory_space<vmem>>, vector<1x1x1x16xf32>
    %50 = vector.shape_cast %49 : vector<1x1x1x16xf32> to vector<1x16xf32>
    %c0_56 = arith.constant 0 : index
    %c0_57 = arith.constant 0 : index
    %51 = vector.load %arg2[%c0_56, %c0_57] : memref<16x8xf32, #tpu.memory_space<vmem>>, vector<16x8xf32>
    %cst_58 = arith.constant dense<0.000000e+00> : vector<1x8xf32>
    %52 = tpu.matmul %50, %51, %cst_58 {dimension_numbers = #tpu.dot_dimension_numbers<[1], [0], [0], [1], [0, 0, 1, 1], [], []>} : vector<1x16xf32>, vector<16x8xf32>, vector<1x8xf32> -> vector<1x8xf32>
    %c0_59 = arith.constant 0 : index
    %c0_60 = arith.constant 0 : index
    %53 = vector.load %arg3[%c0_59, %c0_60] : memref<1x8xf32, #tpu.memory_space<vmem>>, vector<1x8xf32>
    %54 = arith.addf %52, %53 : vector<1x8xf32>
    %cst_61 = arith.constant 0.000000e+00 : f32
    %55 = vector.broadcast %cst_61 : f32 to vector<1x8xf32>
    %56 = arith.maximumf %54, %55 : vector<1x8xf32>
    %c4_62 = arith.constant 4 : index
    %c0_63 = arith.constant 0 : index
    %c0_64 = arith.constant 0 : index
    %57 = vector.load %arg4[%c4_62, %c0_63, %c0_64] : memref<16x8x128xf32, #tpu.memory_space<vmem>>, vector<1x8x128xf32>
    %58 = vector.shape_cast %57 : vector<1x8x128xf32> to vector<8x128xf32>
    %cst_65 = arith.constant dense<0.000000e+00> : vector<1x128xf32>
    %59 = tpu.matmul %56, %58, %cst_65 {dimension_numbers = #tpu.dot_dimension_numbers<[1], [0], [0], [1], [0, 0, 1, 1], [], []>} : vector<1x8xf32>, vector<8x128xf32>, vector<1x128xf32> -> vector<1x128xf32>
    %60 = arith.addf %48, %59 : vector<1x128xf32>
    %c0_66 = arith.constant 0 : index
    %c5 = arith.constant 5 : index
    %c0_67 = arith.constant 0 : index
    %c0_68 = arith.constant 0 : index
    %61 = vector.load %arg1[%c0_66, %c5, %c0_67, %c0_68] : memref<1x16x1x16xf32, #tpu.memory_space<vmem>>, vector<1x1x1x16xf32>
    %62 = vector.shape_cast %61 : vector<1x1x1x16xf32> to vector<1x16xf32>
    %c0_69 = arith.constant 0 : index
    %c0_70 = arith.constant 0 : index
    %63 = vector.load %arg2[%c0_69, %c0_70] : memref<16x8xf32, #tpu.memory_space<vmem>>, vector<16x8xf32>
    %cst_71 = arith.constant dense<0.000000e+00> : vector<1x8xf32>
    %64 = tpu.matmul %62, %63, %cst_71 {dimension_numbers = #tpu.dot_dimension_numbers<[1], [0], [0], [1], [0, 0, 1, 1], [], []>} : vector<1x16xf32>, vector<16x8xf32>, vector<1x8xf32> -> vector<1x8xf32>
    %c0_72 = arith.constant 0 : index
    %c0_73 = arith.constant 0 : index
    %65 = vector.load %arg3[%c0_72, %c0_73] : memref<1x8xf32, #tpu.memory_space<vmem>>, vector<1x8xf32>
    %66 = arith.addf %64, %65 : vector<1x8xf32>
    %cst_74 = arith.constant 0.000000e+00 : f32
    %67 = vector.broadcast %cst_74 : f32 to vector<1x8xf32>
    %68 = arith.maximumf %66, %67 : vector<1x8xf32>
    %c5_75 = arith.constant 5 : index
    %c0_76 = arith.constant 0 : index
    %c0_77 = arith.constant 0 : index
    %69 = vector.load %arg4[%c5_75, %c0_76, %c0_77] : memref<16x8x128xf32, #tpu.memory_space<vmem>>, vector<1x8x128xf32>
    %70 = vector.shape_cast %69 : vector<1x8x128xf32> to vector<8x128xf32>
    %cst_78 = arith.constant dense<0.000000e+00> : vector<1x128xf32>
    %71 = tpu.matmul %68, %70, %cst_78 {dimension_numbers = #tpu.dot_dimension_numbers<[1], [0], [0], [1], [0, 0, 1, 1], [], []>} : vector<1x8xf32>, vector<8x128xf32>, vector<1x128xf32> -> vector<1x128xf32>
    %72 = arith.addf %60, %71 : vector<1x128xf32>
    %c0_79 = arith.constant 0 : index
    %c6 = arith.constant 6 : index
    %c0_80 = arith.constant 0 : index
    %c0_81 = arith.constant 0 : index
    %73 = vector.load %arg1[%c0_79, %c6, %c0_80, %c0_81] : memref<1x16x1x16xf32, #tpu.memory_space<vmem>>, vector<1x1x1x16xf32>
    %74 = vector.shape_cast %73 : vector<1x1x1x16xf32> to vector<1x16xf32>
    %c0_82 = arith.constant 0 : index
    %c0_83 = arith.constant 0 : index
    %75 = vector.load %arg2[%c0_82, %c0_83] : memref<16x8xf32, #tpu.memory_space<vmem>>, vector<16x8xf32>
    %cst_84 = arith.constant dense<0.000000e+00> : vector<1x8xf32>
    %76 = tpu.matmul %74, %75, %cst_84 {dimension_numbers = #tpu.dot_dimension_numbers<[1], [0], [0], [1], [0, 0, 1, 1], [], []>} : vector<1x16xf32>, vector<16x8xf32>, vector<1x8xf32> -> vector<1x8xf32>
    %c0_85 = arith.constant 0 : index
    %c0_86 = arith.constant 0 : index
    %77 = vector.load %arg3[%c0_85, %c0_86] : memref<1x8xf32, #tpu.memory_space<vmem>>, vector<1x8xf32>
    %78 = arith.addf %76, %77 : vector<1x8xf32>
    %cst_87 = arith.constant 0.000000e+00 : f32
    %79 = vector.broadcast %cst_87 : f32 to vector<1x8xf32>
    %80 = arith.maximumf %78, %79 : vector<1x8xf32>
    %c6_88 = arith.constant 6 : index
    %c0_89 = arith.constant 0 : index
    %c0_90 = arith.constant 0 : index
    %81 = vector.load %arg4[%c6_88, %c0_89, %c0_90] : memref<16x8x128xf32, #tpu.memory_space<vmem>>, vector<1x8x128xf32>
    %82 = vector.shape_cast %81 : vector<1x8x128xf32> to vector<8x128xf32>
    %cst_91 = arith.constant dense<0.000000e+00> : vector<1x128xf32>
    %83 = tpu.matmul %80, %82, %cst_91 {dimension_numbers = #tpu.dot_dimension_numbers<[1], [0], [0], [1], [0, 0, 1, 1], [], []>} : vector<1x8xf32>, vector<8x128xf32>, vector<1x128xf32> -> vector<1x128xf32>
    %84 = arith.addf %72, %83 : vector<1x128xf32>
    %c0_92 = arith.constant 0 : index
    %c7 = arith.constant 7 : index
    %c0_93 = arith.constant 0 : index
    %c0_94 = arith.constant 0 : index
    %85 = vector.load %arg1[%c0_92, %c7, %c0_93, %c0_94] : memref<1x16x1x16xf32, #tpu.memory_space<vmem>>, vector<1x1x1x16xf32>
    %86 = vector.shape_cast %85 : vector<1x1x1x16xf32> to vector<1x16xf32>
    %c0_95 = arith.constant 0 : index
    %c0_96 = arith.constant 0 : index
    %87 = vector.load %arg2[%c0_95, %c0_96] : memref<16x8xf32, #tpu.memory_space<vmem>>, vector<16x8xf32>
    %cst_97 = arith.constant dense<0.000000e+00> : vector<1x8xf32>
    %88 = tpu.matmul %86, %87, %cst_97 {dimension_numbers = #tpu.dot_dimension_numbers<[1], [0], [0], [1], [0, 0, 1, 1], [], []>} : vector<1x16xf32>, vector<16x8xf32>, vector<1x8xf32> -> vector<1x8xf32>
    %c0_98 = arith.constant 0 : index
    %c0_99 = arith.constant 0 : index
    %89 = vector.load %arg3[%c0_98, %c0_99] : memref<1x8xf32, #tpu.memory_space<vmem>>, vector<1x8xf32>
    %90 = arith.addf %88, %89 : vector<1x8xf32>
    %cst_100 = arith.constant 0.000000e+00 : f32
    %91 = vector.broadcast %cst_100 : f32 to vector<1x8xf32>
    %92 = arith.maximumf %90, %91 : vector<1x8xf32>
    %c7_101 = arith.constant 7 : index
    %c0_102 = arith.constant 0 : index
    %c0_103 = arith.constant 0 : index
    %93 = vector.load %arg4[%c7_101, %c0_102, %c0_103] : memref<16x8x128xf32, #tpu.memory_space<vmem>>, vector<1x8x128xf32>
    %94 = vector.shape_cast %93 : vector<1x8x128xf32> to vector<8x128xf32>
    %cst_104 = arith.constant dense<0.000000e+00> : vector<1x128xf32>
    %95 = tpu.matmul %92, %94, %cst_104 {dimension_numbers = #tpu.dot_dimension_numbers<[1], [0], [0], [1], [0, 0, 1, 1], [], []>} : vector<1x8xf32>, vector<8x128xf32>, vector<1x128xf32> -> vector<1x128xf32>
    %96 = arith.addf %84, %95 : vector<1x128xf32>
    %c0_105 = arith.constant 0 : index
    %c8 = arith.constant 8 : index
    %c0_106 = arith.constant 0 : index
    %c0_107 = arith.constant 0 : index
    %97 = vector.load %arg1[%c0_105, %c8, %c0_106, %c0_107] : memref<1x16x1x16xf32, #tpu.memory_space<vmem>>, vector<1x1x1x16xf32>
    %98 = vector.shape_cast %97 : vector<1x1x1x16xf32> to vector<1x16xf32>
    %c0_108 = arith.constant 0 : index
    %c0_109 = arith.constant 0 : index
    %99 = vector.load %arg2[%c0_108, %c0_109] : memref<16x8xf32, #tpu.memory_space<vmem>>, vector<16x8xf32>
    %cst_110 = arith.constant dense<0.000000e+00> : vector<1x8xf32>
    %100 = tpu.matmul %98, %99, %cst_110 {dimension_numbers = #tpu.dot_dimension_numbers<[1], [0], [0], [1], [0, 0, 1, 1], [], []>} : vector<1x16xf32>, vector<16x8xf32>, vector<1x8xf32> -> vector<1x8xf32>
    %c0_111 = arith.constant 0 : index
    %c0_112 = arith.constant 0 : index
    %101 = vector.load %arg3[%c0_111, %c0_112] : memref<1x8xf32, #tpu.memory_space<vmem>>, vector<1x8xf32>
    %102 = arith.addf %100, %101 : vector<1x8xf32>
    %cst_113 = arith.constant 0.000000e+00 : f32
    %103 = vector.broadcast %cst_113 : f32 to vector<1x8xf32>
    %104 = arith.maximumf %102, %103 : vector<1x8xf32>
    %c8_114 = arith.constant 8 : index
    %c0_115 = arith.constant 0 : index
    %c0_116 = arith.constant 0 : index
    %105 = vector.load %arg4[%c8_114, %c0_115, %c0_116] : memref<16x8x128xf32, #tpu.memory_space<vmem>>, vector<1x8x128xf32>
    %106 = vector.shape_cast %105 : vector<1x8x128xf32> to vector<8x128xf32>
    %cst_117 = arith.constant dense<0.000000e+00> : vector<1x128xf32>
    %107 = tpu.matmul %104, %106, %cst_117 {dimension_numbers = #tpu.dot_dimension_numbers<[1], [0], [0], [1], [0, 0, 1, 1], [], []>} : vector<1x8xf32>, vector<8x128xf32>, vector<1x128xf32> -> vector<1x128xf32>
    %108 = arith.addf %96, %107 : vector<1x128xf32>
    %c0_118 = arith.constant 0 : index
    %c9 = arith.constant 9 : index
    %c0_119 = arith.constant 0 : index
    %c0_120 = arith.constant 0 : index
    %109 = vector.load %arg1[%c0_118, %c9, %c0_119, %c0_120] : memref<1x16x1x16xf32, #tpu.memory_space<vmem>>, vector<1x1x1x16xf32>
    %110 = vector.shape_cast %109 : vector<1x1x1x16xf32> to vector<1x16xf32>
    %c0_121 = arith.constant 0 : index
    %c0_122 = arith.constant 0 : index
    %111 = vector.load %arg2[%c0_121, %c0_122] : memref<16x8xf32, #tpu.memory_space<vmem>>, vector<16x8xf32>
    %cst_123 = arith.constant dense<0.000000e+00> : vector<1x8xf32>
    %112 = tpu.matmul %110, %111, %cst_123 {dimension_numbers = #tpu.dot_dimension_numbers<[1], [0], [0], [1], [0, 0, 1, 1], [], []>} : vector<1x16xf32>, vector<16x8xf32>, vector<1x8xf32> -> vector<1x8xf32>
    %c0_124 = arith.constant 0 : index
    %c0_125 = arith.constant 0 : index
    %113 = vector.load %arg3[%c0_124, %c0_125] : memref<1x8xf32, #tpu.memory_space<vmem>>, vector<1x8xf32>
    %114 = arith.addf %112, %113 : vector<1x8xf32>
    %cst_126 = arith.constant 0.000000e+00 : f32
    %115 = vector.broadcast %cst_126 : f32 to vector<1x8xf32>
    %116 = arith.maximumf %114, %115 : vector<1x8xf32>
    %c9_127 = arith.constant 9 : index
    %c0_128 = arith.constant 0 : index
    %c0_129 = arith.constant 0 : index
    %117 = vector.load %arg4[%c9_127, %c0_128, %c0_129] : memref<16x8x128xf32, #tpu.memory_space<vmem>>, vector<1x8x128xf32>
    %118 = vector.shape_cast %117 : vector<1x8x128xf32> to vector<8x128xf32>
    %cst_130 = arith.constant dense<0.000000e+00> : vector<1x128xf32>
    %119 = tpu.matmul %116, %118, %cst_130 {dimension_numbers = #tpu.dot_dimension_numbers<[1], [0], [0], [1], [0, 0, 1, 1], [], []>} : vector<1x8xf32>, vector<8x128xf32>, vector<1x128xf32> -> vector<1x128xf32>
    %120 = arith.addf %108, %119 : vector<1x128xf32>
    %c0_131 = arith.constant 0 : index
    %c10 = arith.constant 10 : index
    %c0_132 = arith.constant 0 : index
    %c0_133 = arith.constant 0 : index
    %121 = vector.load %arg1[%c0_131, %c10, %c0_132, %c0_133] : memref<1x16x1x16xf32, #tpu.memory_space<vmem>>, vector<1x1x1x16xf32>
    %122 = vector.shape_cast %121 : vector<1x1x1x16xf32> to vector<1x16xf32>
    %c0_134 = arith.constant 0 : index
    %c0_135 = arith.constant 0 : index
    %123 = vector.load %arg2[%c0_134, %c0_135] : memref<16x8xf32, #tpu.memory_space<vmem>>, vector<16x8xf32>
    %cst_136 = arith.constant dense<0.000000e+00> : vector<1x8xf32>
    %124 = tpu.matmul %122, %123, %cst_136 {dimension_numbers = #tpu.dot_dimension_numbers<[1], [0], [0], [1], [0, 0, 1, 1], [], []>} : vector<1x16xf32>, vector<16x8xf32>, vector<1x8xf32> -> vector<1x8xf32>
    %c0_137 = arith.constant 0 : index
    %c0_138 = arith.constant 0 : index
    %125 = vector.load %arg3[%c0_137, %c0_138] : memref<1x8xf32, #tpu.memory_space<vmem>>, vector<1x8xf32>
    %126 = arith.addf %124, %125 : vector<1x8xf32>
    %cst_139 = arith.constant 0.000000e+00 : f32
    %127 = vector.broadcast %cst_139 : f32 to vector<1x8xf32>
    %128 = arith.maximumf %126, %127 : vector<1x8xf32>
    %c10_140 = arith.constant 10 : index
    %c0_141 = arith.constant 0 : index
    %c0_142 = arith.constant 0 : index
    %129 = vector.load %arg4[%c10_140, %c0_141, %c0_142] : memref<16x8x128xf32, #tpu.memory_space<vmem>>, vector<1x8x128xf32>
    %130 = vector.shape_cast %129 : vector<1x8x128xf32> to vector<8x128xf32>
    %cst_143 = arith.constant dense<0.000000e+00> : vector<1x128xf32>
    %131 = tpu.matmul %128, %130, %cst_143 {dimension_numbers = #tpu.dot_dimension_numbers<[1], [0], [0], [1], [0, 0, 1, 1], [], []>} : vector<1x8xf32>, vector<8x128xf32>, vector<1x128xf32> -> vector<1x128xf32>
    %132 = arith.addf %120, %131 : vector<1x128xf32>
    %c0_144 = arith.constant 0 : index
    %c11 = arith.constant 11 : index
    %c0_145 = arith.constant 0 : index
    %c0_146 = arith.constant 0 : index
    %133 = vector.load %arg1[%c0_144, %c11, %c0_145, %c0_146] : memref<1x16x1x16xf32, #tpu.memory_space<vmem>>, vector<1x1x1x16xf32>
    %134 = vector.shape_cast %133 : vector<1x1x1x16xf32> to vector<1x16xf32>
    %c0_147 = arith.constant 0 : index
    %c0_148 = arith.constant 0 : index
    %135 = vector.load %arg2[%c0_147, %c0_148] : memref<16x8xf32, #tpu.memory_space<vmem>>, vector<16x8xf32>
    %cst_149 = arith.constant dense<0.000000e+00> : vector<1x8xf32>
    %136 = tpu.matmul %134, %135, %cst_149 {dimension_numbers = #tpu.dot_dimension_numbers<[1], [0], [0], [1], [0, 0, 1, 1], [], []>} : vector<1x16xf32>, vector<16x8xf32>, vector<1x8xf32> -> vector<1x8xf32>
    %c0_150 = arith.constant 0 : index
    %c0_151 = arith.constant 0 : index
    %137 = vector.load %arg3[%c0_150, %c0_151] : memref<1x8xf32, #tpu.memory_space<vmem>>, vector<1x8xf32>
    %138 = arith.addf %136, %137 : vector<1x8xf32>
    %cst_152 = arith.constant 0.000000e+00 : f32
    %139 = vector.broadcast %cst_152 : f32 to vector<1x8xf32>
    %140 = arith.maximumf %138, %139 : vector<1x8xf32>
    %c11_153 = arith.constant 11 : index
    %c0_154 = arith.constant 0 : index
    %c0_155 = arith.constant 0 : index
    %141 = vector.load %arg4[%c11_153, %c0_154, %c0_155] : memref<16x8x128xf32, #tpu.memory_space<vmem>>, vector<1x8x128xf32>
    %142 = vector.shape_cast %141 : vector<1x8x128xf32> to vector<8x128xf32>
    %cst_156 = arith.constant dense<0.000000e+00> : vector<1x128xf32>
    %143 = tpu.matmul %140, %142, %cst_156 {dimension_numbers = #tpu.dot_dimension_numbers<[1], [0], [0], [1], [0, 0, 1, 1], [], []>} : vector<1x8xf32>, vector<8x128xf32>, vector<1x128xf32> -> vector<1x128xf32>
    %144 = arith.addf %132, %143 : vector<1x128xf32>
    %c0_157 = arith.constant 0 : index
    %c12 = arith.constant 12 : index
    %c0_158 = arith.constant 0 : index
    %c0_159 = arith.constant 0 : index
    %145 = vector.load %arg1[%c0_157, %c12, %c0_158, %c0_159] : memref<1x16x1x16xf32, #tpu.memory_space<vmem>>, vector<1x1x1x16xf32>
    %146 = vector.shape_cast %145 : vector<1x1x1x16xf32> to vector<1x16xf32>
    %c0_160 = arith.constant 0 : index
    %c0_161 = arith.constant 0 : index
    %147 = vector.load %arg2[%c0_160, %c0_161] : memref<16x8xf32, #tpu.memory_space<vmem>>, vector<16x8xf32>
    %cst_162 = arith.constant dense<0.000000e+00> : vector<1x8xf32>
    %148 = tpu.matmul %146, %147, %cst_162 {dimension_numbers = #tpu.dot_dimension_numbers<[1], [0], [0], [1], [0, 0, 1, 1], [], []>} : vector<1x16xf32>, vector<16x8xf32>, vector<1x8xf32> -> vector<1x8xf32>
    %c0_163 = arith.constant 0 : index
    %c0_164 = arith.constant 0 : index
    %149 = vector.load %arg3[%c0_163, %c0_164] : memref<1x8xf32, #tpu.memory_space<vmem>>, vector<1x8xf32>
    %150 = arith.addf %148, %149 : vector<1x8xf32>
    %cst_165 = arith.constant 0.000000e+00 : f32
    %151 = vector.broadcast %cst_165 : f32 to vector<1x8xf32>
    %152 = arith.maximumf %150, %151 : vector<1x8xf32>
    %c12_166 = arith.constant 12 : index
    %c0_167 = arith.constant 0 : index
    %c0_168 = arith.constant 0 : index
    %153 = vector.load %arg4[%c12_166, %c0_167, %c0_168] : memref<16x8x128xf32, #tpu.memory_space<vmem>>, vector<1x8x128xf32>
    %154 = vector.shape_cast %153 : vector<1x8x128xf32> to vector<8x128xf32>
    %cst_169 = arith.constant dense<0.000000e+00> : vector<1x128xf32>
    %155 = tpu.matmul %152, %154, %cst_169 {dimension_numbers = #tpu.dot_dimension_numbers<[1], [0], [0], [1], [0, 0, 1, 1], [], []>} : vector<1x8xf32>, vector<8x128xf32>, vector<1x128xf32> -> vector<1x128xf32>
    %156 = arith.addf %144, %155 : vector<1x128xf32>
    %c0_170 = arith.constant 0 : index
    %c13 = arith.constant 13 : index
    %c0_171 = arith.constant 0 : index
    %c0_172 = arith.constant 0 : index
    %157 = vector.load %arg1[%c0_170, %c13, %c0_171, %c0_172] : memref<1x16x1x16xf32, #tpu.memory_space<vmem>>, vector<1x1x1x16xf32>
    %158 = vector.shape_cast %157 : vector<1x1x1x16xf32> to vector<1x16xf32>
    %c0_173 = arith.constant 0 : index
    %c0_174 = arith.constant 0 : index
    %159 = vector.load %arg2[%c0_173, %c0_174] : memref<16x8xf32, #tpu.memory_space<vmem>>, vector<16x8xf32>
    %cst_175 = arith.constant dense<0.000000e+00> : vector<1x8xf32>
    %160 = tpu.matmul %158, %159, %cst_175 {dimension_numbers = #tpu.dot_dimension_numbers<[1], [0], [0], [1], [0, 0, 1, 1], [], []>} : vector<1x16xf32>, vector<16x8xf32>, vector<1x8xf32> -> vector<1x8xf32>
    %c0_176 = arith.constant 0 : index
    %c0_177 = arith.constant 0 : index
    %161 = vector.load %arg3[%c0_176, %c0_177] : memref<1x8xf32, #tpu.memory_space<vmem>>, vector<1x8xf32>
    %162 = arith.addf %160, %161 : vector<1x8xf32>
    %cst_178 = arith.constant 0.000000e+00 : f32
    %163 = vector.broadcast %cst_178 : f32 to vector<1x8xf32>
    %164 = arith.maximumf %162, %163 : vector<1x8xf32>
    %c13_179 = arith.constant 13 : index
    %c0_180 = arith.constant 0 : index
    %c0_181 = arith.constant 0 : index
    %165 = vector.load %arg4[%c13_179, %c0_180, %c0_181] : memref<16x8x128xf32, #tpu.memory_space<vmem>>, vector<1x8x128xf32>
    %166 = vector.shape_cast %165 : vector<1x8x128xf32> to vector<8x128xf32>
    %cst_182 = arith.constant dense<0.000000e+00> : vector<1x128xf32>
    %167 = tpu.matmul %164, %166, %cst_182 {dimension_numbers = #tpu.dot_dimension_numbers<[1], [0], [0], [1], [0, 0, 1, 1], [], []>} : vector<1x8xf32>, vector<8x128xf32>, vector<1x128xf32> -> vector<1x128xf32>
    %168 = arith.addf %156, %167 : vector<1x128xf32>
    %c0_183 = arith.constant 0 : index
    %c14 = arith.constant 14 : index
    %c0_184 = arith.constant 0 : index
    %c0_185 = arith.constant 0 : index
    %169 = vector.load %arg1[%c0_183, %c14, %c0_184, %c0_185] : memref<1x16x1x16xf32, #tpu.memory_space<vmem>>, vector<1x1x1x16xf32>
    %170 = vector.shape_cast %169 : vector<1x1x1x16xf32> to vector<1x16xf32>
    %c0_186 = arith.constant 0 : index
    %c0_187 = arith.constant 0 : index
    %171 = vector.load %arg2[%c0_186, %c0_187] : memref<16x8xf32, #tpu.memory_space<vmem>>, vector<16x8xf32>
    %cst_188 = arith.constant dense<0.000000e+00> : vector<1x8xf32>
    %172 = tpu.matmul %170, %171, %cst_188 {dimension_numbers = #tpu.dot_dimension_numbers<[1], [0], [0], [1], [0, 0, 1, 1], [], []>} : vector<1x16xf32>, vector<16x8xf32>, vector<1x8xf32> -> vector<1x8xf32>
    %c0_189 = arith.constant 0 : index
    %c0_190 = arith.constant 0 : index
    %173 = vector.load %arg3[%c0_189, %c0_190] : memref<1x8xf32, #tpu.memory_space<vmem>>, vector<1x8xf32>
    %174 = arith.addf %172, %173 : vector<1x8xf32>
    %cst_191 = arith.constant 0.000000e+00 : f32
    %175 = vector.broadcast %cst_191 : f32 to vector<1x8xf32>
    %176 = arith.maximumf %174, %175 : vector<1x8xf32>
    %c14_192 = arith.constant 14 : index
    %c0_193 = arith.constant 0 : index
    %c0_194 = arith.constant 0 : index
    %177 = vector.load %arg4[%c14_192, %c0_193, %c0_194] : memref<16x8x128xf32, #tpu.memory_space<vmem>>, vector<1x8x128xf32>
    %178 = vector.shape_cast %177 : vector<1x8x128xf32> to vector<8x128xf32>
    %cst_195 = arith.constant dense<0.000000e+00> : vector<1x128xf32>
    %179 = tpu.matmul %176, %178, %cst_195 {dimension_numbers = #tpu.dot_dimension_numbers<[1], [0], [0], [1], [0, 0, 1, 1], [], []>} : vector<1x8xf32>, vector<8x128xf32>, vector<1x128xf32> -> vector<1x128xf32>
    %180 = arith.addf %168, %179 : vector<1x128xf32>
    %c0_196 = arith.constant 0 : index
    %c15 = arith.constant 15 : index
    %c0_197 = arith.constant 0 : index
    %c0_198 = arith.constant 0 : index
    %181 = vector.load %arg1[%c0_196, %c15, %c0_197, %c0_198] : memref<1x16x1x16xf32, #tpu.memory_space<vmem>>, vector<1x1x1x16xf32>
    %182 = vector.shape_cast %181 : vector<1x1x1x16xf32> to vector<1x16xf32>
    %c0_199 = arith.constant 0 : index
    %c0_200 = arith.constant 0 : index
    %183 = vector.load %arg2[%c0_199, %c0_200] : memref<16x8xf32, #tpu.memory_space<vmem>>, vector<16x8xf32>
    %cst_201 = arith.constant dense<0.000000e+00> : vector<1x8xf32>
    %184 = tpu.matmul %182, %183, %cst_201 {dimension_numbers = #tpu.dot_dimension_numbers<[1], [0], [0], [1], [0, 0, 1, 1], [], []>} : vector<1x16xf32>, vector<16x8xf32>, vector<1x8xf32> -> vector<1x8xf32>
    %c0_202 = arith.constant 0 : index
    %c0_203 = arith.constant 0 : index
    %185 = vector.load %arg3[%c0_202, %c0_203] : memref<1x8xf32, #tpu.memory_space<vmem>>, vector<1x8xf32>
    %186 = arith.addf %184, %185 : vector<1x8xf32>
    %cst_204 = arith.constant 0.000000e+00 : f32
    %187 = vector.broadcast %cst_204 : f32 to vector<1x8xf32>
    %188 = arith.maximumf %186, %187 : vector<1x8xf32>
    %c15_205 = arith.constant 15 : index
    %c0_206 = arith.constant 0 : index
    %c0_207 = arith.constant 0 : index
    %189 = vector.load %arg4[%c15_205, %c0_206, %c0_207] : memref<16x8x128xf32, #tpu.memory_space<vmem>>, vector<1x8x128xf32>
    %190 = vector.shape_cast %189 : vector<1x8x128xf32> to vector<8x128xf32>
    %cst_208 = arith.constant dense<0.000000e+00> : vector<1x128xf32>
    %191 = tpu.matmul %188, %190, %cst_208 {dimension_numbers = #tpu.dot_dimension_numbers<[1], [0], [0], [1], [0, 0, 1, 1], [], []>} : vector<1x8xf32>, vector<8x128xf32>, vector<1x128xf32> -> vector<1x128xf32>
    %192 = arith.addf %180, %191 : vector<1x128xf32>
    %cst_209 = arith.constant 0.000000e+00 : f32
    %193 = vector.broadcast %cst_209 : f32 to vector<1x128xf32>
    %194 = arith.maximumf %192, %193 : vector<1x128xf32>
    %c0_210 = arith.constant 0 : index
    %c0_211 = arith.constant 0 : index
    %c0_212 = arith.constant 0 : index
    %195 = vector.load %arg6[%c0_210, %c0_211, %c0_212] : memref<1x1x128xf32, #tpu.memory_space<vmem>>, vector<1x1x128xf32>
    %196 = vector.shape_cast %195 : vector<1x1x128xf32> to vector<1x128xf32>
    %197 = vector.shape_cast %194 : vector<1x128xf32> to vector<1x1x128xf32>
    tpu.vector_store %arg6[%c0_210, %c0_211, %c0_212], %197 {strides = array<i32>} : memref<1x1x128xf32, #tpu.memory_space<vmem>>, vector<1x1x128xf32>,
    return
  }
  func.func @transform_0(%arg0: i32) -> (i32, i32, i32, i32) {
    %c0_i32 = arith.constant 0 : i32
    %c0_i32_0 = arith.constant 0 : i32
    %c0_i32_1 = arith.constant 0 : i32
    %c0_i32_2 = arith.constant 0 : i32
    return %arg0, %c0_i32, %c0_i32_0, %c0_i32_1 : i32, i32, i32, i32
  }
  func.func @transform_1(%arg0: i32) -> (i32, i32) {
    %c0_i32 = arith.constant 0 : i32
    %c0_i32_0 = arith.constant 0 : i32
    %c0_i32_1 = arith.constant 0 : i32
    return %c0_i32, %c0_i32_0 : i32, i32
  }
  func.func @transform_2(%arg0: i32) -> (i32, i32) {
    %c0_i32 = arith.constant 0 : i32
    %c0_i32_0 = arith.constant 0 : i32
    %c0_i32_1 = arith.constant 0 : i32
    return %c0_i32, %c0_i32_0 : i32, i32
  }
  func.func @transform_3(%arg0: i32) -> (i32, i32, i32) {
    %c0_i32 = arith.constant 0 : i32
    %c0_i32_0 = arith.constant 0 : i32
    %c0_i32_1 = arith.constant 0 : i32
    %c0_i32_2 = arith.constant 0 : i32
    return %c0_i32, %c0_i32_0, %c0_i32_1 : i32, i32, i32
  }
  func.func @transform_4(%arg0: i32) -> (i32, i32) {
    %c0_i32 = arith.constant 0 : i32
    %c0_i32_0 = arith.constant 0 : i32
    %c0_i32_1 = arith.constant 0 : i32
    return %c0_i32, %c0_i32_0 : i32, i32
  }
  func.func @transform_5(%arg0: i32) -> (i32, i32, i32) {
    %c0_i32 = arith.constant 0 : i32
    %c0_i32_0 = arith.constant 0 : i32
    %c0_i32_1 = arith.constant 0 : i32
    return %arg0, %c0_i32, %c0_i32_0 : i32, i32, i32
  }
}

</mosaic_0001>

<llo_original>
// kernel: encoder_forward.1
$region0: #{encoder_forward.1}
  #allocation0 [shape = 'u32[]', space=smem, size = 0x4, offset = 0x4, fixed_abs, tag = 'smem constant byte address 0x4 - core index']
  #allocation1 [shape = 'u32[144,128]{1,0:T(1,128)}', space=vmem, size = 0x12000, scoped, tag = 'internal scratch']
  %s0 = inlined_call_operand.vmem [shape: f32[2,16,1,16], index: 0, kind: input, shape index: {}]
  %s1 = inlined_call_operand.vmem [shape: f32[16,8], index: 1, kind: input, shape index: {}]
  %s2 = inlined_call_operand.vmem [shape: f32[1,8], index: 2, kind: input, shape index: {}]
  %s3 = inlined_call_operand.vmem [shape: f32[16,8,128], index: 3, kind: input, shape index: {}]
  %s4 = inlined_call_operand.vmem [shape: f32[1,128], index: 4, kind: input, shape index: {}]
  %s5 = inlined_call_operand.vmem [shape: f32[2,1,128], index: 5, kind: output, shape index: {}]
  %s6 = sld [smem:[#allocation0]]
  $region53: #{encoder_forward.1} parent=0
    _
  %s8 = ssub.s32 1, %s6
  %s9 = scalar_select 0, %s8, %s6
  loop: start=0, step=1, limit=4
  $region2: #{encoder_forward.1} parent=0 // loop_pre_header
    _
  $region3: #{encoder_forward.1} parent=0 // loop_header
    %s11 = sphi 0, %s15
    %p12 = scmp.ge.s32.totalorder %s11, 4
    %s21 = sphi 0, %s23
    %s24 = sphi 0, %s21
    %s25 = sphi 0, %s24
    %s41 = sphi 0, %s25
    %s45 = sphi 0, %s45
    %s47 = sphi 0, %s45
    %s48 = sphi 0, %s47
    %s62 = sphi 0, %s48
    %s66 = sphi 0, %s66
    %s68 = sphi 0, %s66
    %s69 = sphi 0, %s68
    %s83 = sphi 0, %s69
    %s87 = sphi 0, %s87
    %s89 = sphi 0, %s87
    %s90 = sphi 0, %s89
    %s104 = sphi 0, %s90
    %s108 = sphi 0, %s108
    %s110 = sphi 0, %s108
    %s111 = sphi 0, %s110
    %s125 = sphi 0, %s111
    %s131 = sphi 0, %s133
    %s134 = sphi 0, %s131
    %s135 = sphi 0, %s134
    %s151 = sphi 0, %s135
  $region4: #{encoder_forward.1} parent=0 // loop_header_branch
    %14 = sbr.rel (%p12) target = $region8
  $region5: #{encoder_forward.1} parent=0 // loop_body
    %s16 = ssub.s32 %s11, 1
    %s17 = ssub.s32 %s11, 2
    %s18 = sadd.s32 %s11, 1
    %s19 = ssub.s32 %s11, %s18
    %p20 = scmp.eq.s32.totalorder %s19, 0
    %s22 = sadd.s32 %s21, 1
    %s23 = scalar_select %p20, %s21, %s22
    %p26 = pneg %p20
    %p27 = scmp.eq.s32.totalorder %s11, 1
    %p28 = por %p26, %p27
    %p29 = scmp.ne.s32.totalorder %s21, %s24
    %p30 = scmp.eq.s32.totalorder %s11, 0
    %p31 = por %p29, %p30
    %p32 = scmp.ne.s32.totalorder %s21, %s24
    %p33 = scmp.eq.s32.totalorder %s16, 1
    %p34 = por %p32, %p33
    %p35 = scmp.ne.s32.totalorder %s24, %s25
    %p36 = scmp.eq.s32.totalorder %s16, 0
    %p37 = por %p35, %p36
    %p38 = scmp.ne.s32.totalorder %s24, %s25
    %p39 = scmp.eq.s32.totalorder %s17, 1
    %p40 = por %p38, %p39
    %p42 = scmp.ne.s32.totalorder %s25, %s41
    %p43 = scmp.eq.s32.totalorder %s17, 0
    %p44 = por %p42, %p43
    %s46 = sadd.s32 %s45, 1
    %p49 = scmp.eq.s32.totalorder %s11, 1
    %p50 = scmp.ne.s32.totalorder %s45, %s47
    %p51 = scmp.eq.s32.totalorder %s11, 0
    %p52 = por %p50, %p51
    %p53 = scmp.ne.s32.totalorder %s45, %s47
    %p54 = scmp.eq.s32.totalorder %s16, 1
    %p55 = por %p53, %p54
    %p56 = scmp.ne.s32.totalorder %s47, %s48
    %p57 = scmp.eq.s32.totalorder %s16, 0
    %p58 = por %p56, %p57
    %p59 = scmp.ne.s32.totalorder %s47, %s48
    %p60 = scmp.eq.s32.totalorder %s17, 1
    %p61 = por %p59, %p60
    %p63 = scmp.ne.s32.totalorder %s48, %s62
    %p64 = scmp.eq.s32.totalorder %s17, 0
    %p65 = por %p63, %p64
    %s67 = sadd.s32 %s66, 1
    %p70 = scmp.eq.s32.totalorder %s11, 1
    %p71 = scmp.ne.s32.totalorder %s66, %s68
    %p72 = scmp.eq.s32.totalorder %s11, 0
    %p73 = por %p71, %p72
    %p74 = scmp.ne.s32.totalorder %s66, %s68
    %p75 = scmp.eq.s32.totalorder %s16, 1
    %p76 = por %p74, %p75
    %p77 = scmp.ne.s32.totalorder %s68, %s69
    %p78 = scmp.eq.s32.totalorder %s16, 0
    %p79 = por %p77, %p78
    %p80 = scmp.ne.s32.totalorder %s68, %s69
    %p81 = scmp.eq.s32.totalorder %s17, 1
    %p82 = por %p80, %p81
    %p84 = scmp.ne.s32.totalorder %s69, %s83
    %p85 = scmp.eq.s32.totalorder %s17, 0
    %p86 = por %p84, %p85
    %s88 = sadd.s32 %s87, 1
    %p91 = scmp.eq.s32.totalorder %s11, 1
    %p92 = scmp.ne.s32.totalorder %s87, %s89
    %p93 = scmp.eq.s32.totalorder %s11, 0
    %p94 = por %p92, %p93
    %p95 = scmp.ne.s32.totalorder %s87, %s89
    %p96 = scmp.eq.s32.totalorder %s16, 1
    %p97 = por %p95, %p96
    %p98 = scmp.ne.s32.totalorder %s89, %s90
    %p99 = scmp.eq.s32.totalorder %s16, 0
    %p100 = por %p98, %p99
    %p101 = scmp.ne.s32.totalorder %s89, %s90
    %p102 = scmp.eq.s32.totalorder %s17, 1
    %p103 = por %p101, %p102
    %p105 = scmp.ne.s32.totalorder %s90, %s104
    %p106 = scmp.eq.s32.totalorder %s17, 0
    %p107 = por %p105, %p106
    %s109 = sadd.s32 %s108, 1
    %p112 = scmp.eq.s32.totalorder %s11, 1
    %p113 = scmp.ne.s32.totalorder %s108, %s110
    %p114 = scmp.eq.s32.totalorder %s11, 0
    %p115 = por %p113, %p114
    %p116 = scmp.ne.s32.totalorder %s108, %s110
    %p117 = scmp.eq.s32.totalorder %s16, 1
    %p118 = por %p116, %p117
    %p119 = scmp.ne.s32.totalorder %s110, %s111
    %p120 = scmp.eq.s32.totalorder %s16, 0
    %p121 = por %p119, %p120
    %p122 = scmp.ne.s32.totalorder %s110, %s111
    %p123 = scmp.eq.s32.totalorder %s17, 1
    %p124 = por %p122, %p123
    %p126 = scmp.ne.s32.totalorder %s111, %s125
    %p127 = scmp.eq.s32.totalorder %s17, 0
    %p128 = por %p126, %p127
    %s129 = ssub.s32 %s11, %s18
    %p130 = scmp.eq.s32.totalorder %s129, 0
    %s132 = sadd.s32 %s131, 1
    %s133 = scalar_select %p130, %s131, %s132
    %p136 = pneg %p130
    %p137 = scmp.eq.s32.totalorder %s11, 1
    %p138 = por %p136, %p137
    %p139 = scmp.ne.s32.totalorder %s131, %s134
    %p140 = scmp.eq.s32.totalorder %s11, 0
    %p141 = por %p139, %p140
    %p142 = scmp.ne.s32.totalorder %s131, %s134
    %p143 = scmp.eq.s32.totalorder %s16, 1
    %p144 = por %p142, %p143
    %p145 = scmp.ne.s32.totalorder %s134, %s135
    %p146 = scmp.eq.s32.totalorder %s16, 0
    %p147 = por %p145, %p146
    %p148 = scmp.ne.s32.totalorder %s134, %s135
    %p149 = scmp.eq.s32.totalorder %s17, 1
    %p150 = por %p148, %p149
    %p152 = scmp.ne.s32.totalorder %s135, %s151
    %p153 = scmp.eq.s32.totalorder %s17, 0
    %p154 = por %p152, %p153
    %p155 = scmp.le.s32.totalorder 1, %s11
    %p156 = scmp.lt.s32.totalorder %s11, 3
    %p157 = pnand %p155, %p156
    %p158 = pneg %p157
    // Predicated region
    $region9: #{encoder_forward.1} parent=5 // pred_check
      _
    $region10: #{encoder_forward.1} parent=5 // pred_check_branch
      %160 = sbr.rel (%p157) target = $region12
    $region11: #{encoder_forward.1} parent=5 // pred_region
      %s161 = ssub.s32 %s11, 1
      // Predicated region
      $region13: #{encoder_forward.1} parent=11 // pred_check
        %p162 = pneg %p58
      $region14: #{encoder_forward.1} parent=11 // pred_check_branch
        %164 = sbr.rel (%p162) target = $region16
      $region15: #{encoder_forward.1} parent=11 // pred_region
        _
      $region16: #{encoder_forward.1} parent=11 // pred_fallthru
        _
      // Predicated region
      $region17: #{encoder_forward.1} parent=11 // pred_check
        %p165 = pneg %p79
      $region18: #{encoder_forward.1} parent=11 // pred_check_branch
        %167 = sbr.rel (%p165) target = $region20
      $region19: #{encoder_forward.1} parent=11 // pred_region
        _
      $region20: #{encoder_forward.1} parent=11 // pred_fallthru
        _
      // Predicated region
      $region21: #{encoder_forward.1} parent=11 // pred_check
        %p168 = pneg %p100
      $region22: #{encoder_forward.1} parent=11 // pred_check_branch
        %170 = sbr.rel (%p168) target = $region24
      $region23: #{encoder_forward.1} parent=11 // pred_region
        _
      $region24: #{encoder_forward.1} parent=11 // pred_fallthru
        _
      // Predicated region
      $region25: #{encoder_forward.1} parent=11 // pred_check
        %p171 = pneg %p121
      $region26: #{encoder_forward.1} parent=11 // pred_check_branch
        %173 = sbr.rel (%p171) target = $region28
      $region27: #{encoder_forward.1} parent=11 // pred_region
        _
      $region28: #{encoder_forward.1} parent=11 // pred_fallthru
        _
    $region12: #{encoder_forward.1} parent=5 // pred_fallthru
      _
    %p174 = scmp.lt.s32.totalorder %s11, 2
    // Predicated region
    $region29: #{encoder_forward.1} parent=5 // pred_check
      %p175 = pneg %p174
    $region30: #{encoder_forward.1} parent=5 // pred_check_branch
      %177 = sbr.rel (%p175) target = $region32
    $region31: #{encoder_forward.1} parent=5 // pred_region
      // Predicated region
      $region33: #{encoder_forward.1} parent=31 // pred_check
        %p178 = pneg %p31
      $region34: #{encoder_forward.1} parent=31 // pred_check_branch
        %180 = sbr.rel (%p178) target = $region36
      $region35: #{encoder_forward.1} parent=31 // pred_region
        %p181 = scmp.lt.s32.totalorder %s11, 1
        %s182 = scalar_select %p181, %s11, 1
        %s183 = smul.addr %s182, 16
        %s184 = scalar_lea.vmem %s0, %s183
      $region36: #{encoder_forward.1} parent=31 // pred_fallthru
        _
    $region32: #{encoder_forward.1} parent=5 // pred_fallthru
      _
    %p185 = scmp.le.s32.totalorder 1, %s11
    %p186 = scmp.lt.s32.totalorder %s11, 3
    %p187 = pnand %p185, %p186
    %p188 = pneg %p187
    // Predicated region
    $region37: #{encoder_forward.1} parent=5 // pred_check
      _
    $region38: #{encoder_forward.1} parent=5 // pred_check_branch
      %190 = sbr.rel (%p187) target = $region40
    $region39: #{encoder_forward.1} parent=5 // pred_region
      %s191 = ssub.s32 %s11, 1
      %p192 = scmp.lt.s32.totalorder %s16, 1
      %s193 = scalar_select %p192, %s16, 1
      %s194 = smul.addr %s193, 16
      %s195 = scalar_lea.vmem %s0, %s194
      %p196 = pneg %p37
      %p197 = pneg %p34
      %p198 = pneg %p58
      %p199 = pneg %p55
      %p200 = pneg %p79
      %p201 = pneg %p76
      %p202 = pneg %p100
      %p203 = pneg %p97
      %p204 = pneg %p121
      %p205 = pneg %p118
      %p206 = pneg %p147
      %p207 = pneg %p144
      %p208 = scmp.lt.s32.totalorder %s16, 1
      %s209 = scalar_select %p208, %s16, 1
      %s210 = scalar_lea.vmem %s5, %s209
      %p211 = scmp.lt.s32.totalorder %s16, 1
      %s212 = scalar_select %p211, %s16, 1
      %s213 = smul.addr %s212, 16
      %s214 = scalar_lea.vmem %s0, %s213
      %p215 = scmp.lt.s32.totalorder %s16, 1
      %s216 = scalar_select %p215, %s16, 1
      %s217 = scalar_lea.vmem %s5, %s216
      %v218 = vld [vmem:[%s4] sm:$0x1]
      %v219 = vld [vmem:[%s214] sm:$0x1]
      %v220 = vld [vmem:[%s1] sm:$0xff]
      %v221 = vld [vmem:[%s1 + $0x8] sm:$0xff]
      %v222 = vld [vmem:[%s2] sm:$0x1]
      %vm223 = vcmask 130048
      %v225 = vsel %vm223, %v219, 0
      %227 = vmatprep.subr.mxu0 0.0
      %228 = vmatpush1.msra.mxu0 %v220
      %229 = vmatprep.subr.mxu0 0.0
      %230 = vmatpush1.msra.mxu0 %v221
      %231 = vmatprep.subr.mxu0 0.0
      %232 = vmatpush1.msra.mxu0 0.0
      %233 = vmatprep.subr.mxu0 0.0
      %234 = vmatpush1.msra.mxu0 0.0
      %235 = vmatprep.subr.mxu0 0.0
      %236 = vmatpush1.msra.mxu0 0.0
      %237 = vmatprep.subr.mxu0 0.0
      %238 = vmatpush1.msra.mxu0 0.0
      %239 = vmatprep.subr.mxu0 0.0
      %240 = vmatpush1.msra.mxu0 0.0
      %241 = vmatprep.subr.mxu0 0.0
      %242 = vmatpush1.msra.mxu0 0.0
      %243 = vmatprep.subr.mxu0 0.0
      %244 = vmatpush1.msra.mxu0 0.0
      %245 = vmatprep.subr.mxu0 0.0
      %246 = vmatpush1.msra.mxu0 0.0
      %247 = vmatprep.subr.mxu0 0.0
      %248 = vmatpush1.msra.mxu0 0.0
      %249 = vmatprep.subr.mxu0 0.0
      %250 = vmatpush1.msra.mxu0 0.0
      %251 = vmatprep.subr.mxu0 0.0
      %252 = vmatpush1.msra.mxu0 0.0
      %253 = vmatprep.subr.mxu0 0.0
      %254 = vmatpush1.msra.mxu0 0.0
      %255 = vmatprep.subr.mxu0 0.0
      %256 = vmatpush1.msra.mxu0 0.0
      %257 = vmatprep.subr.mxu0 0.0
      %258 = vmatpush1.msra.mxu0 0.0
      %259 = vmatprep.subr.mxu0 0.0
      %260 = vmatpush1.msra.mxu0 0.0
      %261 = vmatprep.subr.mxu0 0.0
      %262 = vmatpush1.msra.mxu0 0.0
      %263 = vmatprep.subr.mxu0 0.0
      %264 = vmatpush1.msra.mxu0 0.0
      %265 = vmatprep.subr.mxu0 0.0
      %266 = vmatpush1.msra.mxu0 0.0
      %267 = vmatprep.subr.mxu0 0.0
      %268 = vmatpush1.msra.mxu0 0.0
      %269 = vmatprep.subr.mxu0 0.0
      %270 = vmatpush1.msra.mxu0 0.0
      %271 = vmatprep.subr.mxu0 0.0
      %272 = vmatpush1.msra.mxu0 0.0
      %273 = vmatprep.subr.mxu0 0.0
      %274 = vmatpush1.msra.mxu0 0.0
      %275 = vmatprep.subr.mxu0 0.0
      %276 = vmatpush1.msra.mxu0 0.0
      %277 = vmatprep.subr.mxu0 0.0
      %278 = vmatpush1.msra.mxu0 0.0
      %279 = vmatprep.subr.mxu0 0.0
      %280 = vmatpush1.msra.mxu0 0.0
      %281 = vmatprep.subr.mxu0 0.0
      %282 = vmatpush1.msra.mxu0 0.0
      %283 = vmatprep.subr.mxu0 0.0
      %284 = vmatpush1.msra.mxu0 0.0
      %285 = vmatprep.subr.mxu0 0.0
      %286 = vmatpush1.msra.mxu0 0.0
      %287 = vmatprep.subr.mxu0 0.0
      %288 = vmatpush1.msra.mxu0 0.0
      %289 = vmatprep.subr.mxu0 0.0
      %290 = vmatpush1.msra.mxu0 0.0
      %291 = vmatprep.mubr.f32.mxu0 0.0
      %292 = vmatmul.mubr.f32.gmra.mrb[0].mxu0 %v225
      %v293 = vpop.f32.mrb[0].mxu0
      %v294 = vadd.f32 %v222, %v293
      %v295 = vpop.f32.mrb[0].mxu0
      %296 = vdwg.mxu0
      %v297 = vmax.f32 %v294, 0.0
      %v298 = vld [vmem:[%s3] sm:$0xff]
      %vm299 = vcmask 64512
      %v301 = vsel %vm299, %v297, 0
      %303 = vmatprep.subr.mxu0 0.0
      %304 = vmatpush1.msra.mxu0 %v298
      %305 = vmatprep.subr.mxu0 0.0
      %306 = vmatpush1.msra.mxu0 0.0
      %307 = vmatprep.subr.mxu0 0.0
      %308 = vmatpush1.msra.mxu0 0.0
      %309 = vmatprep.subr.mxu0 0.0
      %310 = vmatpush1.msra.mxu0 0.0
      %311 = vmatprep.subr.mxu0 0.0
      %312 = vmatpush1.msra.mxu0 0.0
      %313 = vmatprep.subr.mxu0 0.0
      %314 = vmatpush1.msra.mxu0 0.0
      %315 = vmatprep.subr.mxu0 0.0
      %316 = vmatpush1.msra.mxu0 0.0
      %317 = vmatprep.subr.mxu0 0.0
      %318 = vmatpush1.msra.mxu0 0.0
      %319 = vmatprep.subr.mxu0 0.0
      %320 = vmatpush1.msra.mxu0 0.0
      %321 = vmatprep.subr.mxu0 0.0
      %322 = vmatpush1.msra.mxu0 0.0
      %323 = vmatprep.subr.mxu0 0.0
      %324 = vmatpush1.msra.mxu0 0.0
      %325 = vmatprep.subr.mxu0 0.0
      %326 = vmatpush1.msra.mxu0 0.0
      %327 = vmatprep.subr.mxu0 0.0
      %328 = vmatpush1.msra.mxu0 0.0
      %329 = vmatprep.subr.mxu0 0.0
      %330 = vmatpush1.msra.mxu0 0.0
      %331 = vmatprep.subr.mxu0 0.0
      %332 = vmatpush1.msra.mxu0 0.0
      %333 = vmatprep.subr.mxu0 0.0
      %334 = vmatpush1.msra.mxu0 0.0
      %335 = vmatprep.subr.mxu0 0.0
      %336 = vmatpush1.msra.mxu0 0.0
      %337 = vmatprep.subr.mxu0 0.0
      %338 = vmatpush1.msra.mxu0 0.0
      %339 = vmatprep.subr.mxu0 0.0
      %340 = vmatpush1.msra.mxu0 0.0
      %341 = vmatprep.subr.mxu0 0.0
      %342 = vmatpush1.msra.mxu0 0.0
      %343 = vmatprep.subr.mxu0 0.0
      %344 = vmatpush1.msra.mxu0 0.0
      %345 = vmatprep.subr.mxu0 0.0
      %346 = vmatpush1.msra.mxu0 0.0
      %347 = vmatprep.subr.mxu0 0.0
      %348 = vmatpush1.msra.mxu0 0.0
      %349 = vmatprep.subr.mxu0 0.0
      %350 = vmatpush1.msra.mxu0 0.0
      %351 = vmatprep.subr.mxu0 0.0
      %352 = vmatpush1.msra.mxu0 0.0
      %353 = vmatprep.subr.mxu0 0.0
      %354 = vmatpush1.msra.mxu0 0.0
      %355 = vmatprep.subr.mxu0 0.0
      %356 = vmatpush1.msra.mxu0 0.0
      %357 = vmatprep.subr.mxu0 0.0
      %358 = vmatpush1.msra.mxu0 0.0
      %359 = vmatprep.subr.mxu0 0.0
      %360 = vmatpush1.msra.mxu0 0.0
      %361 = vmatprep.subr.mxu0 0.0
      %362 = vmatpush1.msra.mxu0 0.0
      %363 = vmatprep.subr.mxu0 0.0
      %364 = vmatpush1.msra.mxu0 0.0
      %365 = vmatprep.subr.mxu0 0.0
      %366 = vmatpush1.msra.mxu0 0.0
      %367 = vmatprep.mubr.f32.mxu0 0.0
      %368 = vmatmul.mubr.f32.gmra.mrb[0].mxu0 %v301
      %v369 = vpop.f32.mrb[0].mxu0
      %v370 = vadd.f32 0.0, %v369
      %v371 = vpop.f32.mrb[0].mxu0
      %372 = vdwg.mxu0
      %v373 = vadd.f32 %v218, %v370
      %s374 = scalar_lea.vmem %s214, 1
      %v375 = vld [vmem:[%s374] sm:$0x1]
      %v377 = vsel %vm223, %v375, 0
      %379 = vmatprep.subr.mxu0 0.0
      %380 = vmatpush1.msra.mxu0 %v220
      %381 = vmatprep.subr.mxu0 0.0
      %382 = vmatpush1.msra.mxu0 %v221
      %383 = vmatprep.subr.mxu0 0.0
      %384 = vmatpush1.msra.mxu0 0.0
      %385 = vmatprep.subr.mxu0 0.0
      %386 = vmatpush1.msra.mxu0 0.0
      %387 = vmatprep.subr.mxu0 0.0
      %388 = vmatpush1.msra.mxu0 0.0
      %389 = vmatprep.subr.mxu0 0.0
      %390 = vmatpush1.msra.mxu0 0.0
      %391 = vmatprep.subr.mxu0 0.0
      %392 = vmatpush1.msra.mxu0 0.0
      %393 = vmatprep.subr.mxu0 0.0
      %394 = vmatpush1.msra.mxu0 0.0
      %395 = vmatprep.subr.mxu0 0.0
      %396 = vmatpush1.msra.mxu0 0.0
      %397 = vmatprep.subr.mxu0 0.0
      %398 = vmatpush1.msra.mxu0 0.0
      %399 = vmatprep.subr.mxu0 0.0
      %400 = vmatpush1.msra.mxu0 0.0
      %401 = vmatprep.subr.mxu0 0.0
      %402 = vmatpush1.msra.mxu0 0.0
      %403 = vmatprep.subr.mxu0 0.0
      %404 = vmatpush1.msra.mxu0 0.0
      %405 = vmatprep.subr.mxu0 0.0
      %406 = vmatpush1.msra.mxu0 0.0
      %407 = vmatprep.subr.mxu0 0.0
      %408 = vmatpush1.msra.mxu0 0.0
      %409 = vmatprep.subr.mxu0 0.0
      %410 = vmatpush1.msra.mxu0 0.0
      %411 = vmatprep.subr.mxu0 0.0
      %412 = vmatpush1.msra.mxu0 0.0
      %413 = vmatprep.subr.mxu0 0.0
      %414 = vmatpush1.msra.mxu0 0.0
      %415 = vmatprep.subr.mxu0 0.0
      %416 = vmatpush1.msra.mxu0 0.0
      %417 = vmatprep.subr.mxu0 0.0
      %418 = vmatpush1.msra.mxu0 0.0
      %419 = vmatprep.subr.mxu0 0.0
      %420 = vmatpush1.msra.mxu0 0.0
      %421 = vmatprep.subr.mxu0 0.0
      %422 = vmatpush1.msra.mxu0 0.0
      %423 = vmatprep.subr.mxu0 0.0
      %424 = vmatpush1.msra.mxu0 0.0
      %425 = vmatprep.subr.mxu0 0.0
      %426 = vmatpush1.msra.mxu0 0.0
      %427 = vmatprep.subr.mxu0 0.0
      %428 = vmatpush1.msra.mxu0 0.0
      %429 = vmatprep.subr.mxu0 0.0
      %430 = vmatpush1.msra.mxu0 0.0
      %431 = vmatprep.subr.mxu0 0.0
      %432 = vmatpush1.msra.mxu0 0.0
      %433 = vmatprep.subr.mxu0 0.0
      %434 = vmatpush1.msra.mxu0 0.0
      %435 = vmatprep.subr.mxu0 0.0
      %436 = vmatpush1.msra.mxu0 0.0
      %437 = vmatprep.subr.mxu0 0.0
      %438 = vmatpush1.msra.mxu0 0.0
      %439 = vmatprep.subr.mxu0 0.0
      %440 = vmatpush1.msra.mxu0 0.0
      %441 = vmatprep.subr.mxu0 0.0
      %442 = vmatpush1.msra.mxu0 0.0
      %443 = vmatprep.mubr.f32.mxu0 0.0
      %444 = vmatmul.mubr.f32.gmra.mrb[0].mxu0 %v377
      %v445 = vpop.f32.mrb[0].mxu0
      %v446 = vadd.f32 %v222, %v445
      %v447 = vpop.f32.mrb[0].mxu0
      %448 = vdwg.mxu0
      %v449 = vmax.f32 %v446, 0.0
      %s450 = scalar_lea.vmem %s3, 8
      %v451 = vld [vmem:[%s450] sm:$0xff]
      %v453 = vsel %vm299, %v449, 0
      %455 = vmatprep.subr.mxu0 0.0
      %456 = vmatpush1.msra.mxu0 %v451
      %457 = vmatprep.subr.mxu0 0.0
      %458 = vmatpush1.msra.mxu0 0.0
      %459 = vmatprep.subr.mxu0 0.0
      %460 = vmatpush1.msra.mxu0 0.0
      %461 = vmatprep.subr.mxu0 0.0
      %462 = vmatpush1.msra.mxu0 0.0
      %463 = vmatprep.subr.mxu0 0.0
      %464 = vmatpush1.msra.mxu0 0.0
      %465 = vmatprep.subr.mxu0 0.0
      %466 = vmatpush1.msra.mxu0 0.0
      %467 = vmatprep.subr.mxu0 0.0
      %468 = vmatpush1.msra.mxu0 0.0
      %469 = vmatprep.subr.mxu0 0.0
      %470 = vmatpush1.msra.mxu0 0.0
      %471 = vmatprep.subr.mxu0 0.0
      %472 = vmatpush1.msra.mxu0 0.0
      %473 = vmatprep.subr.mxu0 0.0
      %474 = vmatpush1.msra.mxu0 0.0
      %475 = vmatprep.subr.mxu0 0.0
      %476 = vmatpush1.msra.mxu0 0.0
      %477 = vmatprep.subr.mxu0 0.0
      %478 = vmatpush1.msra.mxu0 0.0
      %479 = vmatprep.subr.mxu0 0.0
      %480 = vmatpush1.msra.mxu0 0.0
      %481 = vmatprep.subr.mxu0 0.0
      %482 = vmatpush1.msra.mxu0 0.0
      %483 = vmatprep.subr.mxu0 0.0
      %484 = vmatpush1.msra.mxu0 0.0
      %485 = vmatprep.subr.mxu0 0.0
      %486 = vmatpush1.msra.mxu0 0.0
      %487 = vmatprep.subr.mxu0 0.0
      %488 = vmatpush1.msra.mxu0 0.0
      %489 = vmatprep.subr.mxu0 0.0
      %490 = vmatpush1.msra.mxu0 0.0
      %491 = vmatprep.subr.mxu0 0.0
      %492 = vmatpush1.msra.mxu0 0.0
      %493 = vmatprep.subr.mxu0 0.0
      %494 = vmatpush1.msra.mxu0 0.0
      %495 = vmatprep.subr.mxu0 0.0
      %496 = vmatpush1.msra.mxu0 0.0
      %497 = vmatprep.subr.mxu0 0.0
      %498 = vmatpush1.msra.mxu0 0.0
      %499 = vmatprep.subr.mxu0 0.0
      %500 = vmatpush1.msra.mxu0 0.0
      %501 = vmatprep.subr.mxu0 0.0
      %502 = vmatpush1.msra.mxu0 0.0
      %503 = vmatprep.subr.mxu0 0.0
      %504 = vmatpush1.msra.mxu0 0.0
      %505 = vmatprep.subr.mxu0 0.0
      %506 = vmatpush1.msra.mxu0 0.0
      %507 = vmatprep.subr.mxu0 0.0
      %508 = vmatpush1.msra.mxu0 0.0
      %509 = vmatprep.subr.mxu0 0.0
      %510 = vmatpush1.msra.mxu0 0.0
      %511 = vmatprep.subr.mxu0 0.0
      %512 = vmatpush1.msra.mxu0 0.0
      %513 = vmatprep.subr.mxu0 0.0
      %514 = vmatpush1.msra.mxu0 0.0
      %515 = vmatprep.subr.mxu0 0.0
      %516 = vmatpush1.msra.mxu0 0.0
      %517 = vmatprep.subr.mxu0 0.0
      %518 = vmatpush1.msra.mxu0 0.0
      %519 = vmatprep.mubr.f32.mxu0 0.0
      %520 = vmatmul.mubr.f32.gmra.mrb[0].mxu0 %v453
      %v521 = vpop.f32.mrb[0].mxu0
      %v522 = vadd.f32 0.0, %v521
      %v523 = vpop.f32.mrb[0].mxu0
      %524 = vdwg.mxu0
      %v525 = vadd.f32 %v373, %v522
      %s526 = scalar_lea.vmem %s214, 2
      %v527 = vld [vmem:[%s526] sm:$0x1]
      %v529 = vsel %vm223, %v527, 0
      %531 = vmatprep.subr.mxu0 0.0
      %532 = vmatpush1.msra.mxu0 %v220
      %533 = vmatprep.subr.mxu0 0.0
      %534 = vmatpush1.msra.mxu0 %v221
      %535 = vmatprep.subr.mxu0 0.0
      %536 = vmatpush1.msra.mxu0 0.0
      %537 = vmatprep.subr.mxu0 0.0
      %538 = vmatpush1.msra.mxu0 0.0
      %539 = vmatprep.subr.mxu0 0.0
      %540 = vmatpush1.msra.mxu0 0.0
      %541 = vmatprep.subr.mxu0 0.0
      %542 = vmatpush1.msra.mxu0 0.0
      %543 = vmatprep.subr.mxu0 0.0
      %544 = vmatpush1.msra.mxu0 0.0
      %545 = vmatprep.subr.mxu0 0.0
      %546 = vmatpush1.msra.mxu0 0.0
      %547 = vmatprep.subr.mxu0 0.0
      %548 = vmatpush1.msra.mxu0 0.0
      %549 = vmatprep.subr.mxu0 0.0
      %550 = vmatpush1.msra.mxu0 0.0
      %551 = vmatprep.subr.mxu0 0.0
      %552 = vmatpush1.msra.mxu0 0.0
      %553 = vmatprep.subr.mxu0 0.0
      %554 = vmatpush1.msra.mxu0 0.0
      %555 = vmatprep.subr.mxu0 0.0
      %556 = vmatpush1.msra.mxu0 0.0
      %557 = vmatprep.subr.mxu0 0.0
      %558 = vmatpush1.msra.mxu0 0.0
      %559 = vmatprep.subr.mxu0 0.0
      %560 = vmatpush1.msra.mxu0 0.0
      %561 = vmatprep.subr.mxu0 0.0
      %562 = vmatpush1.msra.mxu0 0.0
      %563 = vmatprep.subr.mxu0 0.0
      %564 = vmatpush1.msra.mxu0 0.0
      %565 = vmatprep.subr.mxu0 0.0
      %566 = vmatpush1.msra.mxu0 0.0
      %567 = vmatprep.subr.mxu0 0.0
      %568 = vmatpush1.msra.mxu0 0.0
      %569 = vmatprep.subr.mxu0 0.0
      %570 = vmatpush1.msra.mxu0 0.0
      %571 = vmatprep.subr.mxu0 0.0
      %572 = vmatpush1.msra.mxu0 0.0
      %573 = vmatprep.subr.mxu0 0.0
      %574 = vmatpush1.msra.mxu0 0.0
      %575 = vmatprep.subr.mxu0 0.0
      %576 = vmatpush1.msra.mxu0 0.0
      %577 = vmatprep.subr.mxu0 0.0
      %578 = vmatpush1.msra.mxu0 0.0
      %579 = vmatprep.subr.mxu0 0.0
      %580 = vmatpush1.msra.mxu0 0.0
      %581 = vmatprep.subr.mxu0 0.0
      %582 = vmatpush1.msra.mxu0 0.0
      %583 = vmatprep.subr.mxu0 0.0
      %584 = vmatpush1.msra.mxu0 0.0
      %585 = vmatprep.subr.mxu0 0.0
      %586 = vmatpush1.msra.mxu0 0.0
      %587 = vmatprep.subr.mxu0 0.0
      %588 = vmatpush1.msra.mxu0 0.0
      %589 = vmatprep.subr.mxu0 0.0
      %590 = vmatpush1.msra.mxu0 0.0
      %591 = vmatprep.subr.mxu0 0.0
      %592 = vmatpush1.msra.mxu0 0.0
      %593 = vmatprep.subr.mxu0 0.0
      %594 = vmatpush1.msra.mxu0 0.0
      %595 = vmatprep.mubr.f32.mxu0 0.0
      %596 = vmatmul.mubr.f32.gmra.mrb[0].mxu0 %v529
      %v597 = vpop.f32.mrb[0].mxu0
      %v598 = vadd.f32 %v222, %v597
      %v599 = vpop.f32.mrb[0].mxu0
      %600 = vdwg.mxu0
      %v601 = vmax.f32 %v598, 0.0
      %s602 = scalar_lea.vmem %s3, 16
      %v603 = vld [vmem:[%s602] sm:$0xff]
      %v605 = vsel %vm299, %v601, 0
      %607 = vmatprep.subr.mxu0 0.0
      %608 = vmatpush1.msra.mxu0 %v603
      %609 = vmatprep.subr.mxu0 0.0
      %610 = vmatpush1.msra.mxu0 0.0
      %611 = vmatprep.subr.mxu0 0.0
      %612 = vmatpush1.msra.mxu0 0.0
      %613 = vmatprep.subr.mxu0 0.0
      %614 = vmatpush1.msra.mxu0 0.0
      %615 = vmatprep.subr.mxu0 0.0
      %616 = vmatpush1.msra.mxu0 0.0
      %617 = vmatprep.subr.mxu0 0.0
      %618 = vmatpush1.msra.mxu0 0.0
      %619 = vmatprep.subr.mxu0 0.0
      %620 = vmatpush1.msra.mxu0 0.0
      %621 = vmatprep.subr.mxu0 0.0
      %622 = vmatpush1.msra.mxu0 0.0
      %623 = vmatprep.subr.mxu0 0.0
      %624 = vmatpush1.msra.mxu0 0.0
      %625 = vmatprep.subr.mxu0 0.0
      %626 = vmatpush1.msra.mxu0 0.0
      %627 = vmatprep.subr.mxu0 0.0
      %628 = vmatpush1.msra.mxu0 0.0
      %629 = vmatprep.subr.mxu0 0.0
      %630 = vmatpush1.msra.mxu0 0.0
      %631 = vmatprep.subr.mxu0 0.0
      %632 = vmatpush1.msra.mxu0 0.0
      %633 = vmatprep.subr.mxu0 0.0
      %634 = vmatpush1.msra.mxu0 0.0
      %635 = vmatprep.subr.mxu0 0.0
      %636 = vmatpush1.msra.mxu0 0.0
      %637 = vmatprep.subr.mxu0 0.0
      %638 = vmatpush1.msra.mxu0 0.0
      %639 = vmatprep.subr.mxu0 0.0
      %640 = vmatpush1.msra.mxu0 0.0
      %641 = vmatprep.subr.mxu0 0.0
      %642 = vmatpush1.msra.mxu0 0.0
      %643 = vmatprep.subr.mxu0 0.0
      %644 = vmatpush1.msra.mxu0 0.0
      %645 = vmatprep.subr.mxu0 0.0
      %646 = vmatpush1.msra.mxu0 0.0
      %647 = vmatprep.subr.mxu0 0.0
      %648 = vmatpush1.msra.mxu0 0.0
      %649 = vmatprep.subr.mxu0 0.0
      %650 = vmatpush1.msra.mxu0 0.0
      %651 = vmatprep.subr.mxu0 0.0
      %652 = vmatpush1.msra.mxu0 0.0
      %653 = vmatprep.subr.mxu0 0.0
      %654 = vmatpush1.msra.mxu0 0.0
      %655 = vmatprep.subr.mxu0 0.0
      %656 = vmatpush1.msra.mxu0 0.0
      %657 = vmatprep.subr.mxu0 0.0
      %658 = vmatpush1.msra.mxu0 0.0
      %659 = vmatprep.subr.mxu0 0.0
      %660 = vmatpush1.msra.mxu0 0.0
      %661 = vmatprep.subr.mxu0 0.0
      %662 = vmatpush1.msra.mxu0 0.0
      %663 = vmatprep.subr.mxu0 0.0
      %664 = vmatpush1.msra.mxu0 0.0
      %665 = vmatprep.subr.mxu0 0.0
      %666 = vmatpush1.msra.mxu0 0.0
      %667 = vmatprep.subr.mxu0 0.0
      %668 = vmatpush1.msra.mxu0 0.0
      %669 = vmatprep.subr.mxu0 0.0
      %670 = vmatpush1.msra.mxu0 0.0
      %671 = vmatprep.mubr.f32.mxu0 0.0
      %672 = vmatmul.mubr.f32.gmra.mrb[0].mxu0 %v605
      %v673 = vpop.f32.mrb[0].mxu0
      %v674 = vadd.f32 0.0, %v673
      %v675 = vpop.f32.mrb[0].mxu0
      %676 = vdwg.mxu0
      %v677 = vadd.f32 %v525, %v674
      %s678 = scalar_lea.vmem %s214, 3
      %v679 = vld [vmem:[%s678] sm:$0x1]
      %v681 = vsel %vm223, %v679, 0
      %683 = vmatprep.subr.mxu0 0.0
      %684 = vmatpush1.msra.mxu0 %v220
      %685 = vmatprep.subr.mxu0 0.0
      %686 = vmatpush1.msra.mxu0 %v221
      %687 = vmatprep.subr.mxu0 0.0
      %688 = vmatpush1.msra.mxu0 0.0
      %689 = vmatprep.subr.mxu0 0.0
      %690 = vmatpush1.msra.mxu0 0.0
      %691 = vmatprep.subr.mxu0 0.0
      %692 = vmatpush1.msra.mxu0 0.0
      %693 = vmatprep.subr.mxu0 0.0
      %694 = vmatpush1.msra.mxu0 0.0
      %695 = vmatprep.subr.mxu0 0.0
      %696 = vmatpush1.msra.mxu0 0.0
      %697 = vmatprep.subr.mxu0 0.0
      %698 = vmatpush1.msra.mxu0 0.0
      %699 = vmatprep.subr.mxu0 0.0
      %700 = vmatpush1.msra.mxu0 0.0
      %701 = vmatprep.subr.mxu0 0.0
      %702 = vmatpush1.msra.mxu0 0.0
      %703 = vmatprep.subr.mxu0 0.0
      %704 = vmatpush1.msra.mxu0 0.0
      %705 = vmatprep.subr.mxu0 0.0
      %706 = vmatpush1.msra.mxu0 0.0
      %707 = vmatprep.subr.mxu0 0.0
      %708 = vmatpush1.msra.mxu0 0.0
      %709 = vmatprep.subr.mxu0 0.0
      %710 = vmatpush1.msra.mxu0 0.0
      %711 = vmatprep.subr.mxu0 0.0
      %712 = vmatpush1.msra.mxu0 0.0
      %713 = vmatprep.subr.mxu0 0.0
      %714 = vmatpush1.msra.mxu0 0.0
      %715 = vmatprep.subr.mxu0 0.0
      %716 = vmatpush1.msra.mxu0 0.0
      %717 = vmatprep.subr.mxu0 0.0
      %718 = vmatpush1.msra.mxu0 0.0
      %719 = vmatprep.subr.mxu0 0.0
      %720 = vmatpush1.msra.mxu0 0.0
      %721 = vmatprep.subr.mxu0 0.0
      %722 = vmatpush1.msra.mxu0 0.0
      %723 = vmatprep.subr.mxu0 0.0
      %724 = vmatpush1.msra.mxu0 0.0
      %725 = vmatprep.subr.mxu0 0.0
      %726 = vmatpush1.msra.mxu0 0.0
      %727 = vmatprep.subr.mxu0 0.0
      %728 = vmatpush1.msra.mxu0 0.0
      %729 = vmatprep.subr.mxu0 0.0
      %730 = vmatpush1.msra.mxu0 0.0
      %731 = vmatprep.subr.mxu0 0.0
      %732 = vmatpush1.msra.mxu0 0.0
      %733 = vmatprep.subr.mxu0 0.0
      %734 = vmatpush1.msra.mxu0 0.0
      %735 = vmatprep.subr.mxu0 0.0
      %736 = vmatpush1.msra.mxu0 0.0
      %737 = vmatprep.subr.mxu0 0.0
      %738 = vmatpush1.msra.mxu0 0.0
      %739 = vmatprep.subr.mxu0 0.0
      %740 = vmatpush1.msra.mxu0 0.0
      %741 = vmatprep.subr.mxu0 0.0
      %742 = vmatpush1.msra.mxu0 0.0
      %743 = vmatprep.subr.mxu0 0.0
      %744 = vmatpush1.msra.mxu0 0.0
      %745 = vmatprep.subr.mxu0 0.0
      %746 = vmatpush1.msra.mxu0 0.0
      %747 = vmatprep.mubr.f32.mxu0 0.0
      %748 = vmatmul.mubr.f32.gmra.mrb[0].mxu0 %v681
      %v749 = vpop.f32.mrb[0].mxu0
      %v750 = vadd.f32 %v222, %v749
      %v751 = vpop.f32.mrb[0].mxu0
      %752 = vdwg.mxu0
      %v753 = vmax.f32 %v750, 0.0
      %s754 = scalar_lea.vmem %s3, 24
      %v755 = vld [vmem:[%s754] sm:$0xff]
      %v757 = vsel %vm299, %v753, 0
      %759 = vmatprep.subr.mxu0 0.0
      %760 = vmatpush1.msra.mxu0 %v755
      %761 = vmatprep.subr.mxu0 0.0
      %762 = vmatpush1.msra.mxu0 0.0
      %763 = vmatprep.subr.mxu0 0.0
      %764 = vmatpush1.msra.mxu0 0.0
      %765 = vmatprep.subr.mxu0 0.0
      %766 = vmatpush1.msra.mxu0 0.0
      %767 = vmatprep.subr.mxu0 0.0
      %768 = vmatpush1.msra.mxu0 0.0
      %769 = vmatprep.subr.mxu0 0.0
      %770 = vmatpush1.msra.mxu0 0.0
      %771 = vmatprep.subr.mxu0 0.0
      %772 = vmatpush1.msra.mxu0 0.0
      %773 = vmatprep.subr.mxu0 0.0
      %774 = vmatpush1.msra.mxu0 0.0
      %775 = vmatprep.subr.mxu0 0.0
      %776 = vmatpush1.msra.mxu0 0.0
      %777 = vmatprep.subr.mxu0 0.0
      %778 = vmatpush1.msra.mxu0 0.0
      %779 = vmatprep.subr.mxu0 0.0
      %780 = vmatpush1.msra.mxu0 0.0
      %781 = vmatprep.subr.mxu0 0.0
      %782 = vmatpush1.msra.mxu0 0.0
      %783 = vmatprep.subr.mxu0 0.0
      %784 = vmatpush1.msra.mxu0 0.0
      %785 = vmatprep.subr.mxu0 0.0
      %786 = vmatpush1.msra.mxu0 0.0
      %787 = vmatprep.subr.mxu0 0.0
      %788 = vmatpush1.msra.mxu0 0.0
      %789 = vmatprep.subr.mxu0 0.0
      %790 = vmatpush1.msra.mxu0 0.0
      %791 = vmatprep.subr.mxu0 0.0
      %792 = vmatpush1.msra.mxu0 0.0
      %793 = vmatprep.subr.mxu0 0.0
      %794 = vmatpush1.msra.mxu0 0.0
      %795 = vmatprep.subr.mxu0 0.0
      %796 = vmatpush1.msra.mxu0 0.0
      %797 = vmatprep.subr.mxu0 0.0
      %798 = vmatpush1.msra.mxu0 0.0
      %799 = vmatprep.subr.mxu0 0.0
      %800 = vmatpush1.msra.mxu0 0.0
      %801 = vmatprep.subr.mxu0 0.0
      %802 = vmatpush1.msra.mxu0 0.0
      %803 = vmatprep.subr.mxu0 0.0
      %804 = vmatpush1.msra.mxu0 0.0
      %805 = vmatprep.subr.mxu0 0.0
      %806 = vmatpush1.msra.mxu0 0.0
      %807 = vmatprep.subr.mxu0 0.0
      %808 = vmatpush1.msra.mxu0 0.0
      %809 = vmatprep.subr.mxu0 0.0
      %810 = vmatpush1.msra.mxu0 0.0
      %811 = vmatprep.subr.mxu0 0.0
      %812 = vmatpush1.msra.mxu0 0.0
      %813 = vmatprep.subr.mxu0 0.0
      %814 = vmatpush1.msra.mxu0 0.0
      %815 = vmatprep.subr.mxu0 0.0
      %816 = vmatpush1.msra.mxu0 0.0
      %817 = vmatprep.subr.mxu0 0.0
      %818 = vmatpush1.msra.mxu0 0.0
      %819 = vmatprep.subr.mxu0 0.0
      %820 = vmatpush1.msra.mxu0 0.0
      %821 = vmatprep.subr.mxu0 0.0
      %822 = vmatpush1.msra.mxu0 0.0
      %823 = vmatprep.mubr.f32.mxu0 0.0
      %824 = vmatmul.mubr.f32.gmra.mrb[0].mxu0 %v757
      %v825 = vpop.f32.mrb[0].mxu0
      %v826 = vadd.f32 0.0, %v825
      %v827 = vpop.f32.mrb[0].mxu0
      %828 = vdwg.mxu0
      %v829 = vadd.f32 %v677, %v826
      %s830 = scalar_lea.vmem %s214, 4
      %v831 = vld [vmem:[%s830] sm:$0x1]
      %v833 = vsel %vm223, %v831, 0
      %835 = vmatprep.subr.mxu0 0.0
      %836 = vmatpush1.msra.mxu0 %v220
      %837 = vmatprep.subr.mxu0 0.0
      %838 = vmatpush1.msra.mxu0 %v221
      %839 = vmatprep.subr.mxu0 0.0
      %840 = vmatpush1.msra.mxu0 0.0
      %841 = vmatprep.subr.mxu0 0.0
      %842 = vmatpush1.msra.mxu0 0.0
      %843 = vmatprep.subr.mxu0 0.0
      %844 = vmatpush1.msra.mxu0 0.0
      %845 = vmatprep.subr.mxu0 0.0
      %846 = vmatpush1.msra.mxu0 0.0
      %847 = vmatprep.subr.mxu0 0.0
      %848 = vmatpush1.msra.mxu0 0.0
      %849 = vmatprep.subr.mxu0 0.0
      %850 = vmatpush1.msra.mxu0 0.0
      %851 = vmatprep.subr.mxu0 0.0
      %852 = vmatpush1.msra.mxu0 0.0
      %853 = vmatprep.subr.mxu0 0.0
      %854 = vmatpush1.msra.mxu0 0.0
      %855 = vmatprep.subr.mxu0 0.0
      %856 = vmatpush1.msra.mxu0 0.0
      %857 = vmatprep.subr.mxu0 0.0
      %858 = vmatpush1.msra.mxu0 0.0
      %859 = vmatprep.subr.mxu0 0.0
      %860 = vmatpush1.msra.mxu0 0.0
      %861 = vmatprep.subr.mxu0 0.0
      %862 = vmatpush1.msra.mxu0 0.0
      %863 = vmatprep.subr.mxu0 0.0
      %864 = vmatpush1.msra.mxu0 0.0
      %865 = vmatprep.subr.mxu0 0.0
      %866 = vmatpush1.msra.mxu0 0.0
      %867 = vmatprep.subr.mxu0 0.0
      %868 = vmatpush1.msra.mxu0 0.0
      %869 = vmatprep.subr.mxu0 0.0
      %870 = vmatpush1.msra.mxu0 0.0
      %871 = vmatprep.subr.mxu0 0.0
      %872 = vmatpush1.msra.mxu0 0.0
      %873 = vmatprep.subr.mxu0 0.0
      %874 = vmatpush1.msra.mxu0 0.0
      %875 = vmatprep.subr.mxu0 0.0
      %876 = vmatpush1.msra.mxu0 0.0
      %877 = vmatprep.subr.mxu0 0.0
      %878 = vmatpush1.msra.mxu0 0.0
      %879 = vmatprep.subr.mxu0 0.0
      %880 = vmatpush1.msra.mxu0 0.0
      %881 = vmatprep.subr.mxu0 0.0
      %882 = vmatpush1.msra.mxu0 0.0
      %883 = vmatprep.subr.mxu0 0.0
      %884 = vmatpush1.msra.mxu0 0.0
      %885 = vmatprep.subr.mxu0 0.0
      %886 = vmatpush1.msra.mxu0 0.0
      %887 = vmatprep.subr.mxu0 0.0
      %888 = vmatpush1.msra.mxu0 0.0
      %889 = vmatprep.subr.mxu0 0.0
      %890 = vmatpush1.msra.mxu0 0.0
      %891 = vmatprep.subr.mxu0 0.0
      %892 = vmatpush1.msra.mxu0 0.0
      %893 = vmatprep.subr.mxu0 0.0
      %894 = vmatpush1.msra.mxu0 0.0
      %895 = vmatprep.subr.mxu0 0.0
      %896 = vmatpush1.msra.mxu0 0.0
      %897 = vmatprep.subr.mxu0 0.0
      %898 = vmatpush1.msra.mxu0 0.0
      %899 = vmatprep.mubr.f32.mxu0 0.0
      %900 = vmatmul.mubr.f32.gmra.mrb[0].mxu0 %v833
      %v901 = vpop.f32.mrb[0].mxu0
      %v902 = vadd.f32 %v222, %v901
      %v903 = vpop.f32.mrb[0].mxu0
      %904 = vdwg.mxu0
      %v905 = vmax.f32 %v902, 0.0
      %s906 = scalar_lea.vmem %s3, 32
      %v907 = vld [vmem:[%s906] sm:$0xff]
      %v909 = vsel %vm299, %v905, 0
      %911 = vmatprep.subr.mxu0 0.0
      %912 = vmatpush1.msra.mxu0 %v907
      %913 = vmatprep.subr.mxu0 0.0
      %914 = vmatpush1.msra.mxu0 0.0
      %915 = vmatprep.subr.mxu0 0.0
      %916 = vmatpush1.msra.mxu0 0.0
      %917 = vmatprep.subr.mxu0 0.0
      %918 = vmatpush1.msra.mxu0 0.0
      %919 = vmatprep.subr.mxu0 0.0
      %920 = vmatpush1.msra.mxu0 0.0
      %921 = vmatprep.subr.mxu0 0.0
      %922 = vmatpush1.msra.mxu0 0.0
      %923 = vmatprep.subr.mxu0 0.0
      %924 = vmatpush1.msra.mxu0 0.0
      %925 = vmatprep.subr.mxu0 0.0
      %926 = vmatpush1.msra.mxu0 0.0
      %927 = vmatprep.subr.mxu0 0.0
      %928 = vmatpush1.msra.mxu0 0.0
      %929 = vmatprep.subr.mxu0 0.0
      %930 = vmatpush1.msra.mxu0 0.0
      %931 = vmatprep.subr.mxu0 0.0
      %932 = vmatpush1.msra.mxu0 0.0
      %933 = vmatprep.subr.mxu0 0.0
      %934 = vmatpush1.msra.mxu0 0.0
      %935 = vmatprep.subr.mxu0 0.0
      %936 = vmatpush1.msra.mxu0 0.0
      %937 = vmatprep.subr.mxu0 0.0
      %938 = vmatpush1.msra.mxu0 0.0
      %939 = vmatprep.subr.mxu0 0.0
      %940 = vmatpush1.msra.mxu0 0.0
      %941 = vmatprep.subr.mxu0 0.0
      %942 = vmatpush1.msra.mxu0 0.0
      %943 = vmatprep.subr.mxu0 0.0
      %944 = vmatpush1.msra.mxu0 0.0
      %945 = vmatprep.subr.mxu0 0.0
      %946 = vmatpush1.msra.mxu0 0.0
      %947 = vmatprep.subr.mxu0 0.0
      %948 = vmatpush1.msra.mxu0 0.0
      %949 = vmatprep.subr.mxu0 0.0
      %950 = vmatpush1.msra.mxu0 0.0
      %951 = vmatprep.subr.mxu0 0.0
      %952 = vmatpush1.msra.mxu0 0.0
      %953 = vmatprep.subr.mxu0 0.0
      %954 = vmatpush1.msra.mxu0 0.0
      %955 = vmatprep.subr.mxu0 0.0
      %956 = vmatpush1.msra.mxu0 0.0
      %957 = vmatprep.subr.mxu0 0.0
      %958 = vmatpush1.msra.mxu0 0.0
      %959 = vmatprep.subr.mxu0 0.0
      %960 = vmatpush1.msra.mxu0 0.0
      %961 = vmatprep.subr.mxu0 0.0
      %962 = vmatpush1.msra.mxu0 0.0
      %963 = vmatprep.subr.mxu0 0.0
      %964 = vmatpush1.msra.mxu0 0.0
      %965 = vmatprep.subr.mxu0 0.0
      %966 = vmatpush1.msra.mxu0 0.0
      %967 = vmatprep.subr.mxu0 0.0
      %968 = vmatpush1.msra.mxu0 0.0
      %969 = vmatprep.subr.mxu0 0.0
      %970 = vmatpush1.msra.mxu0 0.0
      %971 = vmatprep.subr.mxu0 0.0
      %972 = vmatpush1.msra.mxu0 0.0
      %973 = vmatprep.subr.mxu0 0.0
      %974 = vmatpush1.msra.mxu0 0.0
      %975 = vmatprep.mubr.f32.mxu0 0.0
      %976 = vmatmul.mubr.f32.gmra.mrb[0].mxu0 %v909
      %v977 = vpop.f32.mrb[0].mxu0
      %v978 = vadd.f32 0.0, %v977
      %v979 = vpop.f32.mrb[0].mxu0
      %980 = vdwg.mxu0
      %v981 = vadd.f32 %v829, %v978
      %s982 = scalar_lea.vmem %s214, 5
      %v983 = vld [vmem:[%s982] sm:$0x1]
      %v985 = vsel %vm223, %v983, 0
      %987 = vmatprep.subr.mxu0 0.0
      %988 = vmatpush1.msra.mxu0 %v220
      %989 = vmatprep.subr.mxu0 0.0
      %990 = vmatpush1.msra.mxu0 %v221
      %991 = vmatprep.subr.mxu0 0.0
      %992 = vmatpush1.msra.mxu0 0.0
      %993 = vmatprep.subr.mxu0 0.0
      %994 = vmatpush1.msra.mxu0 0.0
      %995 = vmatprep.subr.mxu0 0.0
      %996 = vmatpush1.msra.mxu0 0.0
      %997 = vmatprep.subr.mxu0 0.0
      %998 = vmatpush1.msra.mxu0 0.0
      %999 = vmatprep.subr.mxu0 0.0
      %1000 = vmatpush1.msra.mxu0 0.0
      %1001 = vmatprep.subr.mxu0 0.0
      %1002 = vmatpush1.msra.mxu0 0.0
      %1003 = vmatprep.subr.mxu0 0.0
      %1004 = vmatpush1.msra.mxu0 0.0
      %1005 = vmatprep.subr.mxu0 0.0
      %1006 = vmatpush1.msra.mxu0 0.0
      %1007 = vmatprep.subr.mxu0 0.0
      %1008 = vmatpush1.msra.mxu0 0.0
      %1009 = vmatprep.subr.mxu0 0.0
      %1010 = vmatpush1.msra.mxu0 0.0
      %1011 = vmatprep.subr.mxu0 0.0
      %1012 = vmatpush1.msra.mxu0 0.0
      %1013 = vmatprep.subr.mxu0 0.0
      %1014 = vmatpush1.msra.mxu0 0.0
      %1015 = vmatprep.subr.mxu0 0.0
      %1016 = vmatpush1.msra.mxu0 0.0
      %1017 = vmatprep.subr.mxu0 0.0
      %1018 = vmatpush1.msra.mxu0 0.0
      %1019 = vmatprep.subr.mxu0 0.0
      %1020 = vmatpush1.msra.mxu0 0.0
      %1021 = vmatprep.subr.mxu0 0.0
      %1022 = vmatpush1.msra.mxu0 0.0
      %1023 = vmatprep.subr.mxu0 0.0
      %1024 = vmatpush1.msra.mxu0 0.0
      %1025 = vmatprep.subr.mxu0 0.0
      %1026 = vmatpush1.msra.mxu0 0.0
      %1027 = vmatprep.subr.mxu0 0.0
      %1028 = vmatpush1.msra.mxu0 0.0
      %1029 = vmatprep.subr.mxu0 0.0
      %1030 = vmatpush1.msra.mxu0 0.0
      %1031 = vmatprep.subr.mxu0 0.0
      %1032 = vmatpush1.msra.mxu0 0.0
      %1033 = vmatprep.subr.mxu0 0.0
      %1034 = vmatpush1.msra.mxu0 0.0
      %1035 = vmatprep.subr.mxu0 0.0
      %1036 = vmatpush1.msra.mxu0 0.0
      %1037 = vmatprep.subr.mxu0 0.0
      %1038 = vmatpush1.msra.mxu0 0.0
      %1039 = vmatprep.subr.mxu0 0.0
      %1040 = vmatpush1.msra.mxu0 0.0
      %1041 = vmatprep.subr.mxu0 0.0
      %1042 = vmatpush1.msra.mxu0 0.0
      %1043 = vmatprep.subr.mxu0 0.0
      %1044 = vmatpush1.msra.mxu0 0.0
      %1045 = vmatprep.subr.mxu0 0.0
      %1046 = vmatpush1.msra.mxu0 0.0
      %1047 = vmatprep.subr.mxu0 0.0
      %1048 = vmatpush1.msra.mxu0 0.0
      %1049 = vmatprep.subr.mxu0 0.0
      %1050 = vmatpush1.msra.mxu0 0.0
      %1051 = vmatprep.mubr.f32.mxu0 0.0
      %1052 = vmatmul.mubr.f32.gmra.mrb[0].mxu0 %v985
      %v1053 = vpop.f32.mrb[0].mxu0
      %v1054 = vadd.f32 %v222, %v1053
      %v1055 = vpop.f32.mrb[0].mxu0
      %1056 = vdwg.mxu0
      %v1057 = vmax.f32 %v1054, 0.0
      %s1058 = scalar_lea.vmem %s3, 40
      %v1059 = vld [vmem:[%s1058] sm:$0xff]
      %v1061 = vsel %vm299, %v1057, 0
      %1063 = vmatprep.subr.mxu0 0.0
      %1064 = vmatpush1.msra.mxu0 %v1059
      %1065 = vmatprep.subr.mxu0 0.0
      %1066 = vmatpush1.msra.mxu0 0.0
      %1067 = vmatprep.subr.mxu0 0.0
      %1068 = vmatpush1.msra.mxu0 0.0
      %1069 = vmatprep.subr.mxu0 0.0
      %1070 = vmatpush1.msra.mxu0 0.0
      %1071 = vmatprep.subr.mxu0 0.0
      %1072 = vmatpush1.msra.mxu0 0.0
      %1073 = vmatprep.subr.mxu0 0.0
      %1074 = vmatpush1.msra.mxu0 0.0
      %1075 = vmatprep.subr.mxu0 0.0
      %1076 = vmatpush1.msra.mxu0 0.0
      %1077 = vmatprep.subr.mxu0 0.0
      %1078 = vmatpush1.msra.mxu0 0.0
      %1079 = vmatprep.subr.mxu0 0.0
      %1080 = vmatpush1.msra.mxu0 0.0
      %1081 = vmatprep.subr.mxu0 0.0
      %1082 = vmatpush1.msra.mxu0 0.0
      %1083 = vmatprep.subr.mxu0 0.0
      %1084 = vmatpush1.msra.mxu0 0.0
      %1085 = vmatprep.subr.mxu0 0.0
      %1086 = vmatpush1.msra.mxu0 0.0
      %1087 = vmatprep.subr.mxu0 0.0
      %1088 = vmatpush1.msra.mxu0 0.0
      %1089 = vmatprep.subr.mxu0 0.0
      %1090 = vmatpush1.msra.mxu0 0.0
      %1091 = vmatprep.subr.mxu0 0.0
      %1092 = vmatpush1.msra.mxu0 0.0
      %1093 = vmatprep.subr.mxu0 0.0
      %1094 = vmatpush1.msra.mxu0 0.0
      %1095 = vmatprep.subr.mxu0 0.0
      %1096 = vmatpush1.msra.mxu0 0.0
      %1097 = vmatprep.subr.mxu0 0.0
      %1098 = vmatpush1.msra.mxu0 0.0
      %1099 = vmatprep.subr.mxu0 0.0
      %1100 = vmatpush1.msra.mxu0 0.0
      %1101 = vmatprep.subr.mxu0 0.0
      %1102 = vmatpush1.msra.mxu0 0.0
      %1103 = vmatprep.subr.mxu0 0.0
      %1104 = vmatpush1.msra.mxu0 0.0
      %1105 = vmatprep.subr.mxu0 0.0
      %1106 = vmatpush1.msra.mxu0 0.0
      %1107 = vmatprep.subr.mxu0 0.0
      %1108 = vmatpush1.msra.mxu0 0.0
      %1109 = vmatprep.subr.mxu0 0.0
      %1110 = vmatpush1.msra.mxu0 0.0
      %1111 = vmatprep.subr.mxu0 0.0
      %1112 = vmatpush1.msra.mxu0 0.0
      %1113 = vmatprep.subr.mxu0 0.0
      %1114 = vmatpush1.msra.mxu0 0.0
      %1115 = vmatprep.subr.mxu0 0.0
      %1116 = vmatpush1.msra.mxu0 0.0
      %1117 = vmatprep.subr.mxu0 0.0
      %1118 = vmatpush1.msra.mxu0 0.0
      %1119 = vmatprep.subr.mxu0 0.0
      %1120 = vmatpush1.msra.mxu0 0.0
      %1121 = vmatprep.subr.mxu0 0.0
      %1122 = vmatpush1.msra.mxu0 0.0
      %1123 = vmatprep.subr.mxu0 0.0
      %1124 = vmatpush1.msra.mxu0 0.0
      %1125 = vmatprep.subr.mxu0 0.0
      %1126 = vmatpush1.msra.mxu0 0.0
      %1127 = vmatprep.mubr.f32.mxu0 0.0
      %1128 = vmatmul.mubr.f32.gmra.mrb[0].mxu0 %v1061
      %v1129 = vpop.f32.mrb[0].mxu0
      %v1130 = vadd.f32 0.0, %v1129
      %v1131 = vpop.f32.mrb[0].mxu0
      %1132 = vdwg.mxu0
      %v1133 = vadd.f32 %v981, %v1130
      %s1134 = scalar_lea.vmem %s214, 6
      %v1135 = vld [vmem:[%s1134] sm:$0x1]
      %v1137 = vsel %vm223, %v1135, 0
      %1139 = vmatprep.subr.mxu0 0.0
      %1140 = vmatpush1.msra.mxu0 %v220
      %1141 = vmatprep.subr.mxu0 0.0
      %1142 = vmatpush1.msra.mxu0 %v221
      %1143 = vmatprep.subr.mxu0 0.0
      %1144 = vmatpush1.msra.mxu0 0.0
      %1145 = vmatprep.subr.mxu0 0.0
      %1146 = vmatpush1.msra.mxu0 0.0
      %1147 = vmatprep.subr.mxu0 0.0
      %1148 = vmatpush1.msra.mxu0 0.0
      %1149 = vmatprep.subr.mxu0 0.0
      %1150 = vmatpush1.msra.mxu0 0.0
      %1151 = vmatprep.subr.mxu0 0.0
      %1152 = vmatpush1.msra.mxu0 0.0
      %1153 = vmatprep.subr.mxu0 0.0
      %1154 = vmatpush1.msra.mxu0 0.0
      %1155 = vmatprep.subr.mxu0 0.0
      %1156 = vmatpush1.msra.mxu0 0.0
      %1157 = vmatprep.subr.mxu0 0.0
      %1158 = vmatpush1.msra.mxu0 0.0
      %1159 = vmatprep.subr.mxu0 0.0
      %1160 = vmatpush1.msra.mxu0 0.0
      %1161 = vmatprep.subr.mxu0 0.0
      %1162 = vmatpush1.msra.mxu0 0.0
      %1163 = vmatprep.subr.mxu0 0.0
      %1164 = vmatpush1.msra.mxu0 0.0
      %1165 = vmatprep.subr.mxu0 0.0
      %1166 = vmatpush1.msra.mxu0 0.0
      %1167 = vmatprep.subr.mxu0 0.0
      %1168 = vmatpush1.msra.mxu0 0.0
      %1169 = vmatprep.subr.mxu0 0.0
      %1170 = vmatpush1.msra.mxu0 0.0
      %1171 = vmatprep.subr.mxu0 0.0
      %1172 = vmatpush1.msra.mxu0 0.0
      %1173 = vmatprep.subr.mxu0 0.0
      %1174 = vmatpush1.msra.mxu0 0.0
      %1175 = vmatprep.subr.mxu0 0.0
      %1176 = vmatpush1.msra.mxu0 0.0
      %1177 = vmatprep.subr.mxu0 0.0
      %1178 = vmatpush1.msra.mxu0 0.0
      %1179 = vmatprep.subr.mxu0 0.0
      %1180 = vmatpush1.msra.mxu0 0.0
      %1181 = vmatprep.subr.mxu0 0.0
      %1182 = vmatpush1.msra.mxu0 0.0
      %1183 = vmatprep.subr.mxu0 0.0
      %1184 = vmatpush1.msra.mxu0 0.0
      %1185 = vmatprep.subr.mxu0 0.0
      %1186 = vmatpush1.msra.mxu0 0.0
      %1187 = vmatprep.subr.mxu0 0.0
      %1188 = vmatpush1.msra.mxu0 0.0
      %1189 = vmatprep.subr.mxu0 0.0
      %1190 = vmatpush1.msra.mxu0 0.0
      %1191 = vmatprep.subr.mxu0 0.0
      %1192 = vmatpush1.msra.mxu0 0.0
      %1193 = vmatprep.subr.mxu0 0.0
      %1194 = vmatpush1.msra.mxu0 0.0
      %1195 = vmatprep.subr.mxu0 0.0
      %1196 = vmatpush1.msra.mxu0 0.0
      %1197 = vmatprep.subr.mxu0 0.0
      %1198 = vmatpush1.msra.mxu0 0.0
      %1199 = vmatprep.subr.mxu0 0.0
      %1200 = vmatpush1.msra.mxu0 0.0
      %1201 = vmatprep.subr.mxu0 0.0
      %1202 = vmatpush1.msra.mxu0 0.0
      %1203 = vmatprep.mubr.f32.mxu0 0.0
      %1204 = vmatmul.mubr.f32.gmra.mrb[0].mxu0 %v1137
      %v1205 = vpop.f32.mrb[0].mxu0
      %v1206 = vadd.f32 %v222, %v1205
      %v1207 = vpop.f32.mrb[0].mxu0
      %1208 = vdwg.mxu0
      %v1209 = vmax.f32 %v1206, 0.0
      %s1210 = scalar_lea.vmem %s3, 48
      %v1211 = vld [vmem:[%s1210] sm:$0xff]
      %v1213 = vsel %vm299, %v1209, 0
      %1215 = vmatprep.subr.mxu0 0.0
      %1216 = vmatpush1.msra.mxu0 %v1211
      %1217 = vmatprep.subr.mxu0 0.0
      %1218 = vmatpush1.msra.mxu0 0.0
      %1219 = vmatprep.subr.mxu0 0.0
      %1220 = vmatpush1.msra.mxu0 0.0
      %1221 = vmatprep.subr.mxu0 0.0
      %1222 = vmatpush1.msra.mxu0 0.0
      %1223 = vmatprep.subr.mxu0 0.0
      %1224 = vmatpush1.msra.mxu0 0.0
      %1225 = vmatprep.subr.mxu0 0.0
      %1226 = vmatpush1.msra.mxu0 0.0
      %1227 = vmatprep.subr.mxu0 0.0
      %1228 = vmatpush1.msra.mxu0 0.0
      %1229 = vmatprep.subr.mxu0 0.0
      %1230 = vmatpush1.msra.mxu0 0.0
      %1231 = vmatprep.subr.mxu0 0.0
      %1232 = vmatpush1.msra.mxu0 0.0
      %1233 = vmatprep.subr.mxu0 0.0
      %1234 = vmatpush1.msra.mxu0 0.0
      %1235 = vmatprep.subr.mxu0 0.0
      %1236 = vmatpush1.msra.mxu0 0.0
      %1237 = vmatprep.subr.mxu0 0.0
      %1238 = vmatpush1.msra.mxu0 0.0
      %1239 = vmatprep.subr.mxu0 0.0
      %1240 = vmatpush1.msra.mxu0 0.0
      %1241 = vmatprep.subr.mxu0 0.0
      %1242 = vmatpush1.msra.mxu0 0.0
      %1243 = vmatprep.subr.mxu0 0.0
      %1244 = vmatpush1.msra.mxu0 0.0
      %1245 = vmatprep.subr.mxu0 0.0
      %1246 = vmatpush1.msra.mxu0 0.0
      %1247 = vmatprep.subr.mxu0 0.0
      %1248 = vmatpush1.msra.mxu0 0.0
      %1249 = vmatprep.subr.mxu0 0.0
      %1250 = vmatpush1.msra.mxu0 0.0
      %1251 = vmatprep.subr.mxu0 0.0
      %1252 = vmatpush1.msra.mxu0 0.0
      %1253 = vmatprep.subr.mxu0 0.0
      %1254 = vmatpush1.msra.mxu0 0.0
      %1255 = vmatprep.subr.mxu0 0.0
      %1256 = vmatpush1.msra.mxu0 0.0
      %1257 = vmatprep.subr.mxu0 0.0
      %1258 = vmatpush1.msra.mxu0 0.0
      %1259 = vmatprep.subr.mxu0 0.0
      %1260 = vmatpush1.msra.mxu0 0.0
      %1261 = vmatprep.subr.mxu0 0.0
      %1262 = vmatpush1.msra.mxu0 0.0
      %1263 = vmatprep.subr.mxu0 0.0
      %1264 = vmatpush1.msra.mxu0 0.0
      %1265 = vmatprep.subr.mxu0 0.0
      %1266 = vmatpush1.msra.mxu0 0.0
      %1267 = vmatprep.subr.mxu0 0.0
      %1268 = vmatpush1.msra.mxu0 0.0
      %1269 = vmatprep.subr.mxu0 0.0
      %1270 = vmatpush1.msra.mxu0 0.0
      %1271 = vmatprep.subr.mxu0 0.0
      %1272 = vmatpush1.msra.mxu0 0.0
      %1273 = vmatprep.subr.mxu0 0.0
      %1274 = vmatpush1.msra.mxu0 0.0
      %1275 = vmatprep.subr.mxu0 0.0
      %1276 = vmatpush1.msra.mxu0 0.0
      %1277 = vmatprep.subr.mxu0 0.0
      %1278 = vmatpush1.msra.mxu0 0.0
      %1279 = vmatprep.mubr.f32.mxu0 0.0
      %1280 = vmatmul.mubr.f32.gmra.mrb[0].mxu0 %v1213
      %v1281 = vpop.f32.mrb[0].mxu0
      %v1282 = vadd.f32 0.0, %v1281
      %v1283 = vpop.f32.mrb[0].mxu0
      %1284 = vdwg.mxu0
      %v1285 = vadd.f32 %v1133, %v1282
      %s1286 = scalar_lea.vmem %s214, 7
      %v1287 = vld [vmem:[%s1286] sm:$0x1]
      %v1289 = vsel %vm223, %v1287, 0
      %1291 = vmatprep.subr.mxu0 0.0
      %1292 = vmatpush1.msra.mxu0 %v220
      %1293 = vmatprep.subr.mxu0 0.0
      %1294 = vmatpush1.msra.mxu0 %v221
      %1295 = vmatprep.subr.mxu0 0.0
      %1296 = vmatpush1.msra.mxu0 0.0
      %1297 = vmatprep.subr.mxu0 0.0
      %1298 = vmatpush1.msra.mxu0 0.0
      %1299 = vmatprep.subr.mxu0 0.0
      %1300 = vmatpush1.msra.mxu0 0.0
      %1301 = vmatprep.subr.mxu0 0.0
      %1302 = vmatpush1.msra.mxu0 0.0
      %1303 = vmatprep.subr.mxu0 0.0
      %1304 = vmatpush1.msra.mxu0 0.0
      %1305 = vmatprep.subr.mxu0 0.0
      %1306 = vmatpush1.msra.mxu0 0.0
      %1307 = vmatprep.subr.mxu0 0.0
      %1308 = vmatpush1.msra.mxu0 0.0
      %1309 = vmatprep.subr.mxu0 0.0
      %1310 = vmatpush1.msra.mxu0 0.0
      %1311 = vmatprep.subr.mxu0 0.0
      %1312 = vmatpush1.msra.mxu0 0.0
      %1313 = vmatprep.subr.mxu0 0.0
      %1314 = vmatpush1.msra.mxu0 0.0
      %1315 = vmatprep.subr.mxu0 0.0
      %1316 = vmatpush1.msra.mxu0 0.0
      %1317 = vmatprep.subr.mxu0 0.0
      %1318 = vmatpush1.msra.mxu0 0.0
      %1319 = vmatprep.subr.mxu0 0.0
      %1320 = vmatpush1.msra.mxu0 0.0
      %1321 = vmatprep.subr.mxu0 0.0
      %1322 = vmatpush1.msra.mxu0 0.0
      %1323 = vmatprep.subr.mxu0 0.0
      %1324 = vmatpush1.msra.mxu0 0.0
      %1325 = vmatprep.subr.mxu0 0.0
      %1326 = vmatpush1.msra.mxu0 0.0
      %1327 = vmatprep.subr.mxu0 0.0
      %1328 = vmatpush1.msra.mxu0 0.0
      %1329 = vmatprep.subr.mxu0 0.0
      %1330 = vmatpush1.msra.mxu0 0.0
      %1331 = vmatprep.subr.mxu0 0.0
      %1332 = vmatpush1.msra.mxu0 0.0
      %1333 = vmatprep.subr.mxu0 0.0
      %1334 = vmatpush1.msra.mxu0 0.0
      %1335 = vmatprep.subr.mxu0 0.0
      %1336 = vmatpush1.msra.mxu0 0.0
      %1337 = vmatprep.subr.mxu0 0.0
      %1338 = vmatpush1.msra.mxu0 0.0
      %1339 = vmatprep.subr.mxu0 0.0
      %1340 = vmatpush1.msra.mxu0 0.0
      %1341 = vmatprep.subr.mxu0 0.0
      %1342 = vmatpush1.msra.mxu0 0.0
      %1343 = vmatprep.subr.mxu0 0.0
      %1344 = vmatpush1.msra.mxu0 0.0
      %1345 = vmatprep.subr.mxu0 0.0
      %1346 = vmatpush1.msra.mxu0 0.0
      %1347 = vmatprep.subr.mxu0 0.0
      %1348 = vmatpush1.msra.mxu0 0.0
      %1349 = vmatprep.subr.mxu0 0.0
      %1350 = vmatpush1.msra.mxu0 0.0
      %1351 = vmatprep.subr.mxu0 0.0
      %1352 = vmatpush1.msra.mxu0 0.0
      %1353 = vmatprep.subr.mxu0 0.0
      %1354 = vmatpush1.msra.mxu0 0.0
      %1355 = vmatprep.mubr.f32.mxu0 0.0
      %1356 = vmatmul.mubr.f32.gmra.mrb[0].mxu0 %v1289
      %v1357 = vpop.f32.mrb[0].mxu0
      %v1358 = vadd.f32 %v222, %v1357
      %v1359 = vpop.f32.mrb[0].mxu0
      %1360 = vdwg.mxu0
      %v1361 = vmax.f32 %v1358, 0.0
      %s1362 = scalar_lea.vmem %s3, 56
      %v1363 = vld [vmem:[%s1362] sm:$0xff]
      %v1365 = vsel %vm299, %v1361, 0
      %1367 = vmatprep.subr.mxu0 0.0
      %1368 = vmatpush1.msra.mxu0 %v1363
      %1369 = vmatprep.subr.mxu0 0.0
      %1370 = vmatpush1.msra.mxu0 0.0
      %1371 = vmatprep.subr.mxu0 0.0
      %1372 = vmatpush1.msra.mxu0 0.0
      %1373 = vmatprep.subr.mxu0 0.0
      %1374 = vmatpush1.msra.mxu0 0.0
      %1375 = vmatprep.subr.mxu0 0.0
      %1376 = vmatpush1.msra.mxu0 0.0
      %1377 = vmatprep.subr.mxu0 0.0
      %1378 = vmatpush1.msra.mxu0 0.0
      %1379 = vmatprep.subr.mxu0 0.0
      %1380 = vmatpush1.msra.mxu0 0.0
      %1381 = vmatprep.subr.mxu0 0.0
      %1382 = vmatpush1.msra.mxu0 0.0
      %1383 = vmatprep.subr.mxu0 0.0
      %1384 = vmatpush1.msra.mxu0 0.0
      %1385 = vmatprep.subr.mxu0 0.0
      %1386 = vmatpush1.msra.mxu0 0.0
      %1387 = vmatprep.subr.mxu0 0.0
      %1388 = vmatpush1.msra.mxu0 0.0
      %1389 = vmatprep.subr.mxu0 0.0
      %1390 = vmatpush1.msra.mxu0 0.0
      %1391 = vmatprep.subr.mxu0 0.0
      %1392 = vmatpush1.msra.mxu0 0.0
      %1393 = vmatprep.subr.mxu0 0.0
      %1394 = vmatpush1.msra.mxu0 0.0
      %1395 = vmatprep.subr.mxu0 0.0
      %1396 = vmatpush1.msra.mxu0 0.0
      %1397 = vmatprep.subr.mxu0 0.0
      %1398 = vmatpush1.msra.mxu0 0.0
      %1399 = vmatprep.subr.mxu0 0.0
      %1400 = vmatpush1.msra.mxu0 0.0
      %1401 = vmatprep.subr.mxu0 0.0
      %1402 = vmatpush1.msra.mxu0 0.0
      %1403 = vmatprep.subr.mxu0 0.0
      %1404 = vmatpush1.msra.mxu0 0.0
      %1405 = vmatprep.subr.mxu0 0.0
      %1406 = vmatpush1.msra.mxu0 0.0
      %1407 = vmatprep.subr.mxu0 0.0
      %1408 = vmatpush1.msra.mxu0 0.0
      %1409 = vmatprep.subr.mxu0 0.0
      %1410 = vmatpush1.msra.mxu0 0.0
      %1411 = vmatprep.subr.mxu0 0.0
      %1412 = vmatpush1.msra.mxu0 0.0
      %1413 = vmatprep.subr.mxu0 0.0
      %1414 = vmatpush1.msra.mxu0 0.0
      %1415 = vmatprep.subr.mxu0 0.0
      %1416 = vmatpush1.msra.mxu0 0.0
      %1417 = vmatprep.subr.mxu0 0.0
      %1418 = vmatpush1.msra.mxu0 0.0
      %1419 = vmatprep.subr.mxu0 0.0
      %1420 = vmatpush1.msra.mxu0 0.0
      %1421 = vmatprep.subr.mxu0 0.0
      %1422 = vmatpush1.msra.mxu0 0.0
      %1423 = vmatprep.subr.mxu0 0.0
      %1424 = vmatpush1.msra.mxu0 0.0
      %1425 = vmatprep.subr.mxu0 0.0
      %1426 = vmatpush1.msra.mxu0 0.0
      %1427 = vmatprep.subr.mxu0 0.0
      %1428 = vmatpush1.msra.mxu0 0.0
      %1429 = vmatprep.subr.mxu0 0.0
      %1430 = vmatpush1.msra.mxu0 0.0
      %1431 = vmatprep.mubr.f32.mxu0 0.0
      %1432 = vmatmul.mubr.f32.gmra.mrb[0].mxu0 %v1365
      %v1433 = vpop.f32.mrb[0].mxu0
      %v1434 = vadd.f32 0.0, %v1433
      %v1435 = vpop.f32.mrb[0].mxu0
      %1436 = vdwg.mxu0
      %v1437 = vadd.f32 %v1285, %v1434
      %s1438 = scalar_lea.vmem %s214, 8
      %v1439 = vld [vmem:[%s1438] sm:$0x1]
      %v1441 = vsel %vm223, %v1439, 0
      %1443 = vmatprep.subr.mxu0 0.0
      %1444 = vmatpush1.msra.mxu0 %v220
      %1445 = vmatprep.subr.mxu0 0.0
      %1446 = vmatpush1.msra.mxu0 %v221
      %1447 = vmatprep.subr.mxu0 0.0
      %1448 = vmatpush1.msra.mxu0 0.0
      %1449 = vmatprep.subr.mxu0 0.0
      %1450 = vmatpush1.msra.mxu0 0.0
      %1451 = vmatprep.subr.mxu0 0.0
      %1452 = vmatpush1.msra.mxu0 0.0
      %1453 = vmatprep.subr.mxu0 0.0
      %1454 = vmatpush1.msra.mxu0 0.0
      %1455 = vmatprep.subr.mxu0 0.0
      %1456 = vmatpush1.msra.mxu0 0.0
      %1457 = vmatprep.subr.mxu0 0.0
      %1458 = vmatpush1.msra.mxu0 0.0
      %1459 = vmatprep.subr.mxu0 0.0
      %1460 = vmatpush1.msra.mxu0 0.0
      %1461 = vmatprep.subr.mxu0 0.0
      %1462 = vmatpush1.msra.mxu0 0.0
      %1463 = vmatprep.subr.mxu0 0.0
      %1464 = vmatpush1.msra.mxu0 0.0
      %1465 = vmatprep.subr.mxu0 0.0
      %1466 = vmatpush1.msra.mxu0 0.0
      %1467 = vmatprep.subr.mxu0 0.0
      %1468 = vmatpush1.msra.mxu0 0.0
      %1469 = vmatprep.subr.mxu0 0.0
      %1470 = vmatpush1.msra.mxu0 0.0
      %1471 = vmatprep.subr.mxu0 0.0
      %1472 = vmatpush1.msra.mxu0 0.0
      %1473 = vmatprep.subr.mxu0 0.0
      %1474 = vmatpush1.msra.mxu0 0.0
      %1475 = vmatprep.subr.mxu0 0.0
      %1476 = vmatpush1.msra.mxu0 0.0
      %1477 = vmatprep.subr.mxu0 0.0
      %1478 = vmatpush1.msra.mxu0 0.0
      %1479 = vmatprep.subr.mxu0 0.0
      %1480 = vmatpush1.msra.mxu0 0.0
      %1481 = vmatprep.subr.mxu0 0.0
      %1482 = vmatpush1.msra.mxu0 0.0
      %1483 = vmatprep.subr.mxu0 0.0
      %1484 = vmatpush1.msra.mxu0 0.0
      %1485 = vmatprep.subr.mxu0 0.0
      %1486 = vmatpush1.msra.mxu0 0.0
      %1487 = vmatprep.subr.mxu0 0.0
      %1488 = vmatpush1.msra.mxu0 0.0
      %1489 = vmatprep.subr.mxu0 0.0
      %1490 = vmatpush1.msra.mxu0 0.0
      %1491 = vmatprep.subr.mxu0 0.0
      %1492 = vmatpush1.msra.mxu0 0.0
      %1493 = vmatprep.subr.mxu0 0.0
      %1494 = vmatpush1.msra.mxu0 0.0
      %1495 = vmatprep.subr.mxu0 0.0
      %1496 = vmatpush1.msra.mxu0 0.0
      %1497 = vmatprep.subr.mxu0 0.0
      %1498 = vmatpush1.msra.mxu0 0.0
      %1499 = vmatprep.subr.mxu0 0.0
      %1500 = vmatpush1.msra.mxu0 0.0
      %1501 = vmatprep.subr.mxu0 0.0
      %1502 = vmatpush1.msra.mxu0 0.0
      %1503 = vmatprep.subr.mxu0 0.0
      %1504 = vmatpush1.msra.mxu0 0.0
      %1505 = vmatprep.subr.mxu0 0.0
      %1506 = vmatpush1.msra.mxu0 0.0
      %1507 = vmatprep.mubr.f32.mxu0 0.0
      %1508 = vmatmul.mubr.f32.gmra.mrb[0].mxu0 %v1441
      %v1509 = vpop.f32.mrb[0].mxu0
      %v1510 = vadd.f32 %v222, %v1509
      %v1511 = vpop.f32.mrb[0].mxu0
      %1512 = vdwg.mxu0
      %v1513 = vmax.f32 %v1510, 0.0
      %s1514 = scalar_lea.vmem %s3, 64
      %v1515 = vld [vmem:[%s1514] sm:$0xff]
      %v1517 = vsel %vm299, %v1513, 0
      %1519 = vmatprep.subr.mxu0 0.0
      %1520 = vmatpush1.msra.mxu0 %v1515
      %1521 = vmatprep.subr.mxu0 0.0
      %1522 = vmatpush1.msra.mxu0 0.0
      %1523 = vmatprep.subr.mxu0 0.0
      %1524 = vmatpush1.msra.mxu0 0.0
      %1525 = vmatprep.subr.mxu0 0.0
      %1526 = vmatpush1.msra.mxu0 0.0
      %1527 = vmatprep.subr.mxu0 0.0
      %1528 = vmatpush1.msra.mxu0 0.0
      %1529 = vmatprep.subr.mxu0 0.0
      %1530 = vmatpush1.msra.mxu0 0.0
      %1531 = vmatprep.subr.mxu0 0.0
      %1532 = vmatpush1.msra.mxu0 0.0
      %1533 = vmatprep.subr.mxu0 0.0
      %1534 = vmatpush1.msra.mxu0 0.0
      %1535 = vmatprep.subr.mxu0 0.0
      %1536 = vmatpush1.msra.mxu0 0.0
      %1537 = vmatprep.subr.mxu0 0.0
      %1538 = vmatpush1.msra.mxu0 0.0
      %1539 = vmatprep.subr.mxu0 0.0
      %1540 = vmatpush1.msra.mxu0 0.0
      %1541 = vmatprep.subr.mxu0 0.0
      %1542 = vmatpush1.msra.mxu0 0.0
      %1543 = vmatprep.subr.mxu0 0.0
      %1544 = vmatpush1.msra.mxu0 0.0
      %1545 = vmatprep.subr.mxu0 0.0
      %1546 = vmatpush1.msra.mxu0 0.0
      %1547 = vmatprep.subr.mxu0 0.0
      %1548 = vmatpush1.msra.mxu0 0.0
      %1549 = vmatprep.subr.mxu0 0.0
      %1550 = vmatpush1.msra.mxu0 0.0
      %1551 = vmatprep.subr.mxu0 0.0
      %1552 = vmatpush1.msra.mxu0 0.0
      %1553 = vmatprep.subr.mxu0 0.0
      %1554 = vmatpush1.msra.mxu0 0.0
      %1555 = vmatprep.subr.mxu0 0.0
      %1556 = vmatpush1.msra.mxu0 0.0
      %1557 = vmatprep.subr.mxu0 0.0
      %1558 = vmatpush1.msra.mxu0 0.0
      %1559 = vmatprep.subr.mxu0 0.0
      %1560 = vmatpush1.msra.mxu0 0.0
      %1561 = vmatprep.subr.mxu0 0.0
      %1562 = vmatpush1.msra.mxu0 0.0
      %1563 = vmatprep.subr.mxu0 0.0
      %1564 = vmatpush1.msra.mxu0 0.0
      %1565 = vmatprep.subr.mxu0 0.0
      %1566 = vmatpush1.msra.mxu0 0.0
      %1567 = vmatprep.subr.mxu0 0.0
      %1568 = vmatpush1.msra.mxu0 0.0
      %1569 = vmatprep.subr.mxu0 0.0
      %1570 = vmatpush1.msra.mxu0 0.0
      %1571 = vmatprep.subr.mxu0 0.0
      %1572 = vmatpush1.msra.mxu0 0.0
      %1573 = vmatprep.subr.mxu0 0.0
      %1574 = vmatpush1.msra.mxu0 0.0
      %1575 = vmatprep.subr.mxu0 0.0
      %1576 = vmatpush1.msra.mxu0 0.0
      %1577 = vmatprep.subr.mxu0 0.0
      %1578 = vmatpush1.msra.mxu0 0.0
      %1579 = vmatprep.subr.mxu0 0.0
      %1580 = vmatpush1.msra.mxu0 0.0
      %1581 = vmatprep.subr.mxu0 0.0
      %1582 = vmatpush1.msra.mxu0 0.0
      %1583 = vmatprep.mubr.f32.mxu0 0.0
      %1584 = vmatmul.mubr.f32.gmra.mrb[0].mxu0 %v1517
      %v1585 = vpop.f32.mrb[0].mxu0
      %v1586 = vadd.f32 0.0, %v1585
      %v1587 = vpop.f32.mrb[0].mxu0
      %1588 = vdwg.mxu0
      %v1589 = vadd.f32 %v1437, %v1586
      %s1590 = scalar_lea.vmem %s214, 9
      %v1591 = vld [vmem:[%s1590] sm:$0x1]
      %v1593 = vsel %vm223, %v1591, 0
      %1595 = vmatprep.subr.mxu0 0.0
      %1596 = vmatpush1.msra.mxu0 %v220
      %1597 = vmatprep.subr.mxu0 0.0
      %1598 = vmatpush1.msra.mxu0 %v221
      %1599 = vmatprep.subr.mxu0 0.0
      %1600 = vmatpush1.msra.mxu0 0.0
      %1601 = vmatprep.subr.mxu0 0.0
      %1602 = vmatpush1.msra.mxu0 0.0
      %1603 = vmatprep.subr.mxu0 0.0
      %1604 = vmatpush1.msra.mxu0 0.0
      %1605 = vmatprep.subr.mxu0 0.0
      %1606 = vmatpush1.msra.mxu0 0.0
      %1607 = vmatprep.subr.mxu0 0.0
      %1608 = vmatpush1.msra.mxu0 0.0
      %1609 = vmatprep.subr.mxu0 0.0
      %1610 = vmatpush1.msra.mxu0 0.0
      %1611 = vmatprep.subr.mxu0 0.0
      %1612 = vmatpush1.msra.mxu0 0.0
      %1613 = vmatprep.subr.mxu0 0.0
      %1614 = vmatpush1.msra.mxu0 0.0
      %1615 = vmatprep.subr.mxu0 0.0
      %1616 = vmatpush1.msra.mxu0 0.0
      %1617 = vmatprep.subr.mxu0 0.0
      %1618 = vmatpush1.msra.mxu0 0.0
      %1619 = vmatprep.subr.mxu0 0.0
      %1620 = vmatpush1.msra.mxu0 0.0
      %1621 = vmatprep.subr.mxu0 0.0
      %1622 = vmatpush1.msra.mxu0 0.0
      %1623 = vmatprep.subr.mxu0 0.0
      %1624 = vmatpush1.msra.mxu0 0.0
      %1625 = vmatprep.subr.mxu0 0.0
      %1626 = vmatpush1.msra.mxu0 0.0
      %1627 = vmatprep.subr.mxu0 0.0
      %1628 = vmatpush1.msra.mxu0 0.0
      %1629 = vmatprep.subr.mxu0 0.0
      %1630 = vmatpush1.msra.mxu0 0.0
      %1631 = vmatprep.subr.mxu0 0.0
      %1632 = vmatpush1.msra.mxu0 0.0
      %1633 = vmatprep.subr.mxu0 0.0
      %1634 = vmatpush1.msra.mxu0 0.0
      %1635 = vmatprep.subr.mxu0 0.0
      %1636 = vmatpush1.msra.mxu0 0.0
      %1637 = vmatprep.subr.mxu0 0.0
      %1638 = vmatpush1.msra.mxu0 0.0
      %1639 = vmatprep.subr.mxu0 0.0
      %1640 = vmatpush1.msra.mxu0 0.0
      %1641 = vmatprep.subr.mxu0 0.0
      %1642 = vmatpush1.msra.mxu0 0.0
      %1643 = vmatprep.subr.mxu0 0.0
      %1644 = vmatpush1.msra.mxu0 0.0
      %1645 = vmatprep.subr.mxu0 0.0
      %1646 = vmatpush1.msra.mxu0 0.0
      %1647 = vmatprep.subr.mxu0 0.0
      %1648 = vmatpush1.msra.mxu0 0.0
      %1649 = vmatprep.subr.mxu0 0.0
      %1650 = vmatpush1.msra.mxu0 0.0
      %1651 = vmatprep.subr.mxu0 0.0
      %1652 = vmatpush1.msra.mxu0 0.0
      %1653 = vmatprep.subr.mxu0 0.0
      %1654 = vmatpush1.msra.mxu0 0.0
      %1655 = vmatprep.subr.mxu0 0.0
      %1656 = vmatpush1.msra.mxu0 0.0
      %1657 = vmatprep.subr.mxu0 0.0
      %1658 = vmatpush1.msra.mxu0 0.0
      %1659 = vmatprep.mubr.f32.mxu0 0.0
      %1660 = vmatmul.mubr.f32.gmra.mrb[0].mxu0 %v1593
      %v1661 = vpop.f32.mrb[0].mxu0
      %v1662 = vadd.f32 %v222, %v1661
      %v1663 = vpop.f32.mrb[0].mxu0
      %1664 = vdwg.mxu0
      %v1665 = vmax.f32 %v1662, 0.0
      %s1666 = scalar_lea.vmem %s3, 72
      %v1667 = vld [vmem:[%s1666] sm:$0xff]
      %v1669 = vsel %vm299, %v1665, 0
      %1671 = vmatprep.subr.mxu0 0.0
      %1672 = vmatpush1.msra.mxu0 %v1667
      %1673 = vmatprep.subr.mxu0 0.0
      %1674 = vmatpush1.msra.mxu0 0.0
      %1675 = vmatprep.subr.mxu0 0.0
      %1676 = vmatpush1.msra.mxu0 0.0
      %1677 = vmatprep.subr.mxu0 0.0
      %1678 = vmatpush1.msra.mxu0 0.0
      %1679 = vmatprep.subr.mxu0 0.0
      %1680 = vmatpush1.msra.mxu0 0.0
      %1681 = vmatprep.subr.mxu0 0.0
      %1682 = vmatpush1.msra.mxu0 0.0
      %1683 = vmatprep.subr.mxu0 0.0
      %1684 = vmatpush1.msra.mxu0 0.0
      %1685 = vmatprep.subr.mxu0 0.0
      %1686 = vmatpush1.msra.mxu0 0.0
      %1687 = vmatprep.subr.mxu0 0.0
      %1688 = vmatpush1.msra.mxu0 0.0
      %1689 = vmatprep.subr.mxu0 0.0
      %1690 = vmatpush1.msra.mxu0 0.0
      %1691 = vmatprep.subr.mxu0 0.0
      %1692 = vmatpush1.msra.mxu0 0.0
      %1693 = vmatprep.subr.mxu0 0.0
      %1694 = vmatpush1.msra.mxu0 0.0
      %1695 = vmatprep.subr.mxu0 0.0
      %1696 = vmatpush1.msra.mxu0 0.0
      %1697 = vmatprep.subr.mxu0 0.0
      %1698 = vmatpush1.msra.mxu0 0.0
      %1699 = vmatprep.subr.mxu0 0.0
      %1700 = vmatpush1.msra.mxu0 0.0
      %1701 = vmatprep.subr.mxu0 0.0
      %1702 = vmatpush1.msra.mxu0 0.0
      %1703 = vmatprep.subr.mxu0 0.0
      %1704 = vmatpush1.msra.mxu0 0.0
      %1705 = vmatprep.subr.mxu0 0.0
      %1706 = vmatpush1.msra.mxu0 0.0
      %1707 = vmatprep.subr.mxu0 0.0
      %1708 = vmatpush1.msra.mxu0 0.0
      %1709 = vmatprep.subr.mxu0 0.0
      %1710 = vmatpush1.msra.mxu0 0.0
      %1711 = vmatprep.subr.mxu0 0.0
      %1712 = vmatpush1.msra.mxu0 0.0
      %1713 = vmatprep.subr.mxu0 0.0
      %1714 = vmatpush1.msra.mxu0 0.0
      %1715 = vmatprep.subr.mxu0 0.0
      %1716 = vmatpush1.msra.mxu0 0.0
      %1717 = vmatprep.subr.mxu0 0.0
      %1718 = vmatpush1.msra.mxu0 0.0
      %1719 = vmatprep.subr.mxu0 0.0
      %1720 = vmatpush1.msra.mxu0 0.0
      %1721 = vmatprep.subr.mxu0 0.0
      %1722 = vmatpush1.msra.mxu0 0.0
      %1723 = vmatprep.subr.mxu0 0.0
      %1724 = vmatpush1.msra.mxu0 0.0
      %1725 = vmatprep.subr.mxu0 0.0
      %1726 = vmatpush1.msra.mxu0 0.0
      %1727 = vmatprep.subr.mxu0 0.0
      %1728 = vmatpush1.msra.mxu0 0.0
      %1729 = vmatprep.subr.mxu0 0.0
      %1730 = vmatpush1.msra.mxu0 0.0
      %1731 = vmatprep.subr.mxu0 0.0
      %1732 = vmatpush1.msra.mxu0 0.0
      %1733 = vmatprep.subr.mxu0 0.0
      %1734 = vmatpush1.msra.mxu0 0.0
      %1735 = vmatprep.mubr.f32.mxu0 0.0
      %1736 = vmatmul.mubr.f32.gmra.mrb[0].mxu0 %v1669
      %v1737 = vpop.f32.mrb[0].mxu0
      %v1738 = vadd.f32 0.0, %v1737
      %v1739 = vpop.f32.mrb[0].mxu0
      %1740 = vdwg.mxu0
      %v1741 = vadd.f32 %v1589, %v1738
      %s1742 = scalar_lea.vmem %s214, 10
      %v1743 = vld [vmem:[%s1742] sm:$0x1]
      %v1745 = vsel %vm223, %v1743, 0
      %1747 = vmatprep.subr.mxu0 0.0
      %1748 = vmatpush1.msra.mxu0 %v220
      %1749 = vmatprep.subr.mxu0 0.0
      %1750 = vmatpush1.msra.mxu0 %v221
      %1751 = vmatprep.subr.mxu0 0.0
      %1752 = vmatpush1.msra.mxu0 0.0
      %1753 = vmatprep.subr.mxu0 0.0
      %1754 = vmatpush1.msra.mxu0 0.0
      %1755 = vmatprep.subr.mxu0 0.0
      %1756 = vmatpush1.msra.mxu0 0.0
      %1757 = vmatprep.subr.mxu0 0.0
      %1758 = vmatpush1.msra.mxu0 0.0
      %1759 = vmatprep.subr.mxu0 0.0
      %1760 = vmatpush1.msra.mxu0 0.0
      %1761 = vmatprep.subr.mxu0 0.0
      %1762 = vmatpush1.msra.mxu0 0.0
      %1763 = vmatprep.subr.mxu0 0.0
      %1764 = vmatpush1.msra.mxu0 0.0
      %1765 = vmatprep.subr.mxu0 0.0
      %1766 = vmatpush1.msra.mxu0 0.0
      %1767 = vmatprep.subr.mxu0 0.0
      %1768 = vmatpush1.msra.mxu0 0.0
      %1769 = vmatprep.subr.mxu0 0.0
      %1770 = vmatpush1.msra.mxu0 0.0
      %1771 = vmatprep.subr.mxu0 0.0
      %1772 = vmatpush1.msra.mxu0 0.0
      %1773 = vmatprep.subr.mxu0 0.0
      %1774 = vmatpush1.msra.mxu0 0.0
      %1775 = vmatprep.subr.mxu0 0.0
      %1776 = vmatpush1.msra.mxu0 0.0
      %1777 = vmatprep.subr.mxu0 0.0
      %1778 = vmatpush1.msra.mxu0 0.0
      %1779 = vmatprep.subr.mxu0 0.0
      %1780 = vmatpush1.msra.mxu0 0.0
      %1781 = vmatprep.subr.mxu0 0.0
      %1782 = vmatpush1.msra.mxu0 0.0
      %1783 = vmatprep.subr.mxu0 0.0
      %1784 = vmatpush1.msra.mxu0 0.0
      %1785 = vmatprep.subr.mxu0 0.0
      %1786 = vmatpush1.msra.mxu0 0.0
      %1787 = vmatprep.subr.mxu0 0.0
      %1788 = vmatpush1.msra.mxu0 0.0
      %1789 = vmatprep.subr.mxu0 0.0
      %1790 = vmatpush1.msra.mxu0 0.0
      %1791 = vmatprep.subr.mxu0 0.0
      %1792 = vmatpush1.msra.mxu0 0.0
      %1793 = vmatprep.subr.mxu0 0.0
      %1794 = vmatpush1.msra.mxu0 0.0
      %1795 = vmatprep.subr.mxu0 0.0
      %1796 = vmatpush1.msra.mxu0 0.0
      %1797 = vmatprep.subr.mxu0 0.0
      %1798 = vmatpush1.msra.mxu0 0.0
      %1799 = vmatprep.subr.mxu0 0.0
      %1800 = vmatpush1.msra.mxu0 0.0
      %1801 = vmatprep.subr.mxu0 0.0
      %1802 = vmatpush1.msra.mxu0 0.0
      %1803 = vmatprep.subr.mxu0 0.0
      %1804 = vmatpush1.msra.mxu0 0.0
      %1805 = vmatprep.subr.mxu0 0.0
      %1806 = vmatpush1.msra.mxu0 0.0
      %1807 = vmatprep.subr.mxu0 0.0
      %1808 = vmatpush1.msra.mxu0 0.0
      %1809 = vmatprep.subr.mxu0 0.0
      %1810 = vmatpush1.msra.mxu0 0.0
      %1811 = vmatprep.mubr.f32.mxu0 0.0
      %1812 = vmatmul.mubr.f32.gmra.mrb[0].mxu0 %v1745
      %v1813 = vpop.f32.mrb[0].mxu0
      %v1814 = vadd.f32 %v222, %v1813
      %v1815 = vpop.f32.mrb[0].mxu0
      %1816 = vdwg.mxu0
      %v1817 = vmax.f32 %v1814, 0.0
      %s1818 = scalar_lea.vmem %s3, 80
      %v1819 = vld [vmem:[%s1818] sm:$0xff]
      %v1821 = vsel %vm299, %v1817, 0
      %1823 = vmatprep.subr.mxu0 0.0
      %1824 = vmatpush1.msra.mxu0 %v1819
      %1825 = vmatprep.subr.mxu0 0.0
      %1826 = vmatpush1.msra.mxu0 0.0
      %1827 = vmatprep.subr.mxu0 0.0
      %1828 = vmatpush1.msra.mxu0 0.0
      %1829 = vmatprep.subr.mxu0 0.0
      %1830 = vmatpush1.msra.mxu0 0.0
      %1831 = vmatprep.subr.mxu0 0.0
      %1832 = vmatpush1.msra.mxu0 0.0
      %1833 = vmatprep.subr.mxu0 0.0
      %1834 = vmatpush1.msra.mxu0 0.0
      %1835 = vmatprep.subr.mxu0 0.0
      %1836 = vmatpush1.msra.mxu0 0.0
      %1837 = vmatprep.subr.mxu0 0.0
      %1838 = vmatpush1.msra.mxu0 0.0
      %1839 = vmatprep.subr.mxu0 0.0
      %1840 = vmatpush1.msra.mxu0 0.0
      %1841 = vmatprep.subr.mxu0 0.0
      %1842 = vmatpush1.msra.mxu0 0.0
      %1843 = vmatprep.subr.mxu0 0.0
      %1844 = vmatpush1.msra.mxu0 0.0
      %1845 = vmatprep.subr.mxu0 0.0
      %1846 = vmatpush1.msra.mxu0 0.0
      %1847 = vmatprep.subr.mxu0 0.0
      %1848 = vmatpush1.msra.mxu0 0.0
      %1849 = vmatprep.subr.mxu0 0.0
      %1850 = vmatpush1.msra.mxu0 0.0
      %1851 = vmatprep.subr.mxu0 0.0
      %1852 = vmatpush1.msra.mxu0 0.0
      %1853 = vmatprep.subr.mxu0 0.0
      %1854 = vmatpush1.msra.mxu0 0.0
      %1855 = vmatprep.subr.mxu0 0.0
      %1856 = vmatpush1.msra.mxu0 0.0
      %1857 = vmatprep.subr.mxu0 0.0
      %1858 = vmatpush1.msra.mxu0 0.0
      %1859 = vmatprep.subr.mxu0 0.0
      %1860 = vmatpush1.msra.mxu0 0.0
      %1861 = vmatprep.subr.mxu0 0.0
      %1862 = vmatpush1.msra.mxu0 0.0
      %1863 = vmatprep.subr.mxu0 0.0
      %1864 = vmatpush1.msra.mxu0 0.0
      %1865 = vmatprep.subr.mxu0 0.0
      %1866 = vmatpush1.msra.mxu0 0.0
      %1867 = vmatprep.subr.mxu0 0.0
      %1868 = vmatpush1.msra.mxu0 0.0
      %1869 = vmatprep.subr.mxu0 0.0
      %1870 = vmatpush1.msra.mxu0 0.0
      %1871 = vmatprep.subr.mxu0 0.0
      %1872 = vmatpush1.msra.mxu0 0.0
      %1873 = vmatprep.subr.mxu0 0.0
      %1874 = vmatpush1.msra.mxu0 0.0
      %1875 = vmatprep.subr.mxu0 0.0
      %1876 = vmatpush1.msra.mxu0 0.0
      %1877 = vmatprep.subr.mxu0 0.0
      %1878 = vmatpush1.msra.mxu0 0.0
      %1879 = vmatprep.subr.mxu0 0.0
      %1880 = vmatpush1.msra.mxu0 0.0
      %1881 = vmatprep.subr.mxu0 0.0
      %1882 = vmatpush1.msra.mxu0 0.0
      %1883 = vmatprep.subr.mxu0 0.0
      %1884 = vmatpush1.msra.mxu0 0.0
      %1885 = vmatprep.subr.mxu0 0.0
      %1886 = vmatpush1.msra.mxu0 0.0
      %1887 = vmatprep.mubr.f32.mxu0 0.0
      %1888 = vmatmul.mubr.f32.gmra.mrb[0].mxu0 %v1821
      %v1889 = vpop.f32.mrb[0].mxu0
      %v1890 = vadd.f32 0.0, %v1889
      %v1891 = vpop.f32.mrb[0].mxu0
      %1892 = vdwg.mxu0
      %v1893 = vadd.f32 %v1741, %v1890
      %s1894 = scalar_lea.vmem %s214, 11
      %v1895 = vld [vmem:[%s1894] sm:$0x1]
      %v1897 = vsel %vm223, %v1895, 0
      %1899 = vmatprep.subr.mxu0 0.0
      %1900 = vmatpush1.msra.mxu0 %v220
      %1901 = vmatprep.subr.mxu0 0.0
      %1902 = vmatpush1.msra.mxu0 %v221
      %1903 = vmatprep.subr.mxu0 0.0
      %1904 = vmatpush1.msra.mxu0 0.0
      %1905 = vmatprep.subr.mxu0 0.0
      %1906 = vmatpush1.msra.mxu0 0.0
      %1907 = vmatprep.subr.mxu0 0.0
      %1908 = vmatpush1.msra.mxu0 0.0
      %1909 = vmatprep.subr.mxu0 0.0
      %1910 = vmatpush1.msra.mxu0 0.0
      %1911 = vmatprep.subr.mxu0 0.0
      %1912 = vmatpush1.msra.mxu0 0.0
      %1913 = vmatprep.subr.mxu0 0.0
      %1914 = vmatpush1.msra.mxu0 0.0
      %1915 = vmatprep.subr.mxu0 0.0
      %1916 = vmatpush1.msra.mxu0 0.0
      %1917 = vmatprep.subr.mxu0 0.0
      %1918 = vmatpush1.msra.mxu0 0.0
      %1919 = vmatprep.subr.mxu0 0.0
      %1920 = vmatpush1.msra.mxu0 0.0
      %1921 = vmatprep.subr.mxu0 0.0
      %1922 = vmatpush1.msra.mxu0 0.0
      %1923 = vmatprep.subr.mxu0 0.0
      %1924 = vmatpush1.msra.mxu0 0.0
      %1925 = vmatprep.subr.mxu0 0.0
      %1926 = vmatpush1.msra.mxu0 0.0
      %1927 = vmatprep.subr.mxu0 0.0
      %1928 = vmatpush1.msra.mxu0 0.0
      %1929 = vmatprep.subr.mxu0 0.0
      %1930 = vmatpush1.msra.mxu0 0.0
      %1931 = vmatprep.subr.mxu0 0.0
      %1932 = vmatpush1.msra.mxu0 0.0
      %1933 = vmatprep.subr.mxu0 0.0
      %1934 = vmatpush1.msra.mxu0 0.0
      %1935 = vmatprep.subr.mxu0 0.0
      %1936 = vmatpush1.msra.mxu0 0.0
      %1937 = vmatprep.subr.mxu0 0.0
      %1938 = vmatpush1.msra.mxu0 0.0
      %1939 = vmatprep.subr.mxu0 0.0
      %1940 = vmatpush1.msra.mxu0 0.0
      %1941 = vmatprep.subr.mxu0 0.0
      %1942 = vmatpush1.msra.mxu0 0.0
      %1943 = vmatprep.subr.mxu0 0.0
      %1944 = vmatpush1.msra.mxu0 0.0
      %1945 = vmatprep.subr.mxu0 0.0
      %1946 = vmatpush1.msra.mxu0 0.0
      %1947 = vmatprep.subr.mxu0 0.0
      %1948 = vmatpush1.msra.mxu0 0.0
      %1949 = vmatprep.subr.mxu0 0.0
      %1950 = vmatpush1.msra.mxu0 0.0
      %1951 = vmatprep.subr.mxu0 0.0
      %1952 = vmatpush1.msra.mxu0 0.0
      %1953 = vmatprep.subr.mxu0 0.0
      %1954 = vmatpush1.msra.mxu0 0.0
      %1955 = vmatprep.subr.mxu0 0.0
      %1956 = vmatpush1.msra.mxu0 0.0
      %1957 = vmatprep.subr.mxu0 0.0
      %1958 = vmatpush1.msra.mxu0 0.0
      %1959 = vmatprep.subr.mxu0 0.0
      %1960 = vmatpush1.msra.mxu0 0.0
      %1961 = vmatprep.subr.mxu0 0.0
      %1962 = vmatpush1.msra.mxu0 0.0
      %1963 = vmatprep.mubr.f32.mxu0 0.0
      %1964 = vmatmul.mubr.f32.gmra.mrb[0].mxu0 %v1897
      %v1965 = vpop.f32.mrb[0].mxu0
      %v1966 = vadd.f32 %v222, %v1965
      %v1967 = vpop.f32.mrb[0].mxu0
      %1968 = vdwg.mxu0
      %v1969 = vmax.f32 %v1966, 0.0
      %s1970 = scalar_lea.vmem %s3, 88
      %v1971 = vld [vmem:[%s1970] sm:$0xff]
      %v1973 = vsel %vm299, %v1969, 0
      %1975 = vmatprep.subr.mxu0 0.0
      %1976 = vmatpush1.msra.mxu0 %v1971
      %1977 = vmatprep.subr.mxu0 0.0
      %1978 = vmatpush1.msra.mxu0 0.0
      %1979 = vmatprep.subr.mxu0 0.0
      %1980 = vmatpush1.msra.mxu0 0.0
      %1981 = vmatprep.subr.mxu0 0.0
      %1982 = vmatpush1.msra.mxu0 0.0
      %1983 = vmatprep.subr.mxu0 0.0
      %1984 = vmatpush1.msra.mxu0 0.0
      %1985 = vmatprep.subr.mxu0 0.0
      %1986 = vmatpush1.msra.mxu0 0.0
      %1987 = vmatprep.subr.mxu0 0.0
      %1988 = vmatpush1.msra.mxu0 0.0
      %1989 = vmatprep.subr.mxu0 0.0
      %1990 = vmatpush1.msra.mxu0 0.0
      %1991 = vmatprep.subr.mxu0 0.0
      %1992 = vmatpush1.msra.mxu0 0.0
      %1993 = vmatprep.subr.mxu0 0.0
      %1994 = vmatpush1.msra.mxu0 0.0
      %1995 = vmatprep.subr.mxu0 0.0
      %1996 = vmatpush1.msra.mxu0 0.0
      %1997 = vmatprep.subr.mxu0 0.0
      %1998 = vmatpush1.msra.mxu0 0.0
      %1999 = vmatprep.subr.mxu0 0.0
      %2000 = vmatpush1.msra.mxu0 0.0
      %2001 = vmatprep.subr.mxu0 0.0
      %2002 = vmatpush1.msra.mxu0 0.0
      %2003 = vmatprep.subr.mxu0 0.0
      %2004 = vmatpush1.msra.mxu0 0.0
      %2005 = vmatprep.subr.mxu0 0.0
      %2006 = vmatpush1.msra.mxu0 0.0
      %2007 = vmatprep.subr.mxu0 0.0
      %2008 = vmatpush1.msra.mxu0 0.0
      %2009 = vmatprep.subr.mxu0 0.0
      %2010 = vmatpush1.msra.mxu0 0.0
      %2011 = vmatprep.subr.mxu0 0.0
      %2012 = vmatpush1.msra.mxu0 0.0
      %2013 = vmatprep.subr.mxu0 0.0
      %2014 = vmatpush1.msra.mxu0 0.0
      %2015 = vmatprep.subr.mxu0 0.0
      %2016 = vmatpush1.msra.mxu0 0.0
      %2017 = vmatprep.subr.mxu0 0.0
      %2018 = vmatpush1.msra.mxu0 0.0
      %2019 = vmatprep.subr.mxu0 0.0
      %2020 = vmatpush1.msra.mxu0 0.0
      %2021 = vmatprep.subr.mxu0 0.0
      %2022 = vmatpush1.msra.mxu0 0.0
      %2023 = vmatprep.subr.mxu0 0.0
      %2024 = vmatpush1.msra.mxu0 0.0
      %2025 = vmatprep.subr.mxu0 0.0
      %2026 = vmatpush1.msra.mxu0 0.0
      %2027 = vmatprep.subr.mxu0 0.0
      %2028 = vmatpush1.msra.mxu0 0.0
      %2029 = vmatprep.subr.mxu0 0.0
      %2030 = vmatpush1.msra.mxu0 0.0
      %2031 = vmatprep.subr.mxu0 0.0
      %2032 = vmatpush1.msra.mxu0 0.0
      %2033 = vmatprep.subr.mxu0 0.0
      %2034 = vmatpush1.msra.mxu0 0.0
      %2035 = vmatprep.subr.mxu0 0.0
      %2036 = vmatpush1.msra.mxu0 0.0
      %2037 = vmatprep.subr.mxu0 0.0
      %2038 = vmatpush1.msra.mxu0 0.0
      %2039 = vmatprep.mubr.f32.mxu0 0.0
      %2040 = vmatmul.mubr.f32.gmra.mrb[0].mxu0 %v1973
      %v2041 = vpop.f32.mrb[0].mxu0
      %v2042 = vadd.f32 0.0, %v2041
      %v2043 = vpop.f32.mrb[0].mxu0
      %2044 = vdwg.mxu0
      %v2045 = vadd.f32 %v1893, %v2042
      %s2046 = scalar_lea.vmem %s214, 12
      %v2047 = vld [vmem:[%s2046] sm:$0x1]
      %v2049 = vsel %vm223, %v2047, 0
      %2051 = vmatprep.subr.mxu0 0.0
      %2052 = vmatpush1.msra.mxu0 %v220
      %2053 = vmatprep.subr.mxu0 0.0
      %2054 = vmatpush1.msra.mxu0 %v221
      %2055 = vmatprep.subr.mxu0 0.0
      %2056 = vmatpush1.msra.mxu0 0.0
      %2057 = vmatprep.subr.mxu0 0.0
      %2058 = vmatpush1.msra.mxu0 0.0
      %2059 = vmatprep.subr.mxu0 0.0
      %2060 = vmatpush1.msra.mxu0 0.0
      %2061 = vmatprep.subr.mxu0 0.0
      %2062 = vmatpush1.msra.mxu0 0.0
      %2063 = vmatprep.subr.mxu0 0.0
      %2064 = vmatpush1.msra.mxu0 0.0
      %2065 = vmatprep.subr.mxu0 0.0
      %2066 = vmatpush1.msra.mxu0 0.0
      %2067 = vmatprep.subr.mxu0 0.0
      %2068 = vmatpush1.msra.mxu0 0.0
      %2069 = vmatprep.subr.mxu0 0.0
      %2070 = vmatpush1.msra.mxu0 0.0
      %2071 = vmatprep.subr.mxu0 0.0
      %2072 = vmatpush1.msra.mxu0 0.0
      %2073 = vmatprep.subr.mxu0 0.0
      %2074 = vmatpush1.msra.mxu0 0.0
      %2075 = vmatprep.subr.mxu0 0.0
      %2076 = vmatpush1.msra.mxu0 0.0
      %2077 = vmatprep.subr.mxu0 0.0
      %2078 = vmatpush1.msra.mxu0 0.0
      %2079 = vmatprep.subr.mxu0 0.0
      %2080 = vmatpush1.msra.mxu0 0.0
      %2081 = vmatprep.subr.mxu0 0.0
      %2082 = vmatpush1.msra.mxu0 0.0
      %2083 = vmatprep.subr.mxu0 0.0
      %2084 = vmatpush1.msra.mxu0 0.0
      %2085 = vmatprep.subr.mxu0 0.0
      %2086 = vmatpush1.msra.mxu0 0.0
      %2087 = vmatprep.subr.mxu0 0.0
      %2088 = vmatpush1.msra.mxu0 0.0
      %2089 = vmatprep.subr.mxu0 0.0
      %2090 = vmatpush1.msra.mxu0 0.0
      %2091 = vmatprep.subr.mxu0 0.0
      %2092 = vmatpush1.msra.mxu0 0.0
      %2093 = vmatprep.subr.mxu0 0.0
      %2094 = vmatpush1.msra.mxu0 0.0
      %2095 = vmatprep.subr.mxu0 0.0
      %2096 = vmatpush1.msra.mxu0 0.0
      %2097 = vmatprep.subr.mxu0 0.0
      %2098 = vmatpush1.msra.mxu0 0.0
      %2099 = vmatprep.subr.mxu0 0.0
      %2100 = vmatpush1.msra.mxu0 0.0
      %2101 = vmatprep.subr.mxu0 0.0
      %2102 = vmatpush1.msra.mxu0 0.0
      %2103 = vmatprep.subr.mxu0 0.0
      %2104 = vmatpush1.msra.mxu0 0.0
      %2105 = vmatprep.subr.mxu0 0.0
      %2106 = vmatpush1.msra.mxu0 0.0
      %2107 = vmatprep.subr.mxu0 0.0
      %2108 = vmatpush1.msra.mxu0 0.0
      %2109 = vmatprep.subr.mxu0 0.0
      %2110 = vmatpush1.msra.mxu0 0.0
      %2111 = vmatprep.subr.mxu0 0.0
      %2112 = vmatpush1.msra.mxu0 0.0
      %2113 = vmatprep.subr.mxu0 0.0
      %2114 = vmatpush1.msra.mxu0 0.0
      %2115 = vmatprep.mubr.f32.mxu0 0.0
      %2116 = vmatmul.mubr.f32.gmra.mrb[0].mxu0 %v2049
      %v2117 = vpop.f32.mrb[0].mxu0
      %v2118 = vadd.f32 %v222, %v2117
      %v2119 = vpop.f32.mrb[0].mxu0
      %2120 = vdwg.mxu0
      %v2121 = vmax.f32 %v2118, 0.0
      %s2122 = scalar_lea.vmem %s3, 96
      %v2123 = vld [vmem:[%s2122] sm:$0xff]
      %v2125 = vsel %vm299, %v2121, 0
      %2127 = vmatprep.subr.mxu0 0.0
      %2128 = vmatpush1.msra.mxu0 %v2123
      %2129 = vmatprep.subr.mxu0 0.0
      %2130 = vmatpush1.msra.mxu0 0.0
      %2131 = vmatprep.subr.mxu0 0.0
      %2132 = vmatpush1.msra.mxu0 0.0
      %2133 = vmatprep.subr.mxu0 0.0
      %2134 = vmatpush1.msra.mxu0 0.0
      %2135 = vmatprep.subr.mxu0 0.0
      %2136 = vmatpush1.msra.mxu0 0.0
      %2137 = vmatprep.subr.mxu0 0.0
      %2138 = vmatpush1.msra.mxu0 0.0
      %2139 = vmatprep.subr.mxu0 0.0
      %2140 = vmatpush1.msra.mxu0 0.0
      %2141 = vmatprep.subr.mxu0 0.0
      %2142 = vmatpush1.msra.mxu0 0.0
      %2143 = vmatprep.subr.mxu0 0.0
      %2144 = vmatpush1.msra.mxu0 0.0
      %2145 = vmatprep.subr.mxu0 0.0
      %2146 = vmatpush1.msra.mxu0 0.0
      %2147 = vmatprep.subr.mxu0 0.0
      %2148 = vmatpush1.msra.mxu0 0.0
      %2149 = vmatprep.subr.mxu0 0.0
      %2150 = vmatpush1.msra.mxu0 0.0
      %2151 = vmatprep.subr.mxu0 0.0
      %2152 = vmatpush1.msra.mxu0 0.0
      %2153 = vmatprep.subr.mxu0 0.0
      %2154 = vmatpush1.msra.mxu0 0.0
      %2155 = vmatprep.subr.mxu0 0.0
      %2156 = vmatpush1.msra.mxu0 0.0
      %2157 = vmatprep.subr.mxu0 0.0
      %2158 = vmatpush1.msra.mxu0 0.0
      %2159 = vmatprep.subr.mxu0 0.0
      %2160 = vmatpush1.msra.mxu0 0.0
      %2161 = vmatprep.subr.mxu0 0.0
      %2162 = vmatpush1.msra.mxu0 0.0
      %2163 = vmatprep.subr.mxu0 0.0
      %2164 = vmatpush1.msra.mxu0 0.0
      %2165 = vmatprep.subr.mxu0 0.0
      %2166 = vmatpush1.msra.mxu0 0.0
      %2167 = vmatprep.subr.mxu0 0.0
      %2168 = vmatpush1.msra.mxu0 0.0
      %2169 = vmatprep.subr.mxu0 0.0
      %2170 = vmatpush1.msra.mxu0 0.0
      %2171 = vmatprep.subr.mxu0 0.0
      %2172 = vmatpush1.msra.mxu0 0.0
      %2173 = vmatprep.subr.mxu0 0.0
      %2174 = vmatpush1.msra.mxu0 0.0
      %2175 = vmatprep.subr.mxu0 0.0
      %2176 = vmatpush1.msra.mxu0 0.0
      %2177 = vmatprep.subr.mxu0 0.0
      %2178 = vmatpush1.msra.mxu0 0.0
      %2179 = vmatprep.subr.mxu0 0.0
      %2180 = vmatpush1.msra.mxu0 0.0
      %2181 = vmatprep.subr.mxu0 0.0
      %2182 = vmatpush1.msra.mxu0 0.0
      %2183 = vmatprep.subr.mxu0 0.0
      %2184 = vmatpush1.msra.mxu0 0.0
      %2185 = vmatprep.subr.mxu0 0.0
      %2186 = vmatpush1.msra.mxu0 0.0
      %2187 = vmatprep.subr.mxu0 0.0
      %2188 = vmatpush1.msra.mxu0 0.0
      %2189 = vmatprep.subr.mxu0 0.0
      %2190 = vmatpush1.msra.mxu0 0.0
      %2191 = vmatprep.mubr.f32.mxu0 0.0
      %2192 = vmatmul.mubr.f32.gmra.mrb[0].mxu0 %v2125
      %v2193 = vpop.f32.mrb[0].mxu0
      %v2194 = vadd.f32 0.0, %v2193
      %v2195 = vpop.f32.mrb[0].mxu0
      %2196 = vdwg.mxu0
      %v2197 = vadd.f32 %v2045, %v2194
      %s2198 = scalar_lea.vmem %s214, 13
      %v2199 = vld [vmem:[%s2198] sm:$0x1]
      %v2201 = vsel %vm223, %v2199, 0
      %2203 = vmatprep.subr.mxu0 0.0
      %2204 = vmatpush1.msra.mxu0 %v220
      %2205 = vmatprep.subr.mxu0 0.0
      %2206 = vmatpush1.msra.mxu0 %v221
      %2207 = vmatprep.subr.mxu0 0.0
      %2208 = vmatpush1.msra.mxu0 0.0
      %2209 = vmatprep.subr.mxu0 0.0
      %2210 = vmatpush1.msra.mxu0 0.0
      %2211 = vmatprep.subr.mxu0 0.0
      %2212 = vmatpush1.msra.mxu0 0.0
      %2213 = vmatprep.subr.mxu0 0.0
      %2214 = vmatpush1.msra.mxu0 0.0
      %2215 = vmatprep.subr.mxu0 0.0
      %2216 = vmatpush1.msra.mxu0 0.0
      %2217 = vmatprep.subr.mxu0 0.0
      %2218 = vmatpush1.msra.mxu0 0.0
      %2219 = vmatprep.subr.mxu0 0.0
      %2220 = vmatpush1.msra.mxu0 0.0
      %2221 = vmatprep.subr.mxu0 0.0
      %2222 = vmatpush1.msra.mxu0 0.0
      %2223 = vmatprep.subr.mxu0 0.0
      %2224 = vmatpush1.msra.mxu0 0.0
      %2225 = vmatprep.subr.mxu0 0.0
      %2226 = vmatpush1.msra.mxu0 0.0
      %2227 = vmatprep.subr.mxu0 0.0
      %2228 = vmatpush1.msra.mxu0 0.0
      %2229 = vmatprep.subr.mxu0 0.0
      %2230 = vmatpush1.msra.mxu0 0.0
      %2231 = vmatprep.subr.mxu0 0.0
      %2232 = vmatpush1.msra.mxu0 0.0
      %2233 = vmatprep.subr.mxu0 0.0
      %2234 = vmatpush1.msra.mxu0 0.0
      %2235 = vmatprep.subr.mxu0 0.0
      %2236 = vmatpush1.msra.mxu0 0.0
      %2237 = vmatprep.subr.mxu0 0.0
      %2238 = vmatpush1.msra.mxu0 0.0
      %2239 = vmatprep.subr.mxu0 0.0
      %2240 = vmatpush1.msra.mxu0 0.0
      %2241 = vmatprep.subr.mxu0 0.0
      %2242 = vmatpush1.msra.mxu0 0.0
      %2243 = vmatprep.subr.mxu0 0.0
      %2244 = vmatpush1.msra.mxu0 0.0
      %2245 = vmatprep.subr.mxu0 0.0
      %2246 = vmatpush1.msra.mxu0 0.0
      %2247 = vmatprep.subr.mxu0 0.0
      %2248 = vmatpush1.msra.mxu0 0.0
      %2249 = vmatprep.subr.mxu0 0.0
      %2250 = vmatpush1.msra.mxu0 0.0
      %2251 = vmatprep.subr.mxu0 0.0
      %2252 = vmatpush1.msra.mxu0 0.0
      %2253 = vmatprep.subr.mxu0 0.0
      %2254 = vmatpush1.msra.mxu0 0.0
      %2255 = vmatprep.subr.mxu0 0.0
      %2256 = vmatpush1.msra.mxu0 0.0
      %2257 = vmatprep.subr.mxu0 0.0
      %2258 = vmatpush1.msra.mxu0 0.0
      %2259 = vmatprep.subr.mxu0 0.0
      %2260 = vmatpush1.msra.mxu0 0.0
      %2261 = vmatprep.subr.mxu0 0.0
      %2262 = vmatpush1.msra.mxu0 0.0
      %2263 = vmatprep.subr.mxu0 0.0
      %2264 = vmatpush1.msra.mxu0 0.0
      %2265 = vmatprep.subr.mxu0 0.0
      %2266 = vmatpush1.msra.mxu0 0.0
      %2267 = vmatprep.mubr.f32.mxu0 0.0
      %2268 = vmatmul.mubr.f32.gmra.mrb[0].mxu0 %v2201
      %v2269 = vpop.f32.mrb[0].mxu0
      %v2270 = vadd.f32 %v222, %v2269
      %v2271 = vpop.f32.mrb[0].mxu0
      %2272 = vdwg.mxu0
      %v2273 = vmax.f32 %v2270, 0.0
      %s2274 = scalar_lea.vmem %s3, 104
      %v2275 = vld [vmem:[%s2274] sm:$0xff]
      %v2277 = vsel %vm299, %v2273, 0
      %2279 = vmatprep.subr.mxu0 0.0
      %2280 = vmatpush1.msra.mxu0 %v2275
      %2281 = vmatprep.subr.mxu0 0.0
      %2282 = vmatpush1.msra.mxu0 0.0
      %2283 = vmatprep.subr.mxu0 0.0
      %2284 = vmatpush1.msra.mxu0 0.0
      %2285 = vmatprep.subr.mxu0 0.0
      %2286 = vmatpush1.msra.mxu0 0.0
      %2287 = vmatprep.subr.mxu0 0.0
      %2288 = vmatpush1.msra.mxu0 0.0
      %2289 = vmatprep.subr.mxu0 0.0
      %2290 = vmatpush1.msra.mxu0 0.0
      %2291 = vmatprep.subr.mxu0 0.0
      %2292 = vmatpush1.msra.mxu0 0.0
      %2293 = vmatprep.subr.mxu0 0.0
      %2294 = vmatpush1.msra.mxu0 0.0
      %2295 = vmatprep.subr.mxu0 0.0
      %2296 = vmatpush1.msra.mxu0 0.0
      %2297 = vmatprep.subr.mxu0 0.0
      %2298 = vmatpush1.msra.mxu0 0.0
      %2299 = vmatprep.subr.mxu0 0.0
      %2300 = vmatpush1.msra.mxu0 0.0
      %2301 = vmatprep.subr.mxu0 0.0
      %2302 = vmatpush1.msra.mxu0 0.0
      %2303 = vmatprep.subr.mxu0 0.0
      %2304 = vmatpush1.msra.mxu0 0.0
      %2305 = vmatprep.subr.mxu0 0.0
      %2306 = vmatpush1.msra.mxu0 0.0
      %2307 = vmatprep.subr.mxu0 0.0
      %2308 = vmatpush1.msra.mxu0 0.0
      %2309 = vmatprep.subr.mxu0 0.0
      %2310 = vmatpush1.msra.mxu0 0.0
      %2311 = vmatprep.subr.mxu0 0.0
      %2312 = vmatpush1.msra.mxu0 0.0
      %2313 = vmatprep.subr.mxu0 0.0
      %2314 = vmatpush1.msra.mxu0 0.0
      %2315 = vmatprep.subr.mxu0 0.0
      %2316 = vmatpush1.msra.mxu0 0.0
      %2317 = vmatprep.subr.mxu0 0.0
      %2318 = vmatpush1.msra.mxu0 0.0
      %2319 = vmatprep.subr.mxu0 0.0
      %2320 = vmatpush1.msra.mxu0 0.0
      %2321 = vmatprep.subr.mxu0 0.0
      %2322 = vmatpush1.msra.mxu0 0.0
      %2323 = vmatprep.subr.mxu0 0.0
      %2324 = vmatpush1.msra.mxu0 0.0
      %2325 = vmatprep.subr.mxu0 0.0
      %2326 = vmatpush1.msra.mxu0 0.0
      %2327 = vmatprep.subr.mxu0 0.0
      %2328 = vmatpush1.msra.mxu0 0.0
      %2329 = vmatprep.subr.mxu0 0.0
      %2330 = vmatpush1.msra.mxu0 0.0
      %2331 = vmatprep.subr.mxu0 0.0
      %2332 = vmatpush1.msra.mxu0 0.0
      %2333 = vmatprep.subr.mxu0 0.0
      %2334 = vmatpush1.msra.mxu0 0.0
      %2335 = vmatprep.subr.mxu0 0.0
      %2336 = vmatpush1.msra.mxu0 0.0
      %2337 = vmatprep.subr.mxu0 0.0
      %2338 = vmatpush1.msra.mxu0 0.0
      %2339 = vmatprep.subr.mxu0 0.0
      %2340 = vmatpush1.msra.mxu0 0.0
      %2341 = vmatprep.subr.mxu0 0.0
      %2342 = vmatpush1.msra.mxu0 0.0
      %2343 = vmatprep.mubr.f32.mxu0 0.0
      %2344 = vmatmul.mubr.f32.gmra.mrb[0].mxu0 %v2277
      %v2345 = vpop.f32.mrb[0].mxu0
      %v2346 = vadd.f32 0.0, %v2345
      %v2347 = vpop.f32.mrb[0].mxu0
      %2348 = vdwg.mxu0
      %v2349 = vadd.f32 %v2197, %v2346
      %s2350 = scalar_lea.vmem %s214, 14
      %v2351 = vld [vmem:[%s2350] sm:$0x1]
      %v2353 = vsel %vm223, %v2351, 0
      %2355 = vmatprep.subr.mxu0 0.0
      %2356 = vmatpush1.msra.mxu0 %v220
      %2357 = vmatprep.subr.mxu0 0.0
      %2358 = vmatpush1.msra.mxu0 %v221
      %2359 = vmatprep.subr.mxu0 0.0
      %2360 = vmatpush1.msra.mxu0 0.0
      %2361 = vmatprep.subr.mxu0 0.0
      %2362 = vmatpush1.msra.mxu0 0.0
      %2363 = vmatprep.subr.mxu0 0.0
      %2364 = vmatpush1.msra.mxu0 0.0
      %2365 = vmatprep.subr.mxu0 0.0
      %2366 = vmatpush1.msra.mxu0 0.0
      %2367 = vmatprep.subr.mxu0 0.0
      %2368 = vmatpush1.msra.mxu0 0.0
      %2369 = vmatprep.subr.mxu0 0.0
      %2370 = vmatpush1.msra.mxu0 0.0
      %2371 = vmatprep.subr.mxu0 0.0
      %2372 = vmatpush1.msra.mxu0 0.0
      %2373 = vmatprep.subr.mxu0 0.0
      %2374 = vmatpush1.msra.mxu0 0.0
      %2375 = vmatprep.subr.mxu0 0.0
      %2376 = vmatpush1.msra.mxu0 0.0
      %2377 = vmatprep.subr.mxu0 0.0
      %2378 = vmatpush1.msra.mxu0 0.0
      %2379 = vmatprep.subr.mxu0 0.0
      %2380 = vmatpush1.msra.mxu0 0.0
      %2381 = vmatprep.subr.mxu0 0.0
      %2382 = vmatpush1.msra.mxu0 0.0
      %2383 = vmatprep.subr.mxu0 0.0
      %2384 = vmatpush1.msra.mxu0 0.0
      %2385 = vmatprep.subr.mxu0 0.0
      %2386 = vmatpush1.msra.mxu0 0.0
      %2387 = vmatprep.subr.mxu0 0.0
      %2388 = vmatpush1.msra.mxu0 0.0
      %2389 = vmatprep.subr.mxu0 0.0
      %2390 = vmatpush1.msra.mxu0 0.0
      %2391 = vmatprep.subr.mxu0 0.0
      %2392 = vmatpush1.msra.mxu0 0.0
      %2393 = vmatprep.subr.mxu0 0.0
      %2394 = vmatpush1.msra.mxu0 0.0
      %2395 = vmatprep.subr.mxu0 0.0
      %2396 = vmatpush1.msra.mxu0 0.0
      %2397 = vmatprep.subr.mxu0 0.0
      %2398 = vmatpush1.msra.mxu0 0.0
      %2399 = vmatprep.subr.mxu0 0.0
      %2400 = vmatpush1.msra.mxu0 0.0
      %2401 = vmatprep.subr.mxu0 0.0
      %2402 = vmatpush1.msra.mxu0 0.0
      %2403 = vmatprep.subr.mxu0 0.0
      %2404 = vmatpush1.msra.mxu0 0.0
      %2405 = vmatprep.subr.mxu0 0.0
      %2406 = vmatpush1.msra.mxu0 0.0
      %2407 = vmatprep.subr.mxu0 0.0
      %2408 = vmatpush1.msra.mxu0 0.0
      %2409 = vmatprep.subr.mxu0 0.0
      %2410 = vmatpush1.msra.mxu0 0.0
      %2411 = vmatprep.subr.mxu0 0.0
      %2412 = vmatpush1.msra.mxu0 0.0
      %2413 = vmatprep.subr.mxu0 0.0
      %2414 = vmatpush1.msra.mxu0 0.0
      %2415 = vmatprep.subr.mxu0 0.0
      %2416 = vmatpush1.msra.mxu0 0.0
      %2417 = vmatprep.subr.mxu0 0.0
      %2418 = vmatpush1.msra.mxu0 0.0
      %2419 = vmatprep.mubr.f32.mxu0 0.0
      %2420 = vmatmul.mubr.f32.gmra.mrb[0].mxu0 %v2353
      %v2421 = vpop.f32.mrb[0].mxu0
      %v2422 = vadd.f32 %v222, %v2421
      %v2423 = vpop.f32.mrb[0].mxu0
      %2424 = vdwg.mxu0
      %v2425 = vmax.f32 %v2422, 0.0
      %s2426 = scalar_lea.vmem %s3, 112
      %v2427 = vld [vmem:[%s2426] sm:$0xff]
      %v2429 = vsel %vm299, %v2425, 0
      %2431 = vmatprep.subr.mxu0 0.0
      %2432 = vmatpush1.msra.mxu0 %v2427
      %2433 = vmatprep.subr.mxu0 0.0
      %2434 = vmatpush1.msra.mxu0 0.0
      %2435 = vmatprep.subr.mxu0 0.0
      %2436 = vmatpush1.msra.mxu0 0.0
      %2437 = vmatprep.subr.mxu0 0.0
      %2438 = vmatpush1.msra.mxu0 0.0
      %2439 = vmatprep.subr.mxu0 0.0
      %2440 = vmatpush1.msra.mxu0 0.0
      %2441 = vmatprep.subr.mxu0 0.0
      %2442 = vmatpush1.msra.mxu0 0.0
      %2443 = vmatprep.subr.mxu0 0.0
      %2444 = vmatpush1.msra.mxu0 0.0
      %2445 = vmatprep.subr.mxu0 0.0
      %2446 = vmatpush1.msra.mxu0 0.0
      %2447 = vmatprep.subr.mxu0 0.0
      %2448 = vmatpush1.msra.mxu0 0.0
      %2449 = vmatprep.subr.mxu0 0.0
      %2450 = vmatpush1.msra.mxu0 0.0
      %2451 = vmatprep.subr.mxu0 0.0
      %2452 = vmatpush1.msra.mxu0 0.0
      %2453 = vmatprep.subr.mxu0 0.0
      %2454 = vmatpush1.msra.mxu0 0.0
      %2455 = vmatprep.subr.mxu0 0.0
      %2456 = vmatpush1.msra.mxu0 0.0
      %2457 = vmatprep.subr.mxu0 0.0
      %2458 = vmatpush1.msra.mxu0 0.0
      %2459 = vmatprep.subr.mxu0 0.0
      %2460 = vmatpush1.msra.mxu0 0.0
      %2461 = vmatprep.subr.mxu0 0.0
      %2462 = vmatpush1.msra.mxu0 0.0
      %2463 = vmatprep.subr.mxu0 0.0
      %2464 = vmatpush1.msra.mxu0 0.0
      %2465 = vmatprep.subr.mxu0 0.0
      %2466 = vmatpush1.msra.mxu0 0.0
      %2467 = vmatprep.subr.mxu0 0.0
      %2468 = vmatpush1.msra.mxu0 0.0
      %2469 = vmatprep.subr.mxu0 0.0
      %2470 = vmatpush1.msra.mxu0 0.0
      %2471 = vmatprep.subr.mxu0 0.0
      %2472 = vmatpush1.msra.mxu0 0.0
      %2473 = vmatprep.subr.mxu0 0.0
      %2474 = vmatpush1.msra.mxu0 0.0
      %2475 = vmatprep.subr.mxu0 0.0
      %2476 = vmatpush1.msra.mxu0 0.0
      %2477 = vmatprep.subr.mxu0 0.0
      %2478 = vmatpush1.msra.mxu0 0.0
      %2479 = vmatprep.subr.mxu0 0.0
      %2480 = vmatpush1.msra.mxu0 0.0
      %2481 = vmatprep.subr.mxu0 0.0
      %2482 = vmatpush1.msra.mxu0 0.0
      %2483 = vmatprep.subr.mxu0 0.0
      %2484 = vmatpush1.msra.mxu0 0.0
      %2485 = vmatprep.subr.mxu0 0.0
      %2486 = vmatpush1.msra.mxu0 0.0
      %2487 = vmatprep.subr.mxu0 0.0
      %2488 = vmatpush1.msra.mxu0 0.0
      %2489 = vmatprep.subr.mxu0 0.0
      %2490 = vmatpush1.msra.mxu0 0.0
      %2491 = vmatprep.subr.mxu0 0.0
      %2492 = vmatpush1.msra.mxu0 0.0
      %2493 = vmatprep.subr.mxu0 0.0
      %2494 = vmatpush1.msra.mxu0 0.0
      %2495 = vmatprep.mubr.f32.mxu0 0.0
      %2496 = vmatmul.mubr.f32.gmra.mrb[0].mxu0 %v2429
      %v2497 = vpop.f32.mrb[0].mxu0
      %v2498 = vadd.f32 0.0, %v2497
      %v2499 = vpop.f32.mrb[0].mxu0
      %2500 = vdwg.mxu0
      %v2501 = vadd.f32 %v2349, %v2498
      %s2502 = scalar_lea.vmem %s214, 15
      %v2503 = vld [vmem:[%s2502] sm:$0x1]
      %v2505 = vsel %vm223, %v2503, 0
      %2507 = vmatprep.subr.mxu0 0.0
      %2508 = vmatpush1.msra.mxu0 %v220
      %2509 = vmatprep.subr.mxu0 0.0
      %2510 = vmatpush1.msra.mxu0 %v221
      %2511 = vmatprep.subr.mxu0 0.0
      %2512 = vmatpush1.msra.mxu0 0.0
      %2513 = vmatprep.subr.mxu0 0.0
      %2514 = vmatpush1.msra.mxu0 0.0
      %2515 = vmatprep.subr.mxu0 0.0
      %2516 = vmatpush1.msra.mxu0 0.0
      %2517 = vmatprep.subr.mxu0 0.0
      %2518 = vmatpush1.msra.mxu0 0.0
      %2519 = vmatprep.subr.mxu0 0.0
      %2520 = vmatpush1.msra.mxu0 0.0
      %2521 = vmatprep.subr.mxu0 0.0
      %2522 = vmatpush1.msra.mxu0 0.0
      %2523 = vmatprep.subr.mxu0 0.0
      %2524 = vmatpush1.msra.mxu0 0.0
      %2525 = vmatprep.subr.mxu0 0.0
      %2526 = vmatpush1.msra.mxu0 0.0
      %2527 = vmatprep.subr.mxu0 0.0
      %2528 = vmatpush1.msra.mxu0 0.0
      %2529 = vmatprep.subr.mxu0 0.0
      %2530 = vmatpush1.msra.mxu0 0.0
      %2531 = vmatprep.subr.mxu0 0.0
      %2532 = vmatpush1.msra.mxu0 0.0
      %2533 = vmatprep.subr.mxu0 0.0
      %2534 = vmatpush1.msra.mxu0 0.0
      %2535 = vmatprep.subr.mxu0 0.0
      %2536 = vmatpush1.msra.mxu0 0.0
      %2537 = vmatprep.subr.mxu0 0.0
      %2538 = vmatpush1.msra.mxu0 0.0
      %2539 = vmatprep.subr.mxu0 0.0
      %2540 = vmatpush1.msra.mxu0 0.0
      %2541 = vmatprep.subr.mxu0 0.0
      %2542 = vmatpush1.msra.mxu0 0.0
      %2543 = vmatprep.subr.mxu0 0.0
      %2544 = vmatpush1.msra.mxu0 0.0
      %2545 = vmatprep.subr.mxu0 0.0
      %2546 = vmatpush1.msra.mxu0 0.0
      %2547 = vmatprep.subr.mxu0 0.0
      %2548 = vmatpush1.msra.mxu0 0.0
      %2549 = vmatprep.subr.mxu0 0.0
      %2550 = vmatpush1.msra.mxu0 0.0
      %2551 = vmatprep.subr.mxu0 0.0
      %2552 = vmatpush1.msra.mxu0 0.0
      %2553 = vmatprep.subr.mxu0 0.0
      %2554 = vmatpush1.msra.mxu0 0.0
      %2555 = vmatprep.subr.mxu0 0.0
      %2556 = vmatpush1.msra.mxu0 0.0
      %2557 = vmatprep.subr.mxu0 0.0
      %2558 = vmatpush1.msra.mxu0 0.0
      %2559 = vmatprep.subr.mxu0 0.0
      %2560 = vmatpush1.msra.mxu0 0.0
      %2561 = vmatprep.subr.mxu0 0.0
      %2562 = vmatpush1.msra.mxu0 0.0
      %2563 = vmatprep.subr.mxu0 0.0
      %2564 = vmatpush1.msra.mxu0 0.0
      %2565 = vmatprep.subr.mxu0 0.0
      %2566 = vmatpush1.msra.mxu0 0.0
      %2567 = vmatprep.subr.mxu0 0.0
      %2568 = vmatpush1.msra.mxu0 0.0
      %2569 = vmatprep.subr.mxu0 0.0
      %2570 = vmatpush1.msra.mxu0 0.0
      %2571 = vmatprep.mubr.f32.mxu0 0.0
      %2572 = vmatmul.mubr.f32.gmra.mrb[0].mxu0 %v2505
      %v2573 = vpop.f32.mrb[0].mxu0
      %v2574 = vadd.f32 %v222, %v2573
      %v2575 = vpop.f32.mrb[0].mxu0
      %2576 = vdwg.mxu0
      %v2577 = vmax.f32 %v2574, 0.0
      %s2578 = scalar_lea.vmem %s3, 120
      %v2579 = vld [vmem:[%s2578] sm:$0xff]
      %v2581 = vsel %vm299, %v2577, 0
      %2583 = vmatprep.subr.mxu0 0.0
      %2584 = vmatpush1.msra.mxu0 %v2579
      %2585 = vmatprep.subr.mxu0 0.0
      %2586 = vmatpush1.msra.mxu0 0.0
      %2587 = vmatprep.subr.mxu0 0.0
      %2588 = vmatpush1.msra.mxu0 0.0
      %2589 = vmatprep.subr.mxu0 0.0
      %2590 = vmatpush1.msra.mxu0 0.0
      %2591 = vmatprep.subr.mxu0 0.0
      %2592 = vmatpush1.msra.mxu0 0.0
      %2593 = vmatprep.subr.mxu0 0.0
      %2594 = vmatpush1.msra.mxu0 0.0
      %2595 = vmatprep.subr.mxu0 0.0
      %2596 = vmatpush1.msra.mxu0 0.0
      %2597 = vmatprep.subr.mxu0 0.0
      %2598 = vmatpush1.msra.mxu0 0.0
      %2599 = vmatprep.subr.mxu0 0.0
      %2600 = vmatpush1.msra.mxu0 0.0
      %2601 = vmatprep.subr.mxu0 0.0
      %2602 = vmatpush1.msra.mxu0 0.0
      %2603 = vmatprep.subr.mxu0 0.0
      %2604 = vmatpush1.msra.mxu0 0.0
      %2605 = vmatprep.subr.mxu0 0.0
      %2606 = vmatpush1.msra.mxu0 0.0
      %2607 = vmatprep.subr.mxu0 0.0
      %2608 = vmatpush1.msra.mxu0 0.0
      %2609 = vmatprep.subr.mxu0 0.0
      %2610 = vmatpush1.msra.mxu0 0.0
      %2611 = vmatprep.subr.mxu0 0.0
      %2612 = vmatpush1.msra.mxu0 0.0
      %2613 = vmatprep.subr.mxu0 0.0
      %2614 = vmatpush1.msra.mxu0 0.0
      %2615 = vmatprep.subr.mxu0 0.0
      %2616 = vmatpush1.msra.mxu0 0.0
      %2617 = vmatprep.subr.mxu0 0.0
      %2618 = vmatpush1.msra.mxu0 0.0
      %2619 = vmatprep.subr.mxu0 0.0
      %2620 = vmatpush1.msra.mxu0 0.0
      %2621 = vmatprep.subr.mxu0 0.0
      %2622 = vmatpush1.msra.mxu0 0.0
      %2623 = vmatprep.subr.mxu0 0.0
      %2624 = vmatpush1.msra.mxu0 0.0
      %2625 = vmatprep.subr.mxu0 0.0
      %2626 = vmatpush1.msra.mxu0 0.0
      %2627 = vmatprep.subr.mxu0 0.0
      %2628 = vmatpush1.msra.mxu0 0.0
      %2629 = vmatprep.subr.mxu0 0.0
      %2630 = vmatpush1.msra.mxu0 0.0
      %2631 = vmatprep.subr.mxu0 0.0
      %2632 = vmatpush1.msra.mxu0 0.0
      %2633 = vmatprep.subr.mxu0 0.0
      %2634 = vmatpush1.msra.mxu0 0.0
      %2635 = vmatprep.subr.mxu0 0.0
      %2636 = vmatpush1.msra.mxu0 0.0
      %2637 = vmatprep.subr.mxu0 0.0
      %2638 = vmatpush1.msra.mxu0 0.0
      %2639 = vmatprep.subr.mxu0 0.0
      %2640 = vmatpush1.msra.mxu0 0.0
      %2641 = vmatprep.subr.mxu0 0.0
      %2642 = vmatpush1.msra.mxu0 0.0
      %2643 = vmatprep.subr.mxu0 0.0
      %2644 = vmatpush1.msra.mxu0 0.0
      %2645 = vmatprep.subr.mxu0 0.0
      %2646 = vmatpush1.msra.mxu0 0.0
      %2647 = vmatprep.mubr.f32.mxu0 0.0
      %2648 = vmatmul.mubr.f32.gmra.mrb[0].mxu0 %v2581
      %v2649 = vpop.f32.mrb[0].mxu0
      %v2650 = vadd.f32 0.0, %v2649
      %v2651 = vpop.f32.mrb[0].mxu0
      %2652 = vdwg.mxu0
      %v2653 = vadd.f32 %v2501, %v2650
      %v2654 = vmax.f32 %v2653, 0.0
      %2655 = vst [vmem:[%s217] sm:$0x1] %v2654
      %p2656 = scmp.lt.s32.totalorder %s16, 1
      %s2657 = scalar_select %p2656, %s16, 1
      %s2658 = scalar_lea.vmem %s5, %s2657
      // Predicated region
      $region41: #{encoder_forward.1} parent=39 // pred_check
        %p2659 = pneg %p144
      $region42: #{encoder_forward.1} parent=39 // pred_check_branch
        %2661 = sbr.rel (%p2659) target = $region44
      $region43: #{encoder_forward.1} parent=39 // pred_region
        _
      $region44: #{encoder_forward.1} parent=39 // pred_fallthru
        _
    $region40: #{encoder_forward.1} parent=5 // pred_fallthru
      _
    %p2662 = scmp.le.s32.totalorder 2, %s11
    // Predicated region
    $region45: #{encoder_forward.1} parent=5 // pred_check
      %p2663 = pneg %p2662
    $region46: #{encoder_forward.1} parent=5 // pred_check_branch
      %2665 = sbr.rel (%p2663) target = $region48
    $region47: #{encoder_forward.1} parent=5 // pred_region
      %s2666 = ssub.s32 %s11, 2
      // Predicated region
      $region49: #{encoder_forward.1} parent=47 // pred_check
        %p2667 = pneg %p150
      $region50: #{encoder_forward.1} parent=47 // pred_check_branch
        %2669 = sbr.rel (%p2667) target = $region52
      $region51: #{encoder_forward.1} parent=47 // pred_region
        %p2670 = scmp.lt.s32.totalorder %s17, 1
        %s2671 = scalar_select %p2670, %s17, 1
        %s2672 = scalar_lea.vmem %s5, %s2671
      $region52: #{encoder_forward.1} parent=47 // pred_fallthru
        _
    $region48: #{encoder_forward.1} parent=5 // pred_fallthru
      _
  $region6: #{encoder_forward.1} parent=0 // loop_footer
    %s15 = sadd.s32 1, %s11
  $region7: #{encoder_forward.1} parent=0 // loop_footer_branch
    %10 = sbr.rel target = $region3
  $region8: #{encoder_forward.1} parent=0 // loop_exit
    _

</llo_original>
